<compile_context>
chip_gen: v5e
topology: v5e:2x2
jax: 0.10.0
libtpu: 0.0.40
codegen_flags: <defaults>
</compile_context>

<pallas_src>
import functools

import jax
import jax.numpy as jnp
from jax.experimental import pallas as pl
from jax.experimental.pallas import tpu as pltpu


# ---------------------------------------------------------------------------
# Kernel: one grid step == one time chunk.  The forward direction walks chunk
# i forwards while the reverse direction walks chunk nchunks-1-i backwards;
# both recurrences are interleaved inside one unrolled loop so each hides the
# other's MXU/EUP latency on single-TensorCore chips.
# ---------------------------------------------------------------------------
def _lstm_layer_kernel(*refs, hidden, t_chunk, n_parts, n_dir, unroll):
    H, TC = hidden, t_chunk
    G = 4 * H

    # ---- parse positional refs: inputs, outputs, scratch ----
    k = 0
    x_refs = []
    for _ in range(n_dir):
        x_refs.append(list(refs[k:k + n_parts])); k += n_parts
    msk_in = list(refs[k:k + n_dir]); k += n_dir          # (TC, B, 1) f32
    wih_refs = list(refs[k:k + n_dir]); k += n_dir        # (D_total, 4H)
    whh_refs = list(refs[k:k + n_dir]); k += n_dir        # (H, 4H)
    bias_refs = list(refs[k:k + n_dir]); k += n_dir       # (1, 4H)
    out_refs = list(refs[k:k + n_dir]); k += n_dir        # (TC, B, H)
    hn_refs = list(refs[k:k + n_dir]); k += n_dir         # (B, H)
    cn_refs = list(refs[k:k + n_dir]); k += n_dir
    h_refs = list(refs[k:k + n_dir]); k += n_dir          # scratch (B, H)
    c_refs = list(refs[k:k + n_dir]); k += n_dir
    gx_refs = list(refs[k:k + n_dir]); k += n_dir         # scratch (TC, B, 4H)
    msk_refs = list(refs[k:k + n_dir]); k += n_dir        # scratch (TC, B, H)

    B = h_refs[0].shape[0]
    i = pl.program_id(0)

    @pl.when(i == 0)
    def _init():
        for d in range(n_dir):
            h_refs[d][...] = jnp.zeros_like(h_refs[d])
            c_refs[d][...] = jnp.zeros_like(c_refs[d])

    # Hoisted for the whole chunk: recurrent weights stay in vregs.
    whh = [whh_refs[d][...] for d in range(n_dir)]

    # --- per-chunk preamble (runs once, overlapped with the pipeline) ---
    for d in range(n_dir):
        # fused input projection: one (TC*B, D_total) x (D_total, 4H) matmul,
        # summed over input parts (feature-split inputs from the prev layer).
        acc = None
        off = 0
        for p in range(n_parts):
            Dp = x_refs[d][p].shape[-1]
            xp = x_refs[d][p][...].reshape(TC * B, Dp)
            w = wih_refs[d][off:off + Dp, :]
            prod = jnp.dot(xp, w, preferred_element_type=jnp.float32)
            acc = prod if acc is None else acc + prod
            off += Dp
        gx_refs[d][...] = (acc + bias_refs[d][...]).reshape(TC, B, G)
        # full-lane-width validity mask: no per-step compare / broadcast.
        msk_refs[d][...] = jnp.broadcast_to(msk_in[d][...], (TC, B, H))

    def cell(gx, m, h_prev, c_prev, w):
        g = gx + jnp.dot(h_prev, w, preferred_element_type=jnp.float32)
        # PyTorch gate order i, f, g, o; sigmoid(x) = 0.5*tanh(0.5x)+0.5
        # (single EUP op per gate instead of exp + reciprocal).
        i_g = 0.5 * jnp.tanh(0.5 * g[:, 0 * H:1 * H]) + 0.5
        f_g = 0.5 * jnp.tanh(0.5 * g[:, 1 * H:2 * H]) + 0.5
        g_g = jnp.tanh(g[:, 2 * H:3 * H])
        o_g = 0.5 * jnp.tanh(0.5 * g[:, 3 * H:4 * H]) + 0.5
        c_new = f_g * c_prev + i_g * g_g
        h_new = o_g * jnp.tanh(c_new)
        # packed-sequence mask: freeze state / zero output at padded steps.
        c_out = c_prev + m * (c_new - c_prev)
        h_out = h_prev + m * (h_new - h_prev)
        return h_out, c_out, m * h_new

    # h/c live in vregs across the whole chunk (fori_loop carry).
    carry0 = []
    for d in range(n_dir):
        carry0 += [h_refs[d][...], c_refs[d][...]]

    # TODO(synk): keep W_hh resident in the MXU across the chunk via
    #   pltpu.matmul_push_rhs / matmul_acc_lhs / matmul_pop.
    # TODO(synk): for H < 128, lane-fuse the two directions (block-diagonal
    #   W_hh, (B, 2H) state) to get lane-dense gate slices and output stores.
    def step(s, carry):
        nxt = []
        for d in range(n_dir):
            h_v, c_v = carry[2 * d], carry[2 * d + 1]
            loc = s if d == 0 else TC - 1 - s   # reverse walks chunk backwards
            h_v, c_v, y = cell(gx_refs[d][loc], msk_refs[d][loc],
                               h_v, c_v, whh[d])
            out_refs[d][loc] = y
            nxt += [h_v, c_v]
        return tuple(nxt)

    carry = jax.lax.fori_loop(0, TC, step, tuple(carry0), unroll=unroll)

    # spill state back to scratch only once per chunk
    for d in range(n_dir):
        h_refs[d][...] = carry[2 * d]
        c_refs[d][...] = carry[2 * d + 1]

    @pl.when(i == pl.num_programs(0) - 1)
    def _finalize():
        for d in range(n_dir):
            hn_refs[d][...] = h_refs[d][...]
            cn_refs[d][...] = c_refs[d][...]


# ---------------------------------------------------------------------------
# Layer wrapper: one pallas_call per layer (both directions fused).
# ---------------------------------------------------------------------------
def lstm_layer(x_parts, mask_tb1, dir_params, *, t_chunk):
    """One (optionally bidirectional) LSTM layer in a single pallas_call.

    x_parts  : list of (T_pad, B, D_p) f32 time-major inputs (feature split of
               the layer input; the two halves of a previous bidirectional
               layer are passed separately to avoid an HBM concat pass).
    mask_tb1 : (T_pad, B, 1) f32 validity mask (1.0 where t < length).
    dir_params: per-direction (w_ih, w_hh, b_ih, b_hh) in PyTorch layout.
    Returns ([out_dir0, out_dir1?], [h_n per dir], [c_n per dir]).
    """
    n_dir = len(dir_params)
    T_pad, B = int(x_parts[0].shape[0]), int(x_parts[0].shape[1])
    H = int(dir_params[0][1].shape[1])
    G = 4 * H
    n_parts = len(x_parts)
    D_total = sum(int(p.shape[-1]) for p in x_parts)

    TC = max(1, min(t_chunk, T_pad))
    assert T_pad % TC == 0, "caller pads T to a multiple of the chunk size"
    nchunks = T_pad // TC
    unroll = True if TC <= 32 else 8

    wih, whh, bias = [], [], []
    for (w_ih, w_hh, b_ih, b_hh) in dir_params:
        wih.append(jnp.asarray(w_ih.T, jnp.float32))            # (D_total, 4H)
        whh.append(jnp.asarray(w_hh.T, jnp.float32))            # (H, 4H)
        bias.append((b_ih + b_hh).reshape(1, G).astype(jnp.float32))

    chunk_map = [lambda i: (i, 0, 0), lambda i: (nchunks - 1 - i, 0, 0)]
    const2 = lambda i: (0, 0)

    in_specs, operands = [], []
    for d in range(n_dir):
        for p in x_parts:
            in_specs.append(pl.BlockSpec((TC, B, int(p.shape[-1])), chunk_map[d]))
            operands.append(p)
    for d in range(n_dir):
        in_specs.append(pl.BlockSpec((TC, B, 1), chunk_map[d]))
        operands.append(mask_tb1)
    in_specs += [pl.BlockSpec((D_total, G), const2)] * n_dir
    operands += wih
    in_specs += [pl.BlockSpec((H, G), const2)] * n_dir
    operands += whh
    in_specs += [pl.BlockSpec((1, G), const2)] * n_dir
    operands += bias

    out_specs = tuple(
        [pl.BlockSpec((TC, B, H), chunk_map[d]) for d in range(n_dir)]
        + [pl.BlockSpec((B, H), const2)] * (2 * n_dir))
    out_shape = tuple(
        [jax.ShapeDtypeStruct((T_pad, B, H), jnp.float32)] * n_dir
        + [jax.ShapeDtypeStruct((B, H), jnp.float32)] * (2 * n_dir))

    scratch = ([pltpu.VMEM((B, H), jnp.float32)] * (2 * n_dir)      # h, c
               + [pltpu.VMEM((TC, B, G), jnp.float32)] * n_dir      # gx
               + [pltpu.VMEM((TC, B, H), jnp.float32)] * n_dir)     # mask

    # VMEM budget: block footprint (lane/sublane padded), generation-aware cap.
    lane, sub = 128, 8

    def _tile(r, c):
        return 4 * (-(-r // sub) * sub) * (-(-c // lane) * lane)

    need = 0
    for d in range(n_dir):
        for p in x_parts:
            need += 2 * TC * _tile(B, int(p.shape[-1]))    # x chunks (2-buffer)
        need += 2 * TC * _tile(B, 1)                       # mask chunk
        need += 2 * TC * _tile(B, H)                       # out chunk
        need += 2 * (_tile(D_total, G) + _tile(H, G) + _tile(1, G))
        need += TC * _tile(B, G) + TC * _tile(B, H)        # gx + mask scratch
        need += 4 * _tile(B, H)                            # h, c, hn, cn
    try:
        cap = int(0.75 * pltpu.get_tpu_info().vmem_capacity_bytes)
    except Exception:
        cap = 48 * 1024 * 1024    # conservative: fits v7x's 64 MiB per core
    vmem_limit = int(min(max(2 * need, 32 * 1024 * 1024), cap))

    cparams = pltpu.CompilerParams(
        dimension_semantics=("arbitrary",),   # serial recurrence over chunks
        vmem_limit_bytes=vmem_limit)
    # TODO(synk): on v7x, put the two directions on separate TensorCores
    #   (leading size-2 "parallel" grid axis / pl.core_map) for ~2x wall time.
    # TODO(synk): on v5e/v6e (128 MiB VMEM), add pipeline_mode=pl.Buffered(3)
    #   on the x-chunk specs and a larger t_chunk for deeper input pipelining.
    # TODO(synk): bf16 storage for x/out/W_ih (f32 accumulation and f32 h/c)
    #   to halve HBM traffic; needs tolerance re-validation.
    # TODO(synk): skip fully-padded chunks via scalar-prefetched max length.

    kernel = functools.partial(_lstm_layer_kernel, hidden=H, t_chunk=TC,
                               n_parts=n_parts, n_dir=n_dir, unroll=unroll)
    res = pl.pallas_call(
        kernel, grid=(nchunks,),
        in_specs=in_specs, out_specs=out_specs, out_shape=out_shape,
        scratch_shapes=scratch, compiler_params=cparams,
    )(*operands)

    outs = list(res[:n_dir])
    hns = list(res[n_dir:2 * n_dir])
    cns = list(res[2 * n_dir:3 * n_dir])
    return outs, hns, cns


# ---------------------------------------------------------------------------
# RNNEncoder forward (glue in plain JAX, recurrence in the Pallas kernel).
# ---------------------------------------------------------------------------
def init_rnn_encoder_params(key, input_size, hidden_size, num_layers,
                            bidirectional):
    """Deterministic nn.LSTM-style init: U(-1/sqrt(H), 1/sqrt(H))."""
    num_dir = 2 if bidirectional else 1
    k = 1.0 / float(hidden_size) ** 0.5
    params = {}
    for l in range(num_layers):
        d_in = input_size if l == 0 else hidden_size * num_dir
        for d in range(num_dir):
            key, k1, k2, k3, k4 = jax.random.split(key, 5)
            params[(l, d)] = (
                jax.random.uniform(k1, (4 * hidden_size, d_in),
                                   jnp.float32, -k, k),
                jax.random.uniform(k2, (4 * hidden_size, hidden_size),
                                   jnp.float32, -k, k),
                jax.random.uniform(k3, (4 * hidden_size,), jnp.float32, -k, k),
                jax.random.uniform(k4, (4 * hidden_size,), jnp.float32, -k, k),
            )
    return params


def rnn_encoder_forward(params, x, lengths, *, num_layers, bidirectional,
                        drop_prob=0.0, t_chunk=32):
    """x: (B, T, input_size) f32, lengths: (B,) int.  Mirrors RNNEncoder.forward.

    Returns (out, (h_n, c_n)):
      out      : (B, T, H*num_dir), padded positions zero, original batch order
      h_n, c_n : (num_layers*num_dir, B, H), length-sorted order (as PyTorch)
    """
    num_dir = 2 if bidirectional else 1
    B, T, _ = x.shape

    # sort by length descending (as the module does before packing)
    sort_idx = jnp.argsort(-lengths, stable=True)
    unsort_idx = jnp.argsort(sort_idx, stable=True)
    x_sorted = x[sort_idx]
    lens_sorted = lengths[sort_idx].astype(jnp.int32)

    TC = max(1, min(t_chunk, T))
    nchunks = -(-T // TC)
    T_pad = nchunks * TC

    xt = jnp.transpose(x_sorted, (1, 0, 2))           # (T, B, D) time-major
    if T_pad != T:
        xt = jnp.pad(xt, ((0, T_pad - T), (0, 0), (0, 0)))

    # validity mask shared by every layer (padded x rows only contribute the
    # bias to gx, which the mask then discards -- same as packed sequences).
    t_idx = jnp.arange(T_pad, dtype=jnp.int32)
    mask_tb1 = (t_idx[:, None, None] < lens_sorted[None, :, None]
                ).astype(jnp.float32)                 # (T_pad, B, 1)

    parts = [xt]
    h_list, c_list = [], []
    for l in range(num_layers):
        dir_params = [params[(l, d)] for d in range(num_dir)]
        parts, h_ns, c_ns = lstm_layer(parts, mask_tb1, dir_params, t_chunk=TC)
        h_list.extend(h_ns)
        c_list.extend(c_ns)
        # nn.LSTM inter-layer dropout is identity for drop_prob == 0.0.
        # TODO(synk): pltpu.prng_*-based inter-layer dropout when drop_prob > 0.

    out_tbd = parts[0] if len(parts) == 1 else jnp.concatenate(parts, axis=-1)
    out = jnp.transpose(out_tbd[:T], (1, 0, 2))[unsort_idx]   # (B, T, H*ndir)
    h_n = jnp.stack(h_list, axis=0)   # length-sorted batch order (as PyTorch)
    c_n = jnp.stack(c_list, axis=0)
    # F.dropout(x, 0.0, training) is the identity.
    # TODO(synk): support a user-provided initial hidden state (zeros assumed).
    return out, (h_n, c_n)


# ---------------------------------------------------------------------------
# Pure-JAX reference (lax.scan) for an in-script sanity check.
# ---------------------------------------------------------------------------
def _ref_lstm_direction(x_tbd, lengths, w_ih, w_hh, b_ih, b_hh, reverse):
    T, B, _ = x_tbd.shape
    H = w_hh.shape[1]
    b = (b_ih + b_hh).astype(jnp.float32)

    def step(carry, inp):
        h, c = carry
        x_t, t = inp
        gates = x_t @ w_ih.T + h @ w_hh.T + b
        i_g = jax.nn.sigmoid(gates[:, :H])
        f_g = jax.nn.sigmoid(gates[:, H:2 * H])
        g_g = jnp.tanh(gates[:, 2 * H:3 * H])
        o_g = jax.nn.sigmoid(gates[:, 3 * H:])
        c_new = f_g * c + i_g * g_g
        h_new = o_g * jnp.tanh(c_new)
        valid = (lengths > t)[:, None]
        c = jnp.where(valid, c_new, c)
        h = jnp.where(valid, h_new, h)
        y = jnp.where(valid, h_new, jnp.zeros_like(h_new))
        return (h, c), y

    ts = jnp.arange(T, dtype=jnp.int32)
    xs = (x_tbd[::-1], ts[::-1]) if reverse else (x_tbd, ts)
    (h, c), ys = jax.lax.scan(step, (jnp.zeros((B, H), jnp.float32),
                                     jnp.zeros((B, H), jnp.float32)), xs)
    if reverse:
        ys = ys[::-1]
    return ys, h, c


def rnn_encoder_forward_ref(params, x, lengths, *, num_layers, bidirectional):
    num_dir = 2 if bidirectional else 1
    sort_idx = jnp.argsort(-lengths, stable=True)
    unsort_idx = jnp.argsort(sort_idx, stable=True)
    x_sorted = x[sort_idx]
    lens_sorted = lengths[sort_idx].astype(jnp.int32)

    layer_in = jnp.transpose(x_sorted, (1, 0, 2))
    h_list, c_list = [], []
    for l in range(num_layers):
        outs = []
        for d in range(num_dir):
            w_ih, w_hh, b_ih, b_hh = params[(l, d)]
            y, h, c = _ref_lstm_direction(layer_in, lens_sorted,
                                          w_ih, w_hh, b_ih, b_hh, d == 1)
            outs.append(y)
            h_list.append(h)
            c_list.append(c)
        layer_in = jnp.concatenate(outs, axis=-1) if num_dir == 2 else outs[0]
    out = jnp.transpose(layer_in, (1, 0, 2))[unsort_idx]
    return out, (jnp.stack(h_list, 0), jnp.stack(c_list, 0))


# ---------------------------------------------------------------------------
if __name__ == "__main__":
    key = jax.random.PRNGKey(0)

    B, T = 8, 10
    input_size, hidden_size = 16, 32
    num_layers, bidirectional = 2, True

    kp, kx = jax.random.split(key)
    params = init_rnn_encoder_params(kp, input_size, hidden_size,
                                     num_layers, bidirectional)
    x = jax.random.normal(kx, (B, T, input_size), jnp.float32)
    lengths = jnp.array([10, 3, 7, 5, 9, 1, 8, 6], dtype=jnp.int32)

    out, (h_n, c_n) = rnn_encoder_forward(
        params, x, lengths, num_layers=num_layers,
        bidirectional=bidirectional, drop_prob=0.0, t_chunk=32)
    jax.block_until_ready((out, h_n, c_n))

    num_dir = 2 if bidirectional else 1
    assert out.shape == (B, T, hidden_size * num_dir)
    assert h_n.shape == (num_layers * num_dir, B, hidden_size)
    assert c_n.shape == (num_layers * num_dir, B, hidden_size)

    # Pure-JAX reference check (loose tol: MXU f32 matmul path differs from
    # XLA's default matmul precision).
    out_r, (h_r, c_r) = rnn_encoder_forward_ref(
        params, x, lengths, num_layers=num_layers,
        bidirectional=bidirectional)
    err = max(float(jnp.max(jnp.abs(out - out_r))),
              float(jnp.max(jnp.abs(h_n - h_r))),
              float(jnp.max(jnp.abs(c_n - c_r))))
    assert err < 5e-2, f"bidirectional mismatch vs reference: {err}"

    # Also exercise the unidirectional single-layer path.
    params_u = init_rnn_encoder_params(kp, input_size, hidden_size, 1, False)
    out_u, (h_u, c_u) = rnn_encoder_forward(
        params_u, x, lengths, num_layers=1, bidirectional=False, t_chunk=32)
    jax.block_until_ready((out_u, h_u, c_u))
    out_ur, (h_ur, c_ur) = rnn_encoder_forward_ref(
        params_u, x, lengths, num_layers=1, bidirectional=False)
    err_u = max(float(jnp.max(jnp.abs(out_u - out_ur))),
                float(jnp.max(jnp.abs(h_u - h_ur))),
                float(jnp.max(jnp.abs(c_u - c_ur))))
    assert err_u < 5e-2, f"unidirectional mismatch vs reference: {err_u}"

    print("KERNEL_OK")
</pallas_src>

<mosaic_0001>
module attributes {stable_mosaic.version = 11 : i64} {
  func.func @_lstm_layer_kernel(%arg0: i32, %arg1: memref<10x8x16xf32, #tpu.memory_space<vmem>>, %arg2: memref<10x8x16xf32, #tpu.memory_space<vmem>>, %arg3: memref<10x8x1xf32, #tpu.memory_space<vmem>>, %arg4: memref<10x8x1xf32, #tpu.memory_space<vmem>>, %arg5: memref<16x128xf32, #tpu.memory_space<vmem>>, %arg6: memref<16x128xf32, #tpu.memory_space<vmem>>, %arg7: memref<32x128xf32, #tpu.memory_space<vmem>>, %arg8: memref<32x128xf32, #tpu.memory_space<vmem>>, %arg9: memref<1x128xf32, #tpu.memory_space<vmem>>, %arg10: memref<1x128xf32, #tpu.memory_space<vmem>>, %arg11: memref<10x8x32xf32, #tpu.memory_space<vmem>>, %arg12: memref<10x8x32xf32, #tpu.memory_space<vmem>>, %arg13: memref<8x32xf32, #tpu.memory_space<vmem>>, %arg14: memref<8x32xf32, #tpu.memory_space<vmem>>, %arg15: memref<8x32xf32, #tpu.memory_space<vmem>>, %arg16: memref<8x32xf32, #tpu.memory_space<vmem>>, %arg17: memref<8x32xf32, #tpu.memory_space<vmem>>, %arg18: memref<8x32xf32, #tpu.memory_space<vmem>>, %arg19: memref<8x32xf32, #tpu.memory_space<vmem>>, %arg20: memref<8x32xf32, #tpu.memory_space<vmem>>, %arg21: memref<10x8x128xf32, #tpu.memory_space<vmem>>, %arg22: memref<10x8x128xf32, #tpu.memory_space<vmem>>, %arg23: memref<10x8x32xf32, #tpu.memory_space<vmem>>, %arg24: memref<10x8x32xf32, #tpu.memory_space<vmem>>) attributes {dimension_semantics = [#tpu.dimension_semantics<arbitrary>], iteration_bounds = array<i64: 1>, scalar_prefetch = 0 : i64, scratch_operands = 8 : i64, tpu.core_type = #tpu.core_type<tc>, window_params = [{transform_indices = @transform_0, window_bounds = array<i64: 10, 8, 16>}, {transform_indices = @transform_1, window_bounds = array<i64: 10, 8, 16>}, {transform_indices = @transform_2, window_bounds = array<i64: 10, 8, 1>}, {transform_indices = @transform_3, window_bounds = array<i64: 10, 8, 1>}, {pipeline_mode = #tpu.pipeline_mode<synchronous>, transform_indices = @transform_4, window_bounds = array<i64: 16, 128>}, {pipeline_mode = #tpu.pipeline_mode<synchronous>, transform_indices = @transform_5, window_bounds = array<i64: 16, 128>}, {pipeline_mode = #tpu.pipeline_mode<synchronous>, transform_indices = @transform_6, window_bounds = array<i64: 32, 128>}, {pipeline_mode = #tpu.pipeline_mode<synchronous>, transform_indices = @transform_7, window_bounds = array<i64: 32, 128>}, {pipeline_mode = #tpu.pipeline_mode<synchronous>, transform_indices = @transform_8, window_bounds = array<i64: 1, 128>}, {pipeline_mode = #tpu.pipeline_mode<synchronous>, transform_indices = @transform_9, window_bounds = array<i64: 1, 128>}, {transform_indices = @transform_10, window_bounds = array<i64: 10, 8, 32>}, {transform_indices = @transform_11, window_bounds = array<i64: 10, 8, 32>}, {pipeline_mode = #tpu.pipeline_mode<synchronous>, transform_indices = @transform_12, window_bounds = array<i64: 8, 32>}, {pipeline_mode = #tpu.pipeline_mode<synchronous>, transform_indices = @transform_13, window_bounds = array<i64: 8, 32>}, {pipeline_mode = #tpu.pipeline_mode<synchronous>, transform_indices = @transform_14, window_bounds = array<i64: 8, 32>}, {pipeline_mode = #tpu.pipeline_mode<synchronous>, transform_indices = @transform_15, window_bounds = array<i64: 8, 32>}]} {
    %c0_i32 = arith.constant 0 : i32
    %0 = arith.cmpi eq, %arg0, %c0_i32 : i32
    %1 = arith.extui %0 : i1 to i32
    %c0_i32_0 = arith.constant 0 : i32
    %2 = arith.cmpi ne, %1, %c0_i32_0 : i32
    scf.if %2 {
      %cst_386 = arith.constant 0.000000e+00 : f32
      %1052 = vector.broadcast %cst_386 : f32 to vector<8x32xf32>
      %c0_387 = arith.constant 0 : index
      %c0_388 = arith.constant 0 : index
      %1053 = vector.load %arg17[%c0_387, %c0_388] : memref<8x32xf32, #tpu.memory_space<vmem>>, vector<8x32xf32>
      tpu.vector_store %arg17[%c0_387, %c0_388], %1052 {strides = array<i32>} : memref<8x32xf32, #tpu.memory_space<vmem>>, vector<8x32xf32>,
      %cst_389 = arith.constant 0.000000e+00 : f32
      %1054 = vector.broadcast %cst_389 : f32 to vector<8x32xf32>
      %c0_390 = arith.constant 0 : index
      %c0_391 = arith.constant 0 : index
      %1055 = vector.load %arg19[%c0_390, %c0_391] : memref<8x32xf32, #tpu.memory_space<vmem>>, vector<8x32xf32>
      tpu.vector_store %arg19[%c0_390, %c0_391], %1054 {strides = array<i32>} : memref<8x32xf32, #tpu.memory_space<vmem>>, vector<8x32xf32>,
      %cst_392 = arith.constant 0.000000e+00 : f32
      %1056 = vector.broadcast %cst_392 : f32 to vector<8x32xf32>
      %c0_393 = arith.constant 0 : index
      %c0_394 = arith.constant 0 : index
      %1057 = vector.load %arg18[%c0_393, %c0_394] : memref<8x32xf32, #tpu.memory_space<vmem>>, vector<8x32xf32>
      tpu.vector_store %arg18[%c0_393, %c0_394], %1056 {strides = array<i32>} : memref<8x32xf32, #tpu.memory_space<vmem>>, vector<8x32xf32>,
      %cst_395 = arith.constant 0.000000e+00 : f32
      %1058 = vector.broadcast %cst_395 : f32 to vector<8x32xf32>
      %c0_396 = arith.constant 0 : index
      %c0_397 = arith.constant 0 : index
      %1059 = vector.load %arg20[%c0_396, %c0_397] : memref<8x32xf32, #tpu.memory_space<vmem>>, vector<8x32xf32>
      tpu.vector_store %arg20[%c0_396, %c0_397], %1058 {strides = array<i32>} : memref<8x32xf32, #tpu.memory_space<vmem>>, vector<8x32xf32>,
    } else {
    }
    %c0 = arith.constant 0 : index
    %c0_1 = arith.constant 0 : index
    %3 = vector.load %arg7[%c0, %c0_1] : memref<32x128xf32, #tpu.memory_space<vmem>>, vector<32x128xf32>
    %c0_2 = arith.constant 0 : index
    %c0_3 = arith.constant 0 : index
    %4 = vector.load %arg8[%c0_2, %c0_3] : memref<32x128xf32, #tpu.memory_space<vmem>>, vector<32x128xf32>
    %c0_4 = arith.constant 0 : index
    %c0_5 = arith.constant 0 : index
    %c0_6 = arith.constant 0 : index
    %5 = vector.load %arg1[%c0_4, %c0_5, %c0_6] : memref<10x8x16xf32, #tpu.memory_space<vmem>>, vector<10x8x16xf32>
    %6 = vector.shape_cast %5 : vector<10x8x16xf32> to vector<80x16xf32>
    %c0_7 = arith.constant 0 : index
    %c0_8 = arith.constant 0 : index
    %7 = vector.load %arg5[%c0_7, %c0_8] : memref<16x128xf32, #tpu.memory_space<vmem>>, vector<16x128xf32>
    %cst = arith.constant dense<0.000000e+00> : vector<80x128xf32>
    %8 = tpu.matmul %6, %7, %cst {dimension_numbers = #tpu.dot_dimension_numbers<[1], [0], [0], [1], [0, 0, 1, 1], [], []>} : vector<80x16xf32>, vector<16x128xf32>, vector<80x128xf32> -> vector<80x128xf32>
    %c0_9 = arith.constant 0 : index
    %c0_10 = arith.constant 0 : index
    %9 = vector.load %arg9[%c0_9, %c0_10] : memref<1x128xf32, #tpu.memory_space<vmem>>, vector<1x128xf32>
    %10 = vector.broadcast %9 : vector<1x128xf32> to vector<80x128xf32>
    %11 = arith.addf %8, %10 : vector<80x128xf32>
    %12 = vector.shape_cast %11 : vector<80x128xf32> to vector<10x8x128xf32>
    %c0_11 = arith.constant 0 : index
    %c0_12 = arith.constant 0 : index
    %c0_13 = arith.constant 0 : index
    %13 = vector.load %arg21[%c0_11, %c0_12, %c0_13] : memref<10x8x128xf32, #tpu.memory_space<vmem>>, vector<10x8x128xf32>
    tpu.vector_store %arg21[%c0_11, %c0_12, %c0_13], %12 {strides = array<i32>} : memref<10x8x128xf32, #tpu.memory_space<vmem>>, vector<10x8x128xf32>,
    %c0_14 = arith.constant 0 : index
    %c0_15 = arith.constant 0 : index
    %c0_16 = arith.constant 0 : index
    %14 = vector.load %arg3[%c0_14, %c0_15, %c0_16] : memref<10x8x1xf32, #tpu.memory_space<vmem>>, vector<10x8x1xf32>
    %15 = vector.shape_cast %14 : vector<10x8x1xf32> to vector<10x8x1xf32>
    %16 = vector.broadcast %15 : vector<10x8x1xf32> to vector<10x8x32xf32>
    %c0_17 = arith.constant 0 : index
    %c0_18 = arith.constant 0 : index
    %c0_19 = arith.constant 0 : index
    %17 = vector.load %arg23[%c0_17, %c0_18, %c0_19] : memref<10x8x32xf32, #tpu.memory_space<vmem>>, vector<10x8x32xf32>
    tpu.vector_store %arg23[%c0_17, %c0_18, %c0_19], %16 {strides = array<i32>} : memref<10x8x32xf32, #tpu.memory_space<vmem>>, vector<10x8x32xf32>,
    %c0_20 = arith.constant 0 : index
    %c0_21 = arith.constant 0 : index
    %c0_22 = arith.constant 0 : index
    %18 = vector.load %arg2[%c0_20, %c0_21, %c0_22] : memref<10x8x16xf32, #tpu.memory_space<vmem>>, vector<10x8x16xf32>
    %19 = vector.shape_cast %18 : vector<10x8x16xf32> to vector<80x16xf32>
    %c0_23 = arith.constant 0 : index
    %c0_24 = arith.constant 0 : index
    %20 = vector.load %arg6[%c0_23, %c0_24] : memref<16x128xf32, #tpu.memory_space<vmem>>, vector<16x128xf32>
    %cst_25 = arith.constant dense<0.000000e+00> : vector<80x128xf32>
    %21 = tpu.matmul %19, %20, %cst_25 {dimension_numbers = #tpu.dot_dimension_numbers<[1], [0], [0], [1], [0, 0, 1, 1], [], []>} : vector<80x16xf32>, vector<16x128xf32>, vector<80x128xf32> -> vector<80x128xf32>
    %c0_26 = arith.constant 0 : index
    %c0_27 = arith.constant 0 : index
    %22 = vector.load %arg10[%c0_26, %c0_27] : memref<1x128xf32, #tpu.memory_space<vmem>>, vector<1x128xf32>
    %23 = vector.broadcast %22 : vector<1x128xf32> to vector<80x128xf32>
    %24 = arith.addf %21, %23 : vector<80x128xf32>
    %25 = vector.shape_cast %24 : vector<80x128xf32> to vector<10x8x128xf32>
    %c0_28 = arith.constant 0 : index
    %c0_29 = arith.constant 0 : index
    %c0_30 = arith.constant 0 : index
    %26 = vector.load %arg22[%c0_28, %c0_29, %c0_30] : memref<10x8x128xf32, #tpu.memory_space<vmem>>, vector<10x8x128xf32>
    tpu.vector_store %arg22[%c0_28, %c0_29, %c0_30], %25 {strides = array<i32>} : memref<10x8x128xf32, #tpu.memory_space<vmem>>, vector<10x8x128xf32>,
    %c0_31 = arith.constant 0 : index
    %c0_32 = arith.constant 0 : index
    %c0_33 = arith.constant 0 : index
    %27 = vector.load %arg4[%c0_31, %c0_32, %c0_33] : memref<10x8x1xf32, #tpu.memory_space<vmem>>, vector<10x8x1xf32>
    %28 = vector.shape_cast %27 : vector<10x8x1xf32> to vector<10x8x1xf32>
    %29 = vector.broadcast %28 : vector<10x8x1xf32> to vector<10x8x32xf32>
    %c0_34 = arith.constant 0 : index
    %c0_35 = arith.constant 0 : index
    %c0_36 = arith.constant 0 : index
    %30 = vector.load %arg24[%c0_34, %c0_35, %c0_36] : memref<10x8x32xf32, #tpu.memory_space<vmem>>, vector<10x8x32xf32>
    tpu.vector_store %arg24[%c0_34, %c0_35, %c0_36], %29 {strides = array<i32>} : memref<10x8x32xf32, #tpu.memory_space<vmem>>, vector<10x8x32xf32>,
    %c0_37 = arith.constant 0 : index
    %c0_38 = arith.constant 0 : index
    %31 = vector.load %arg17[%c0_37, %c0_38] : memref<8x32xf32, #tpu.memory_space<vmem>>, vector<8x32xf32>
    %c0_39 = arith.constant 0 : index
    %c0_40 = arith.constant 0 : index
    %32 = vector.load %arg19[%c0_39, %c0_40] : memref<8x32xf32, #tpu.memory_space<vmem>>, vector<8x32xf32>
    %c0_41 = arith.constant 0 : index
    %c0_42 = arith.constant 0 : index
    %33 = vector.load %arg18[%c0_41, %c0_42] : memref<8x32xf32, #tpu.memory_space<vmem>>, vector<8x32xf32>
    %c0_43 = arith.constant 0 : index
    %c0_44 = arith.constant 0 : index
    %34 = vector.load %arg20[%c0_43, %c0_44] : memref<8x32xf32, #tpu.memory_space<vmem>>, vector<8x32xf32>
    %c0_i32_45 = arith.constant 0 : i32
    %35 = arith.index_cast %c0_i32_45 : i32 to index
    %c0_46 = arith.constant 0 : index
    %c0_47 = arith.constant 0 : index
    %36 = vector.load %arg21[%35, %c0_46, %c0_47] : memref<10x8x128xf32, #tpu.memory_space<vmem>>, vector<1x8x128xf32>
    %37 = vector.shape_cast %36 : vector<1x8x128xf32> to vector<8x128xf32>
    %38 = arith.index_cast %c0_i32_45 : i32 to index
    %c0_48 = arith.constant 0 : index
    %c0_49 = arith.constant 0 : index
    %39 = vector.load %arg23[%38, %c0_48, %c0_49] : memref<10x8x32xf32, #tpu.memory_space<vmem>>, vector<1x8x32xf32>
    %40 = vector.shape_cast %39 : vector<1x8x32xf32> to vector<8x32xf32>
    %cst_50 = arith.constant dense<0.000000e+00> : vector<8x128xf32>
    %41 = tpu.matmul %31, %3, %cst_50 {dimension_numbers = #tpu.dot_dimension_numbers<[1], [0], [0], [1], [0, 0, 1, 1], [], []>} : vector<8x32xf32>, vector<32x128xf32>, vector<8x128xf32> -> vector<8x128xf32>
    %42 = arith.addf %37, %41 : vector<8x128xf32>
    %43 = vector.extract_strided_slice %42 {offsets = [0, 0], sizes = [8, 32], strides = [1, 1]} : vector<8x128xf32> to vector<8x32xf32>
    %cst_51 = arith.constant 5.000000e-01 : f32
    %44 = vector.broadcast %cst_51 : f32 to vector<8x32xf32>
    %45 = arith.mulf %44, %43 : vector<8x32xf32>
    %46 = math.tanh %45 : vector<8x32xf32>
    %cst_52 = arith.constant 5.000000e-01 : f32
    %47 = vector.broadcast %cst_52 : f32 to vector<8x32xf32>
    %48 = arith.mulf %47, %46 : vector<8x32xf32>
    %cst_53 = arith.constant 5.000000e-01 : f32
    %49 = vector.broadcast %cst_53 : f32 to vector<8x32xf32>
    %50 = arith.addf %48, %49 : vector<8x32xf32>
    %51 = vector.extract_strided_slice %42 {offsets = [0, 32], sizes = [8, 32], strides = [1, 1]} : vector<8x128xf32> to vector<8x32xf32>
    %cst_54 = arith.constant 5.000000e-01 : f32
    %52 = vector.broadcast %cst_54 : f32 to vector<8x32xf32>
    %53 = arith.mulf %52, %51 : vector<8x32xf32>
    %54 = math.tanh %53 : vector<8x32xf32>
    %cst_55 = arith.constant 5.000000e-01 : f32
    %55 = vector.broadcast %cst_55 : f32 to vector<8x32xf32>
    %56 = arith.mulf %55, %54 : vector<8x32xf32>
    %cst_56 = arith.constant 5.000000e-01 : f32
    %57 = vector.broadcast %cst_56 : f32 to vector<8x32xf32>
    %58 = arith.addf %56, %57 : vector<8x32xf32>
    %59 = vector.extract_strided_slice %42 {offsets = [0, 64], sizes = [8, 32], strides = [1, 1]} : vector<8x128xf32> to vector<8x32xf32>
    %60 = math.tanh %59 : vector<8x32xf32>
    %61 = vector.extract_strided_slice %42 {offsets = [0, 96], sizes = [8, 32], strides = [1, 1]} : vector<8x128xf32> to vector<8x32xf32>
    %cst_57 = arith.constant 5.000000e-01 : f32
    %62 = vector.broadcast %cst_57 : f32 to vector<8x32xf32>
    %63 = arith.mulf %62, %61 : vector<8x32xf32>
    %64 = math.tanh %63 : vector<8x32xf32>
    %cst_58 = arith.constant 5.000000e-01 : f32
    %65 = vector.broadcast %cst_58 : f32 to vector<8x32xf32>
    %66 = arith.mulf %65, %64 : vector<8x32xf32>
    %cst_59 = arith.constant 5.000000e-01 : f32
    %67 = vector.broadcast %cst_59 : f32 to vector<8x32xf32>
    %68 = arith.addf %66, %67 : vector<8x32xf32>
    %69 = arith.mulf %58, %32 : vector<8x32xf32>
    %70 = arith.mulf %50, %60 : vector<8x32xf32>
    %71 = arith.addf %69, %70 : vector<8x32xf32>
    %72 = math.tanh %71 : vector<8x32xf32>
    %73 = arith.mulf %68, %72 : vector<8x32xf32>
    %74 = arith.subf %71, %32 : vector<8x32xf32>
    %75 = arith.mulf %40, %74 : vector<8x32xf32>
    %76 = arith.addf %32, %75 : vector<8x32xf32>
    %77 = arith.subf %73, %31 : vector<8x32xf32>
    %78 = arith.mulf %40, %77 : vector<8x32xf32>
    %79 = arith.addf %31, %78 : vector<8x32xf32>
    %80 = arith.mulf %40, %73 : vector<8x32xf32>
    %81 = arith.index_cast %c0_i32_45 : i32 to index
    %c0_60 = arith.constant 0 : index
    %c0_61 = arith.constant 0 : index
    %82 = vector.load %arg11[%81, %c0_60, %c0_61] : memref<10x8x32xf32, #tpu.memory_space<vmem>>, vector<1x8x32xf32>
    %83 = vector.shape_cast %82 : vector<1x8x32xf32> to vector<8x32xf32>
    %84 = vector.shape_cast %80 : vector<8x32xf32> to vector<1x8x32xf32>
    tpu.vector_store %arg11[%81, %c0_60, %c0_61], %84 {strides = array<i32>} : memref<10x8x32xf32, #tpu.memory_space<vmem>>, vector<1x8x32xf32>,
    %c9_i32 = arith.constant 9 : i32
    %85 = arith.subi %c9_i32, %c0_i32_45 : i32
    %86 = arith.index_cast %85 : i32 to index
    %c0_62 = arith.constant 0 : index
    %c0_63 = arith.constant 0 : index
    %87 = vector.load %arg22[%86, %c0_62, %c0_63] : memref<10x8x128xf32, #tpu.memory_space<vmem>>, vector<1x8x128xf32>
    %88 = vector.shape_cast %87 : vector<1x8x128xf32> to vector<8x128xf32>
    %89 = arith.index_cast %85 : i32 to index
    %c0_64 = arith.constant 0 : index
    %c0_65 = arith.constant 0 : index
    %90 = vector.load %arg24[%89, %c0_64, %c0_65] : memref<10x8x32xf32, #tpu.memory_space<vmem>>, vector<1x8x32xf32>
    %91 = vector.shape_cast %90 : vector<1x8x32xf32> to vector<8x32xf32>
    %cst_66 = arith.constant dense<0.000000e+00> : vector<8x128xf32>
    %92 = tpu.matmul %33, %4, %cst_66 {dimension_numbers = #tpu.dot_dimension_numbers<[1], [0], [0], [1], [0, 0, 1, 1], [], []>} : vector<8x32xf32>, vector<32x128xf32>, vector<8x128xf32> -> vector<8x128xf32>
    %93 = arith.addf %88, %92 : vector<8x128xf32>
    %94 = vector.extract_strided_slice %93 {offsets = [0, 0], sizes = [8, 32], strides = [1, 1]} : vector<8x128xf32> to vector<8x32xf32>
    %cst_67 = arith.constant 5.000000e-01 : f32
    %95 = vector.broadcast %cst_67 : f32 to vector<8x32xf32>
    %96 = arith.mulf %95, %94 : vector<8x32xf32>
    %97 = math.tanh %96 : vector<8x32xf32>
    %cst_68 = arith.constant 5.000000e-01 : f32
    %98 = vector.broadcast %cst_68 : f32 to vector<8x32xf32>
    %99 = arith.mulf %98, %97 : vector<8x32xf32>
    %cst_69 = arith.constant 5.000000e-01 : f32
    %100 = vector.broadcast %cst_69 : f32 to vector<8x32xf32>
    %101 = arith.addf %99, %100 : vector<8x32xf32>
    %102 = vector.extract_strided_slice %93 {offsets = [0, 32], sizes = [8, 32], strides = [1, 1]} : vector<8x128xf32> to vector<8x32xf32>
    %cst_70 = arith.constant 5.000000e-01 : f32
    %103 = vector.broadcast %cst_70 : f32 to vector<8x32xf32>
    %104 = arith.mulf %103, %102 : vector<8x32xf32>
    %105 = math.tanh %104 : vector<8x32xf32>
    %cst_71 = arith.constant 5.000000e-01 : f32
    %106 = vector.broadcast %cst_71 : f32 to vector<8x32xf32>
    %107 = arith.mulf %106, %105 : vector<8x32xf32>
    %cst_72 = arith.constant 5.000000e-01 : f32
    %108 = vector.broadcast %cst_72 : f32 to vector<8x32xf32>
    %109 = arith.addf %107, %108 : vector<8x32xf32>
    %110 = vector.extract_strided_slice %93 {offsets = [0, 64], sizes = [8, 32], strides = [1, 1]} : vector<8x128xf32> to vector<8x32xf32>
    %111 = math.tanh %110 : vector<8x32xf32>
    %112 = vector.extract_strided_slice %93 {offsets = [0, 96], sizes = [8, 32], strides = [1, 1]} : vector<8x128xf32> to vector<8x32xf32>
    %cst_73 = arith.constant 5.000000e-01 : f32
    %113 = vector.broadcast %cst_73 : f32 to vector<8x32xf32>
    %114 = arith.mulf %113, %112 : vector<8x32xf32>
    %115 = math.tanh %114 : vector<8x32xf32>
    %cst_74 = arith.constant 5.000000e-01 : f32
    %116 = vector.broadcast %cst_74 : f32 to vector<8x32xf32>
    %117 = arith.mulf %116, %115 : vector<8x32xf32>
    %cst_75 = arith.constant 5.000000e-01 : f32
    %118 = vector.broadcast %cst_75 : f32 to vector<8x32xf32>
    %119 = arith.addf %117, %118 : vector<8x32xf32>
    %120 = arith.mulf %109, %34 : vector<8x32xf32>
    %121 = arith.mulf %101, %111 : vector<8x32xf32>
    %122 = arith.addf %120, %121 : vector<8x32xf32>
    %123 = math.tanh %122 : vector<8x32xf32>
    %124 = arith.mulf %119, %123 : vector<8x32xf32>
    %125 = arith.subf %122, %34 : vector<8x32xf32>
    %126 = arith.mulf %91, %125 : vector<8x32xf32>
    %127 = arith.addf %34, %126 : vector<8x32xf32>
    %128 = arith.subf %124, %33 : vector<8x32xf32>
    %129 = arith.mulf %91, %128 : vector<8x32xf32>
    %130 = arith.addf %33, %129 : vector<8x32xf32>
    %131 = arith.mulf %91, %124 : vector<8x32xf32>
    %132 = arith.index_cast %85 : i32 to index
    %c0_76 = arith.constant 0 : index
    %c0_77 = arith.constant 0 : index
    %133 = vector.load %arg12[%132, %c0_76, %c0_77] : memref<10x8x32xf32, #tpu.memory_space<vmem>>, vector<1x8x32xf32>
    %134 = vector.shape_cast %133 : vector<1x8x32xf32> to vector<8x32xf32>
    %135 = vector.shape_cast %131 : vector<8x32xf32> to vector<1x8x32xf32>
    tpu.vector_store %arg12[%132, %c0_76, %c0_77], %135 {strides = array<i32>} : memref<10x8x32xf32, #tpu.memory_space<vmem>>, vector<1x8x32xf32>,
    %c1_i32 = arith.constant 1 : i32
    %136 = arith.index_cast %c1_i32 : i32 to index
    %c0_78 = arith.constant 0 : index
    %c0_79 = arith.constant 0 : index
    %137 = vector.load %arg21[%136, %c0_78, %c0_79] : memref<10x8x128xf32, #tpu.memory_space<vmem>>, vector<1x8x128xf32>
    %138 = vector.shape_cast %137 : vector<1x8x128xf32> to vector<8x128xf32>
    %139 = arith.index_cast %c1_i32 : i32 to index
    %c0_80 = arith.constant 0 : index
    %c0_81 = arith.constant 0 : index
    %140 = vector.load %arg23[%139, %c0_80, %c0_81] : memref<10x8x32xf32, #tpu.memory_space<vmem>>, vector<1x8x32xf32>
    %141 = vector.shape_cast %140 : vector<1x8x32xf32> to vector<8x32xf32>
    %cst_82 = arith.constant dense<0.000000e+00> : vector<8x128xf32>
    %142 = tpu.matmul %79, %3, %cst_82 {dimension_numbers = #tpu.dot_dimension_numbers<[1], [0], [0], [1], [0, 0, 1, 1], [], []>} : vector<8x32xf32>, vector<32x128xf32>, vector<8x128xf32> -> vector<8x128xf32>
    %143 = arith.addf %138, %142 : vector<8x128xf32>
    %144 = vector.extract_strided_slice %143 {offsets = [0, 0], sizes = [8, 32], strides = [1, 1]} : vector<8x128xf32> to vector<8x32xf32>
    %cst_83 = arith.constant 5.000000e-01 : f32
    %145 = vector.broadcast %cst_83 : f32 to vector<8x32xf32>
    %146 = arith.mulf %145, %144 : vector<8x32xf32>
    %147 = math.tanh %146 : vector<8x32xf32>
    %cst_84 = arith.constant 5.000000e-01 : f32
    %148 = vector.broadcast %cst_84 : f32 to vector<8x32xf32>
    %149 = arith.mulf %148, %147 : vector<8x32xf32>
    %cst_85 = arith.constant 5.000000e-01 : f32
    %150 = vector.broadcast %cst_85 : f32 to vector<8x32xf32>
    %151 = arith.addf %149, %150 : vector<8x32xf32>
    %152 = vector.extract_strided_slice %143 {offsets = [0, 32], sizes = [8, 32], strides = [1, 1]} : vector<8x128xf32> to vector<8x32xf32>
    %cst_86 = arith.constant 5.000000e-01 : f32
    %153 = vector.broadcast %cst_86 : f32 to vector<8x32xf32>
    %154 = arith.mulf %153, %152 : vector<8x32xf32>
    %155 = math.tanh %154 : vector<8x32xf32>
    %cst_87 = arith.constant 5.000000e-01 : f32
    %156 = vector.broadcast %cst_87 : f32 to vector<8x32xf32>
    %157 = arith.mulf %156, %155 : vector<8x32xf32>
    %cst_88 = arith.constant 5.000000e-01 : f32
    %158 = vector.broadcast %cst_88 : f32 to vector<8x32xf32>
    %159 = arith.addf %157, %158 : vector<8x32xf32>
    %160 = vector.extract_strided_slice %143 {offsets = [0, 64], sizes = [8, 32], strides = [1, 1]} : vector<8x128xf32> to vector<8x32xf32>
    %161 = math.tanh %160 : vector<8x32xf32>
    %162 = vector.extract_strided_slice %143 {offsets = [0, 96], sizes = [8, 32], strides = [1, 1]} : vector<8x128xf32> to vector<8x32xf32>
    %cst_89 = arith.constant 5.000000e-01 : f32
    %163 = vector.broadcast %cst_89 : f32 to vector<8x32xf32>
    %164 = arith.mulf %163, %162 : vector<8x32xf32>
    %165 = math.tanh %164 : vector<8x32xf32>
    %cst_90 = arith.constant 5.000000e-01 : f32
    %166 = vector.broadcast %cst_90 : f32 to vector<8x32xf32>
    %167 = arith.mulf %166, %165 : vector<8x32xf32>
    %cst_91 = arith.constant 5.000000e-01 : f32
    %168 = vector.broadcast %cst_91 : f32 to vector<8x32xf32>
    %169 = arith.addf %167, %168 : vector<8x32xf32>
    %170 = arith.mulf %159, %76 : vector<8x32xf32>
    %171 = arith.mulf %151, %161 : vector<8x32xf32>
    %172 = arith.addf %170, %171 : vector<8x32xf32>
    %173 = math.tanh %172 : vector<8x32xf32>
    %174 = arith.mulf %169, %173 : vector<8x32xf32>
    %175 = arith.subf %172, %76 : vector<8x32xf32>
    %176 = arith.mulf %141, %175 : vector<8x32xf32>
    %177 = arith.addf %76, %176 : vector<8x32xf32>
    %178 = arith.subf %174, %79 : vector<8x32xf32>
    %179 = arith.mulf %141, %178 : vector<8x32xf32>
    %180 = arith.addf %79, %179 : vector<8x32xf32>
    %181 = arith.mulf %141, %174 : vector<8x32xf32>
    %182 = arith.index_cast %c1_i32 : i32 to index
    %c0_92 = arith.constant 0 : index
    %c0_93 = arith.constant 0 : index
    %183 = vector.load %arg11[%182, %c0_92, %c0_93] : memref<10x8x32xf32, #tpu.memory_space<vmem>>, vector<1x8x32xf32>
    %184 = vector.shape_cast %183 : vector<1x8x32xf32> to vector<8x32xf32>
    %185 = vector.shape_cast %181 : vector<8x32xf32> to vector<1x8x32xf32>
    tpu.vector_store %arg11[%182, %c0_92, %c0_93], %185 {strides = array<i32>} : memref<10x8x32xf32, #tpu.memory_space<vmem>>, vector<1x8x32xf32>,
    %c9_i32_94 = arith.constant 9 : i32
    %186 = arith.subi %c9_i32_94, %c1_i32 : i32
    %187 = arith.index_cast %186 : i32 to index
    %c0_95 = arith.constant 0 : index
    %c0_96 = arith.constant 0 : index
    %188 = vector.load %arg22[%187, %c0_95, %c0_96] : memref<10x8x128xf32, #tpu.memory_space<vmem>>, vector<1x8x128xf32>
    %189 = vector.shape_cast %188 : vector<1x8x128xf32> to vector<8x128xf32>
    %190 = arith.index_cast %186 : i32 to index
    %c0_97 = arith.constant 0 : index
    %c0_98 = arith.constant 0 : index
    %191 = vector.load %arg24[%190, %c0_97, %c0_98] : memref<10x8x32xf32, #tpu.memory_space<vmem>>, vector<1x8x32xf32>
    %192 = vector.shape_cast %191 : vector<1x8x32xf32> to vector<8x32xf32>
    %cst_99 = arith.constant dense<0.000000e+00> : vector<8x128xf32>
    %193 = tpu.matmul %130, %4, %cst_99 {dimension_numbers = #tpu.dot_dimension_numbers<[1], [0], [0], [1], [0, 0, 1, 1], [], []>} : vector<8x32xf32>, vector<32x128xf32>, vector<8x128xf32> -> vector<8x128xf32>
    %194 = arith.addf %189, %193 : vector<8x128xf32>
    %195 = vector.extract_strided_slice %194 {offsets = [0, 0], sizes = [8, 32], strides = [1, 1]} : vector<8x128xf32> to vector<8x32xf32>
    %cst_100 = arith.constant 5.000000e-01 : f32
    %196 = vector.broadcast %cst_100 : f32 to vector<8x32xf32>
    %197 = arith.mulf %196, %195 : vector<8x32xf32>
    %198 = math.tanh %197 : vector<8x32xf32>
    %cst_101 = arith.constant 5.000000e-01 : f32
    %199 = vector.broadcast %cst_101 : f32 to vector<8x32xf32>
    %200 = arith.mulf %199, %198 : vector<8x32xf32>
    %cst_102 = arith.constant 5.000000e-01 : f32
    %201 = vector.broadcast %cst_102 : f32 to vector<8x32xf32>
    %202 = arith.addf %200, %201 : vector<8x32xf32>
    %203 = vector.extract_strided_slice %194 {offsets = [0, 32], sizes = [8, 32], strides = [1, 1]} : vector<8x128xf32> to vector<8x32xf32>
    %cst_103 = arith.constant 5.000000e-01 : f32
    %204 = vector.broadcast %cst_103 : f32 to vector<8x32xf32>
    %205 = arith.mulf %204, %203 : vector<8x32xf32>
    %206 = math.tanh %205 : vector<8x32xf32>
    %cst_104 = arith.constant 5.000000e-01 : f32
    %207 = vector.broadcast %cst_104 : f32 to vector<8x32xf32>
    %208 = arith.mulf %207, %206 : vector<8x32xf32>
    %cst_105 = arith.constant 5.000000e-01 : f32
    %209 = vector.broadcast %cst_105 : f32 to vector<8x32xf32>
    %210 = arith.addf %208, %209 : vector<8x32xf32>
    %211 = vector.extract_strided_slice %194 {offsets = [0, 64], sizes = [8, 32], strides = [1, 1]} : vector<8x128xf32> to vector<8x32xf32>
    %212 = math.tanh %211 : vector<8x32xf32>
    %213 = vector.extract_strided_slice %194 {offsets = [0, 96], sizes = [8, 32], strides = [1, 1]} : vector<8x128xf32> to vector<8x32xf32>
    %cst_106 = arith.constant 5.000000e-01 : f32
    %214 = vector.broadcast %cst_106 : f32 to vector<8x32xf32>
    %215 = arith.mulf %214, %213 : vector<8x32xf32>
    %216 = math.tanh %215 : vector<8x32xf32>
    %cst_107 = arith.constant 5.000000e-01 : f32
    %217 = vector.broadcast %cst_107 : f32 to vector<8x32xf32>
    %218 = arith.mulf %217, %216 : vector<8x32xf32>
    %cst_108 = arith.constant 5.000000e-01 : f32
    %219 = vector.broadcast %cst_108 : f32 to vector<8x32xf32>
    %220 = arith.addf %218, %219 : vector<8x32xf32>
    %221 = arith.mulf %210, %127 : vector<8x32xf32>
    %222 = arith.mulf %202, %212 : vector<8x32xf32>
    %223 = arith.addf %221, %222 : vector<8x32xf32>
    %224 = math.tanh %223 : vector<8x32xf32>
    %225 = arith.mulf %220, %224 : vector<8x32xf32>
    %226 = arith.subf %223, %127 : vector<8x32xf32>
    %227 = arith.mulf %192, %226 : vector<8x32xf32>
    %228 = arith.addf %127, %227 : vector<8x32xf32>
    %229 = arith.subf %225, %130 : vector<8x32xf32>
    %230 = arith.mulf %192, %229 : vector<8x32xf32>
    %231 = arith.addf %130, %230 : vector<8x32xf32>
    %232 = arith.mulf %192, %225 : vector<8x32xf32>
    %233 = arith.index_cast %186 : i32 to index
    %c0_109 = arith.constant 0 : index
    %c0_110 = arith.constant 0 : index
    %234 = vector.load %arg12[%233, %c0_109, %c0_110] : memref<10x8x32xf32, #tpu.memory_space<vmem>>, vector<1x8x32xf32>
    %235 = vector.shape_cast %234 : vector<1x8x32xf32> to vector<8x32xf32>
    %236 = vector.shape_cast %232 : vector<8x32xf32> to vector<1x8x32xf32>
    tpu.vector_store %arg12[%233, %c0_109, %c0_110], %236 {strides = array<i32>} : memref<10x8x32xf32, #tpu.memory_space<vmem>>, vector<1x8x32xf32>,
    %c2_i32 = arith.constant 2 : i32
    %237 = arith.index_cast %c2_i32 : i32 to index
    %c0_111 = arith.constant 0 : index
    %c0_112 = arith.constant 0 : index
    %238 = vector.load %arg21[%237, %c0_111, %c0_112] : memref<10x8x128xf32, #tpu.memory_space<vmem>>, vector<1x8x128xf32>
    %239 = vector.shape_cast %238 : vector<1x8x128xf32> to vector<8x128xf32>
    %240 = arith.index_cast %c2_i32 : i32 to index
    %c0_113 = arith.constant 0 : index
    %c0_114 = arith.constant 0 : index
    %241 = vector.load %arg23[%240, %c0_113, %c0_114] : memref<10x8x32xf32, #tpu.memory_space<vmem>>, vector<1x8x32xf32>
    %242 = vector.shape_cast %241 : vector<1x8x32xf32> to vector<8x32xf32>
    %cst_115 = arith.constant dense<0.000000e+00> : vector<8x128xf32>
    %243 = tpu.matmul %180, %3, %cst_115 {dimension_numbers = #tpu.dot_dimension_numbers<[1], [0], [0], [1], [0, 0, 1, 1], [], []>} : vector<8x32xf32>, vector<32x128xf32>, vector<8x128xf32> -> vector<8x128xf32>
    %244 = arith.addf %239, %243 : vector<8x128xf32>
    %245 = vector.extract_strided_slice %244 {offsets = [0, 0], sizes = [8, 32], strides = [1, 1]} : vector<8x128xf32> to vector<8x32xf32>
    %cst_116 = arith.constant 5.000000e-01 : f32
    %246 = vector.broadcast %cst_116 : f32 to vector<8x32xf32>
    %247 = arith.mulf %246, %245 : vector<8x32xf32>
    %248 = math.tanh %247 : vector<8x32xf32>
    %cst_117 = arith.constant 5.000000e-01 : f32
    %249 = vector.broadcast %cst_117 : f32 to vector<8x32xf32>
    %250 = arith.mulf %249, %248 : vector<8x32xf32>
    %cst_118 = arith.constant 5.000000e-01 : f32
    %251 = vector.broadcast %cst_118 : f32 to vector<8x32xf32>
    %252 = arith.addf %250, %251 : vector<8x32xf32>
    %253 = vector.extract_strided_slice %244 {offsets = [0, 32], sizes = [8, 32], strides = [1, 1]} : vector<8x128xf32> to vector<8x32xf32>
    %cst_119 = arith.constant 5.000000e-01 : f32
    %254 = vector.broadcast %cst_119 : f32 to vector<8x32xf32>
    %255 = arith.mulf %254, %253 : vector<8x32xf32>
    %256 = math.tanh %255 : vector<8x32xf32>
    %cst_120 = arith.constant 5.000000e-01 : f32
    %257 = vector.broadcast %cst_120 : f32 to vector<8x32xf32>
    %258 = arith.mulf %257, %256 : vector<8x32xf32>
    %cst_121 = arith.constant 5.000000e-01 : f32
    %259 = vector.broadcast %cst_121 : f32 to vector<8x32xf32>
    %260 = arith.addf %258, %259 : vector<8x32xf32>
    %261 = vector.extract_strided_slice %244 {offsets = [0, 64], sizes = [8, 32], strides = [1, 1]} : vector<8x128xf32> to vector<8x32xf32>
    %262 = math.tanh %261 : vector<8x32xf32>
    %263 = vector.extract_strided_slice %244 {offsets = [0, 96], sizes = [8, 32], strides = [1, 1]} : vector<8x128xf32> to vector<8x32xf32>
    %cst_122 = arith.constant 5.000000e-01 : f32
    %264 = vector.broadcast %cst_122 : f32 to vector<8x32xf32>
    %265 = arith.mulf %264, %263 : vector<8x32xf32>
    %266 = math.tanh %265 : vector<8x32xf32>
    %cst_123 = arith.constant 5.000000e-01 : f32
    %267 = vector.broadcast %cst_123 : f32 to vector<8x32xf32>
    %268 = arith.mulf %267, %266 : vector<8x32xf32>
    %cst_124 = arith.constant 5.000000e-01 : f32
    %269 = vector.broadcast %cst_124 : f32 to vector<8x32xf32>
    %270 = arith.addf %268, %269 : vector<8x32xf32>
    %271 = arith.mulf %260, %177 : vector<8x32xf32>
    %272 = arith.mulf %252, %262 : vector<8x32xf32>
    %273 = arith.addf %271, %272 : vector<8x32xf32>
    %274 = math.tanh %273 : vector<8x32xf32>
    %275 = arith.mulf %270, %274 : vector<8x32xf32>
    %276 = arith.subf %273, %177 : vector<8x32xf32>
    %277 = arith.mulf %242, %276 : vector<8x32xf32>
    %278 = arith.addf %177, %277 : vector<8x32xf32>
    %279 = arith.subf %275, %180 : vector<8x32xf32>
    %280 = arith.mulf %242, %279 : vector<8x32xf32>
    %281 = arith.addf %180, %280 : vector<8x32xf32>
    %282 = arith.mulf %242, %275 : vector<8x32xf32>
    %283 = arith.index_cast %c2_i32 : i32 to index
    %c0_125 = arith.constant 0 : index
    %c0_126 = arith.constant 0 : index
    %284 = vector.load %arg11[%283, %c0_125, %c0_126] : memref<10x8x32xf32, #tpu.memory_space<vmem>>, vector<1x8x32xf32>
    %285 = vector.shape_cast %284 : vector<1x8x32xf32> to vector<8x32xf32>
    %286 = vector.shape_cast %282 : vector<8x32xf32> to vector<1x8x32xf32>
    tpu.vector_store %arg11[%283, %c0_125, %c0_126], %286 {strides = array<i32>} : memref<10x8x32xf32, #tpu.memory_space<vmem>>, vector<1x8x32xf32>,
    %c9_i32_127 = arith.constant 9 : i32
    %287 = arith.subi %c9_i32_127, %c2_i32 : i32
    %288 = arith.index_cast %287 : i32 to index
    %c0_128 = arith.constant 0 : index
    %c0_129 = arith.constant 0 : index
    %289 = vector.load %arg22[%288, %c0_128, %c0_129] : memref<10x8x128xf32, #tpu.memory_space<vmem>>, vector<1x8x128xf32>
    %290 = vector.shape_cast %289 : vector<1x8x128xf32> to vector<8x128xf32>
    %291 = arith.index_cast %287 : i32 to index
    %c0_130 = arith.constant 0 : index
    %c0_131 = arith.constant 0 : index
    %292 = vector.load %arg24[%291, %c0_130, %c0_131] : memref<10x8x32xf32, #tpu.memory_space<vmem>>, vector<1x8x32xf32>
    %293 = vector.shape_cast %292 : vector<1x8x32xf32> to vector<8x32xf32>
    %cst_132 = arith.constant dense<0.000000e+00> : vector<8x128xf32>
    %294 = tpu.matmul %231, %4, %cst_132 {dimension_numbers = #tpu.dot_dimension_numbers<[1], [0], [0], [1], [0, 0, 1, 1], [], []>} : vector<8x32xf32>, vector<32x128xf32>, vector<8x128xf32> -> vector<8x128xf32>
    %295 = arith.addf %290, %294 : vector<8x128xf32>
    %296 = vector.extract_strided_slice %295 {offsets = [0, 0], sizes = [8, 32], strides = [1, 1]} : vector<8x128xf32> to vector<8x32xf32>
    %cst_133 = arith.constant 5.000000e-01 : f32
    %297 = vector.broadcast %cst_133 : f32 to vector<8x32xf32>
    %298 = arith.mulf %297, %296 : vector<8x32xf32>
    %299 = math.tanh %298 : vector<8x32xf32>
    %cst_134 = arith.constant 5.000000e-01 : f32
    %300 = vector.broadcast %cst_134 : f32 to vector<8x32xf32>
    %301 = arith.mulf %300, %299 : vector<8x32xf32>
    %cst_135 = arith.constant 5.000000e-01 : f32
    %302 = vector.broadcast %cst_135 : f32 to vector<8x32xf32>
    %303 = arith.addf %301, %302 : vector<8x32xf32>
    %304 = vector.extract_strided_slice %295 {offsets = [0, 32], sizes = [8, 32], strides = [1, 1]} : vector<8x128xf32> to vector<8x32xf32>
    %cst_136 = arith.constant 5.000000e-01 : f32
    %305 = vector.broadcast %cst_136 : f32 to vector<8x32xf32>
    %306 = arith.mulf %305, %304 : vector<8x32xf32>
    %307 = math.tanh %306 : vector<8x32xf32>
    %cst_137 = arith.constant 5.000000e-01 : f32
    %308 = vector.broadcast %cst_137 : f32 to vector<8x32xf32>
    %309 = arith.mulf %308, %307 : vector<8x32xf32>
    %cst_138 = arith.constant 5.000000e-01 : f32
    %310 = vector.broadcast %cst_138 : f32 to vector<8x32xf32>
    %311 = arith.addf %309, %310 : vector<8x32xf32>
    %312 = vector.extract_strided_slice %295 {offsets = [0, 64], sizes = [8, 32], strides = [1, 1]} : vector<8x128xf32> to vector<8x32xf32>
    %313 = math.tanh %312 : vector<8x32xf32>
    %314 = vector.extract_strided_slice %295 {offsets = [0, 96], sizes = [8, 32], strides = [1, 1]} : vector<8x128xf32> to vector<8x32xf32>
    %cst_139 = arith.constant 5.000000e-01 : f32
    %315 = vector.broadcast %cst_139 : f32 to vector<8x32xf32>
    %316 = arith.mulf %315, %314 : vector<8x32xf32>
    %317 = math.tanh %316 : vector<8x32xf32>
    %cst_140 = arith.constant 5.000000e-01 : f32
    %318 = vector.broadcast %cst_140 : f32 to vector<8x32xf32>
    %319 = arith.mulf %318, %317 : vector<8x32xf32>
    %cst_141 = arith.constant 5.000000e-01 : f32
    %320 = vector.broadcast %cst_141 : f32 to vector<8x32xf32>
    %321 = arith.addf %319, %320 : vector<8x32xf32>
    %322 = arith.mulf %311, %228 : vector<8x32xf32>
    %323 = arith.mulf %303, %313 : vector<8x32xf32>
    %324 = arith.addf %322, %323 : vector<8x32xf32>
    %325 = math.tanh %324 : vector<8x32xf32>
    %326 = arith.mulf %321, %325 : vector<8x32xf32>
    %327 = arith.subf %324, %228 : vector<8x32xf32>
    %328 = arith.mulf %293, %327 : vector<8x32xf32>
    %329 = arith.addf %228, %328 : vector<8x32xf32>
    %330 = arith.subf %326, %231 : vector<8x32xf32>
    %331 = arith.mulf %293, %330 : vector<8x32xf32>
    %332 = arith.addf %231, %331 : vector<8x32xf32>
    %333 = arith.mulf %293, %326 : vector<8x32xf32>
    %334 = arith.index_cast %287 : i32 to index
    %c0_142 = arith.constant 0 : index
    %c0_143 = arith.constant 0 : index
    %335 = vector.load %arg12[%334, %c0_142, %c0_143] : memref<10x8x32xf32, #tpu.memory_space<vmem>>, vector<1x8x32xf32>
    %336 = vector.shape_cast %335 : vector<1x8x32xf32> to vector<8x32xf32>
    %337 = vector.shape_cast %333 : vector<8x32xf32> to vector<1x8x32xf32>
    tpu.vector_store %arg12[%334, %c0_142, %c0_143], %337 {strides = array<i32>} : memref<10x8x32xf32, #tpu.memory_space<vmem>>, vector<1x8x32xf32>,
    %c3_i32 = arith.constant 3 : i32
    %338 = arith.index_cast %c3_i32 : i32 to index
    %c0_144 = arith.constant 0 : index
    %c0_145 = arith.constant 0 : index
    %339 = vector.load %arg21[%338, %c0_144, %c0_145] : memref<10x8x128xf32, #tpu.memory_space<vmem>>, vector<1x8x128xf32>
    %340 = vector.shape_cast %339 : vector<1x8x128xf32> to vector<8x128xf32>
    %341 = arith.index_cast %c3_i32 : i32 to index
    %c0_146 = arith.constant 0 : index
    %c0_147 = arith.constant 0 : index
    %342 = vector.load %arg23[%341, %c0_146, %c0_147] : memref<10x8x32xf32, #tpu.memory_space<vmem>>, vector<1x8x32xf32>
    %343 = vector.shape_cast %342 : vector<1x8x32xf32> to vector<8x32xf32>
    %cst_148 = arith.constant dense<0.000000e+00> : vector<8x128xf32>
    %344 = tpu.matmul %281, %3, %cst_148 {dimension_numbers = #tpu.dot_dimension_numbers<[1], [0], [0], [1], [0, 0, 1, 1], [], []>} : vector<8x32xf32>, vector<32x128xf32>, vector<8x128xf32> -> vector<8x128xf32>
    %345 = arith.addf %340, %344 : vector<8x128xf32>
    %346 = vector.extract_strided_slice %345 {offsets = [0, 0], sizes = [8, 32], strides = [1, 1]} : vector<8x128xf32> to vector<8x32xf32>
    %cst_149 = arith.constant 5.000000e-01 : f32
    %347 = vector.broadcast %cst_149 : f32 to vector<8x32xf32>
    %348 = arith.mulf %347, %346 : vector<8x32xf32>
    %349 = math.tanh %348 : vector<8x32xf32>
    %cst_150 = arith.constant 5.000000e-01 : f32
    %350 = vector.broadcast %cst_150 : f32 to vector<8x32xf32>
    %351 = arith.mulf %350, %349 : vector<8x32xf32>
    %cst_151 = arith.constant 5.000000e-01 : f32
    %352 = vector.broadcast %cst_151 : f32 to vector<8x32xf32>
    %353 = arith.addf %351, %352 : vector<8x32xf32>
    %354 = vector.extract_strided_slice %345 {offsets = [0, 32], sizes = [8, 32], strides = [1, 1]} : vector<8x128xf32> to vector<8x32xf32>
    %cst_152 = arith.constant 5.000000e-01 : f32
    %355 = vector.broadcast %cst_152 : f32 to vector<8x32xf32>
    %356 = arith.mulf %355, %354 : vector<8x32xf32>
    %357 = math.tanh %356 : vector<8x32xf32>
    %cst_153 = arith.constant 5.000000e-01 : f32
    %358 = vector.broadcast %cst_153 : f32 to vector<8x32xf32>
    %359 = arith.mulf %358, %357 : vector<8x32xf32>
    %cst_154 = arith.constant 5.000000e-01 : f32
    %360 = vector.broadcast %cst_154 : f32 to vector<8x32xf32>
    %361 = arith.addf %359, %360 : vector<8x32xf32>
    %362 = vector.extract_strided_slice %345 {offsets = [0, 64], sizes = [8, 32], strides = [1, 1]} : vector<8x128xf32> to vector<8x32xf32>
    %363 = math.tanh %362 : vector<8x32xf32>
    %364 = vector.extract_strided_slice %345 {offsets = [0, 96], sizes = [8, 32], strides = [1, 1]} : vector<8x128xf32> to vector<8x32xf32>
    %cst_155 = arith.constant 5.000000e-01 : f32
    %365 = vector.broadcast %cst_155 : f32 to vector<8x32xf32>
    %366 = arith.mulf %365, %364 : vector<8x32xf32>
    %367 = math.tanh %366 : vector<8x32xf32>
    %cst_156 = arith.constant 5.000000e-01 : f32
    %368 = vector.broadcast %cst_156 : f32 to vector<8x32xf32>
    %369 = arith.mulf %368, %367 : vector<8x32xf32>
    %cst_157 = arith.constant 5.000000e-01 : f32
    %370 = vector.broadcast %cst_157 : f32 to vector<8x32xf32>
    %371 = arith.addf %369, %370 : vector<8x32xf32>
    %372 = arith.mulf %361, %278 : vector<8x32xf32>
    %373 = arith.mulf %353, %363 : vector<8x32xf32>
    %374 = arith.addf %372, %373 : vector<8x32xf32>
    %375 = math.tanh %374 : vector<8x32xf32>
    %376 = arith.mulf %371, %375 : vector<8x32xf32>
    %377 = arith.subf %374, %278 : vector<8x32xf32>
    %378 = arith.mulf %343, %377 : vector<8x32xf32>
    %379 = arith.addf %278, %378 : vector<8x32xf32>
    %380 = arith.subf %376, %281 : vector<8x32xf32>
    %381 = arith.mulf %343, %380 : vector<8x32xf32>
    %382 = arith.addf %281, %381 : vector<8x32xf32>
    %383 = arith.mulf %343, %376 : vector<8x32xf32>
    %384 = arith.index_cast %c3_i32 : i32 to index
    %c0_158 = arith.constant 0 : index
    %c0_159 = arith.constant 0 : index
    %385 = vector.load %arg11[%384, %c0_158, %c0_159] : memref<10x8x32xf32, #tpu.memory_space<vmem>>, vector<1x8x32xf32>
    %386 = vector.shape_cast %385 : vector<1x8x32xf32> to vector<8x32xf32>
    %387 = vector.shape_cast %383 : vector<8x32xf32> to vector<1x8x32xf32>
    tpu.vector_store %arg11[%384, %c0_158, %c0_159], %387 {strides = array<i32>} : memref<10x8x32xf32, #tpu.memory_space<vmem>>, vector<1x8x32xf32>,
    %c9_i32_160 = arith.constant 9 : i32
    %388 = arith.subi %c9_i32_160, %c3_i32 : i32
    %389 = arith.index_cast %388 : i32 to index
    %c0_161 = arith.constant 0 : index
    %c0_162 = arith.constant 0 : index
    %390 = vector.load %arg22[%389, %c0_161, %c0_162] : memref<10x8x128xf32, #tpu.memory_space<vmem>>, vector<1x8x128xf32>
    %391 = vector.shape_cast %390 : vector<1x8x128xf32> to vector<8x128xf32>
    %392 = arith.index_cast %388 : i32 to index
    %c0_163 = arith.constant 0 : index
    %c0_164 = arith.constant 0 : index
    %393 = vector.load %arg24[%392, %c0_163, %c0_164] : memref<10x8x32xf32, #tpu.memory_space<vmem>>, vector<1x8x32xf32>
    %394 = vector.shape_cast %393 : vector<1x8x32xf32> to vector<8x32xf32>
    %cst_165 = arith.constant dense<0.000000e+00> : vector<8x128xf32>
    %395 = tpu.matmul %332, %4, %cst_165 {dimension_numbers = #tpu.dot_dimension_numbers<[1], [0], [0], [1], [0, 0, 1, 1], [], []>} : vector<8x32xf32>, vector<32x128xf32>, vector<8x128xf32> -> vector<8x128xf32>
    %396 = arith.addf %391, %395 : vector<8x128xf32>
    %397 = vector.extract_strided_slice %396 {offsets = [0, 0], sizes = [8, 32], strides = [1, 1]} : vector<8x128xf32> to vector<8x32xf32>
    %cst_166 = arith.constant 5.000000e-01 : f32
    %398 = vector.broadcast %cst_166 : f32 to vector<8x32xf32>
    %399 = arith.mulf %398, %397 : vector<8x32xf32>
    %400 = math.tanh %399 : vector<8x32xf32>
    %cst_167 = arith.constant 5.000000e-01 : f32
    %401 = vector.broadcast %cst_167 : f32 to vector<8x32xf32>
    %402 = arith.mulf %401, %400 : vector<8x32xf32>
    %cst_168 = arith.constant 5.000000e-01 : f32
    %403 = vector.broadcast %cst_168 : f32 to vector<8x32xf32>
    %404 = arith.addf %402, %403 : vector<8x32xf32>
    %405 = vector.extract_strided_slice %396 {offsets = [0, 32], sizes = [8, 32], strides = [1, 1]} : vector<8x128xf32> to vector<8x32xf32>
    %cst_169 = arith.constant 5.000000e-01 : f32
    %406 = vector.broadcast %cst_169 : f32 to vector<8x32xf32>
    %407 = arith.mulf %406, %405 : vector<8x32xf32>
    %408 = math.tanh %407 : vector<8x32xf32>
    %cst_170 = arith.constant 5.000000e-01 : f32
    %409 = vector.broadcast %cst_170 : f32 to vector<8x32xf32>
    %410 = arith.mulf %409, %408 : vector<8x32xf32>
    %cst_171 = arith.constant 5.000000e-01 : f32
    %411 = vector.broadcast %cst_171 : f32 to vector<8x32xf32>
    %412 = arith.addf %410, %411 : vector<8x32xf32>
    %413 = vector.extract_strided_slice %396 {offsets = [0, 64], sizes = [8, 32], strides = [1, 1]} : vector<8x128xf32> to vector<8x32xf32>
    %414 = math.tanh %413 : vector<8x32xf32>
    %415 = vector.extract_strided_slice %396 {offsets = [0, 96], sizes = [8, 32], strides = [1, 1]} : vector<8x128xf32> to vector<8x32xf32>
    %cst_172 = arith.constant 5.000000e-01 : f32
    %416 = vector.broadcast %cst_172 : f32 to vector<8x32xf32>
    %417 = arith.mulf %416, %415 : vector<8x32xf32>
    %418 = math.tanh %417 : vector<8x32xf32>
    %cst_173 = arith.constant 5.000000e-01 : f32
    %419 = vector.broadcast %cst_173 : f32 to vector<8x32xf32>
    %420 = arith.mulf %419, %418 : vector<8x32xf32>
    %cst_174 = arith.constant 5.000000e-01 : f32
    %421 = vector.broadcast %cst_174 : f32 to vector<8x32xf32>
    %422 = arith.addf %420, %421 : vector<8x32xf32>
    %423 = arith.mulf %412, %329 : vector<8x32xf32>
    %424 = arith.mulf %404, %414 : vector<8x32xf32>
    %425 = arith.addf %423, %424 : vector<8x32xf32>
    %426 = math.tanh %425 : vector<8x32xf32>
    %427 = arith.mulf %422, %426 : vector<8x32xf32>
    %428 = arith.subf %425, %329 : vector<8x32xf32>
    %429 = arith.mulf %394, %428 : vector<8x32xf32>
    %430 = arith.addf %329, %429 : vector<8x32xf32>
    %431 = arith.subf %427, %332 : vector<8x32xf32>
    %432 = arith.mulf %394, %431 : vector<8x32xf32>
    %433 = arith.addf %332, %432 : vector<8x32xf32>
    %434 = arith.mulf %394, %427 : vector<8x32xf32>
    %435 = arith.index_cast %388 : i32 to index
    %c0_175 = arith.constant 0 : index
    %c0_176 = arith.constant 0 : index
    %436 = vector.load %arg12[%435, %c0_175, %c0_176] : memref<10x8x32xf32, #tpu.memory_space<vmem>>, vector<1x8x32xf32>
    %437 = vector.shape_cast %436 : vector<1x8x32xf32> to vector<8x32xf32>
    %438 = vector.shape_cast %434 : vector<8x32xf32> to vector<1x8x32xf32>
    tpu.vector_store %arg12[%435, %c0_175, %c0_176], %438 {strides = array<i32>} : memref<10x8x32xf32, #tpu.memory_space<vmem>>, vector<1x8x32xf32>,
    %c4_i32 = arith.constant 4 : i32
    %439 = arith.index_cast %c4_i32 : i32 to index
    %c0_177 = arith.constant 0 : index
    %c0_178 = arith.constant 0 : index
    %440 = vector.load %arg21[%439, %c0_177, %c0_178] : memref<10x8x128xf32, #tpu.memory_space<vmem>>, vector<1x8x128xf32>
    %441 = vector.shape_cast %440 : vector<1x8x128xf32> to vector<8x128xf32>
    %442 = arith.index_cast %c4_i32 : i32 to index
    %c0_179 = arith.constant 0 : index
    %c0_180 = arith.constant 0 : index
    %443 = vector.load %arg23[%442, %c0_179, %c0_180] : memref<10x8x32xf32, #tpu.memory_space<vmem>>, vector<1x8x32xf32>
    %444 = vector.shape_cast %443 : vector<1x8x32xf32> to vector<8x32xf32>
    %cst_181 = arith.constant dense<0.000000e+00> : vector<8x128xf32>
    %445 = tpu.matmul %382, %3, %cst_181 {dimension_numbers = #tpu.dot_dimension_numbers<[1], [0], [0], [1], [0, 0, 1, 1], [], []>} : vector<8x32xf32>, vector<32x128xf32>, vector<8x128xf32> -> vector<8x128xf32>
    %446 = arith.addf %441, %445 : vector<8x128xf32>
    %447 = vector.extract_strided_slice %446 {offsets = [0, 0], sizes = [8, 32], strides = [1, 1]} : vector<8x128xf32> to vector<8x32xf32>
    %cst_182 = arith.constant 5.000000e-01 : f32
    %448 = vector.broadcast %cst_182 : f32 to vector<8x32xf32>
    %449 = arith.mulf %448, %447 : vector<8x32xf32>
    %450 = math.tanh %449 : vector<8x32xf32>
    %cst_183 = arith.constant 5.000000e-01 : f32
    %451 = vector.broadcast %cst_183 : f32 to vector<8x32xf32>
    %452 = arith.mulf %451, %450 : vector<8x32xf32>
    %cst_184 = arith.constant 5.000000e-01 : f32
    %453 = vector.broadcast %cst_184 : f32 to vector<8x32xf32>
    %454 = arith.addf %452, %453 : vector<8x32xf32>
    %455 = vector.extract_strided_slice %446 {offsets = [0, 32], sizes = [8, 32], strides = [1, 1]} : vector<8x128xf32> to vector<8x32xf32>
    %cst_185 = arith.constant 5.000000e-01 : f32
    %456 = vector.broadcast %cst_185 : f32 to vector<8x32xf32>
    %457 = arith.mulf %456, %455 : vector<8x32xf32>
    %458 = math.tanh %457 : vector<8x32xf32>
    %cst_186 = arith.constant 5.000000e-01 : f32
    %459 = vector.broadcast %cst_186 : f32 to vector<8x32xf32>
    %460 = arith.mulf %459, %458 : vector<8x32xf32>
    %cst_187 = arith.constant 5.000000e-01 : f32
    %461 = vector.broadcast %cst_187 : f32 to vector<8x32xf32>
    %462 = arith.addf %460, %461 : vector<8x32xf32>
    %463 = vector.extract_strided_slice %446 {offsets = [0, 64], sizes = [8, 32], strides = [1, 1]} : vector<8x128xf32> to vector<8x32xf32>
    %464 = math.tanh %463 : vector<8x32xf32>
    %465 = vector.extract_strided_slice %446 {offsets = [0, 96], sizes = [8, 32], strides = [1, 1]} : vector<8x128xf32> to vector<8x32xf32>
    %cst_188 = arith.constant 5.000000e-01 : f32
    %466 = vector.broadcast %cst_188 : f32 to vector<8x32xf32>
    %467 = arith.mulf %466, %465 : vector<8x32xf32>
    %468 = math.tanh %467 : vector<8x32xf32>
    %cst_189 = arith.constant 5.000000e-01 : f32
    %469 = vector.broadcast %cst_189 : f32 to vector<8x32xf32>
    %470 = arith.mulf %469, %468 : vector<8x32xf32>
    %cst_190 = arith.constant 5.000000e-01 : f32
    %471 = vector.broadcast %cst_190 : f32 to vector<8x32xf32>
    %472 = arith.addf %470, %471 : vector<8x32xf32>
    %473 = arith.mulf %462, %379 : vector<8x32xf32>
    %474 = arith.mulf %454, %464 : vector<8x32xf32>
    %475 = arith.addf %473, %474 : vector<8x32xf32>
    %476 = math.tanh %475 : vector<8x32xf32>
    %477 = arith.mulf %472, %476 : vector<8x32xf32>
    %478 = arith.subf %475, %379 : vector<8x32xf32>
    %479 = arith.mulf %444, %478 : vector<8x32xf32>
    %480 = arith.addf %379, %479 : vector<8x32xf32>
    %481 = arith.subf %477, %382 : vector<8x32xf32>
    %482 = arith.mulf %444, %481 : vector<8x32xf32>
    %483 = arith.addf %382, %482 : vector<8x32xf32>
    %484 = arith.mulf %444, %477 : vector<8x32xf32>
    %485 = arith.index_cast %c4_i32 : i32 to index
    %c0_191 = arith.constant 0 : index
    %c0_192 = arith.constant 0 : index
    %486 = vector.load %arg11[%485, %c0_191, %c0_192] : memref<10x8x32xf32, #tpu.memory_space<vmem>>, vector<1x8x32xf32>
    %487 = vector.shape_cast %486 : vector<1x8x32xf32> to vector<8x32xf32>
    %488 = vector.shape_cast %484 : vector<8x32xf32> to vector<1x8x32xf32>
    tpu.vector_store %arg11[%485, %c0_191, %c0_192], %488 {strides = array<i32>} : memref<10x8x32xf32, #tpu.memory_space<vmem>>, vector<1x8x32xf32>,
    %c9_i32_193 = arith.constant 9 : i32
    %489 = arith.subi %c9_i32_193, %c4_i32 : i32
    %490 = arith.index_cast %489 : i32 to index
    %c0_194 = arith.constant 0 : index
    %c0_195 = arith.constant 0 : index
    %491 = vector.load %arg22[%490, %c0_194, %c0_195] : memref<10x8x128xf32, #tpu.memory_space<vmem>>, vector<1x8x128xf32>
    %492 = vector.shape_cast %491 : vector<1x8x128xf32> to vector<8x128xf32>
    %493 = arith.index_cast %489 : i32 to index
    %c0_196 = arith.constant 0 : index
    %c0_197 = arith.constant 0 : index
    %494 = vector.load %arg24[%493, %c0_196, %c0_197] : memref<10x8x32xf32, #tpu.memory_space<vmem>>, vector<1x8x32xf32>
    %495 = vector.shape_cast %494 : vector<1x8x32xf32> to vector<8x32xf32>
    %cst_198 = arith.constant dense<0.000000e+00> : vector<8x128xf32>
    %496 = tpu.matmul %433, %4, %cst_198 {dimension_numbers = #tpu.dot_dimension_numbers<[1], [0], [0], [1], [0, 0, 1, 1], [], []>} : vector<8x32xf32>, vector<32x128xf32>, vector<8x128xf32> -> vector<8x128xf32>
    %497 = arith.addf %492, %496 : vector<8x128xf32>
    %498 = vector.extract_strided_slice %497 {offsets = [0, 0], sizes = [8, 32], strides = [1, 1]} : vector<8x128xf32> to vector<8x32xf32>
    %cst_199 = arith.constant 5.000000e-01 : f32
    %499 = vector.broadcast %cst_199 : f32 to vector<8x32xf32>
    %500 = arith.mulf %499, %498 : vector<8x32xf32>
    %501 = math.tanh %500 : vector<8x32xf32>
    %cst_200 = arith.constant 5.000000e-01 : f32
    %502 = vector.broadcast %cst_200 : f32 to vector<8x32xf32>
    %503 = arith.mulf %502, %501 : vector<8x32xf32>
    %cst_201 = arith.constant 5.000000e-01 : f32
    %504 = vector.broadcast %cst_201 : f32 to vector<8x32xf32>
    %505 = arith.addf %503, %504 : vector<8x32xf32>
    %506 = vector.extract_strided_slice %497 {offsets = [0, 32], sizes = [8, 32], strides = [1, 1]} : vector<8x128xf32> to vector<8x32xf32>
    %cst_202 = arith.constant 5.000000e-01 : f32
    %507 = vector.broadcast %cst_202 : f32 to vector<8x32xf32>
    %508 = arith.mulf %507, %506 : vector<8x32xf32>
    %509 = math.tanh %508 : vector<8x32xf32>
    %cst_203 = arith.constant 5.000000e-01 : f32
    %510 = vector.broadcast %cst_203 : f32 to vector<8x32xf32>
    %511 = arith.mulf %510, %509 : vector<8x32xf32>
    %cst_204 = arith.constant 5.000000e-01 : f32
    %512 = vector.broadcast %cst_204 : f32 to vector<8x32xf32>
    %513 = arith.addf %511, %512 : vector<8x32xf32>
    %514 = vector.extract_strided_slice %497 {offsets = [0, 64], sizes = [8, 32], strides = [1, 1]} : vector<8x128xf32> to vector<8x32xf32>
    %515 = math.tanh %514 : vector<8x32xf32>
    %516 = vector.extract_strided_slice %497 {offsets = [0, 96], sizes = [8, 32], strides = [1, 1]} : vector<8x128xf32> to vector<8x32xf32>
    %cst_205 = arith.constant 5.000000e-01 : f32
    %517 = vector.broadcast %cst_205 : f32 to vector<8x32xf32>
    %518 = arith.mulf %517, %516 : vector<8x32xf32>
    %519 = math.tanh %518 : vector<8x32xf32>
    %cst_206 = arith.constant 5.000000e-01 : f32
    %520 = vector.broadcast %cst_206 : f32 to vector<8x32xf32>
    %521 = arith.mulf %520, %519 : vector<8x32xf32>
    %cst_207 = arith.constant 5.000000e-01 : f32
    %522 = vector.broadcast %cst_207 : f32 to vector<8x32xf32>
    %523 = arith.addf %521, %522 : vector<8x32xf32>
    %524 = arith.mulf %513, %430 : vector<8x32xf32>
    %525 = arith.mulf %505, %515 : vector<8x32xf32>
    %526 = arith.addf %524, %525 : vector<8x32xf32>
    %527 = math.tanh %526 : vector<8x32xf32>
    %528 = arith.mulf %523, %527 : vector<8x32xf32>
    %529 = arith.subf %526, %430 : vector<8x32xf32>
    %530 = arith.mulf %495, %529 : vector<8x32xf32>
    %531 = arith.addf %430, %530 : vector<8x32xf32>
    %532 = arith.subf %528, %433 : vector<8x32xf32>
    %533 = arith.mulf %495, %532 : vector<8x32xf32>
    %534 = arith.addf %433, %533 : vector<8x32xf32>
    %535 = arith.mulf %495, %528 : vector<8x32xf32>
    %536 = arith.index_cast %489 : i32 to index
    %c0_208 = arith.constant 0 : index
    %c0_209 = arith.constant 0 : index
    %537 = vector.load %arg12[%536, %c0_208, %c0_209] : memref<10x8x32xf32, #tpu.memory_space<vmem>>, vector<1x8x32xf32>
    %538 = vector.shape_cast %537 : vector<1x8x32xf32> to vector<8x32xf32>
    %539 = vector.shape_cast %535 : vector<8x32xf32> to vector<1x8x32xf32>
    tpu.vector_store %arg12[%536, %c0_208, %c0_209], %539 {strides = array<i32>} : memref<10x8x32xf32, #tpu.memory_space<vmem>>, vector<1x8x32xf32>,
    %c5_i32 = arith.constant 5 : i32
    %540 = arith.index_cast %c5_i32 : i32 to index
    %c0_210 = arith.constant 0 : index
    %c0_211 = arith.constant 0 : index
    %541 = vector.load %arg21[%540, %c0_210, %c0_211] : memref<10x8x128xf32, #tpu.memory_space<vmem>>, vector<1x8x128xf32>
    %542 = vector.shape_cast %541 : vector<1x8x128xf32> to vector<8x128xf32>
    %543 = arith.index_cast %c5_i32 : i32 to index
    %c0_212 = arith.constant 0 : index
    %c0_213 = arith.constant 0 : index
    %544 = vector.load %arg23[%543, %c0_212, %c0_213] : memref<10x8x32xf32, #tpu.memory_space<vmem>>, vector<1x8x32xf32>
    %545 = vector.shape_cast %544 : vector<1x8x32xf32> to vector<8x32xf32>
    %cst_214 = arith.constant dense<0.000000e+00> : vector<8x128xf32>
    %546 = tpu.matmul %483, %3, %cst_214 {dimension_numbers = #tpu.dot_dimension_numbers<[1], [0], [0], [1], [0, 0, 1, 1], [], []>} : vector<8x32xf32>, vector<32x128xf32>, vector<8x128xf32> -> vector<8x128xf32>
    %547 = arith.addf %542, %546 : vector<8x128xf32>
    %548 = vector.extract_strided_slice %547 {offsets = [0, 0], sizes = [8, 32], strides = [1, 1]} : vector<8x128xf32> to vector<8x32xf32>
    %cst_215 = arith.constant 5.000000e-01 : f32
    %549 = vector.broadcast %cst_215 : f32 to vector<8x32xf32>
    %550 = arith.mulf %549, %548 : vector<8x32xf32>
    %551 = math.tanh %550 : vector<8x32xf32>
    %cst_216 = arith.constant 5.000000e-01 : f32
    %552 = vector.broadcast %cst_216 : f32 to vector<8x32xf32>
    %553 = arith.mulf %552, %551 : vector<8x32xf32>
    %cst_217 = arith.constant 5.000000e-01 : f32
    %554 = vector.broadcast %cst_217 : f32 to vector<8x32xf32>
    %555 = arith.addf %553, %554 : vector<8x32xf32>
    %556 = vector.extract_strided_slice %547 {offsets = [0, 32], sizes = [8, 32], strides = [1, 1]} : vector<8x128xf32> to vector<8x32xf32>
    %cst_218 = arith.constant 5.000000e-01 : f32
    %557 = vector.broadcast %cst_218 : f32 to vector<8x32xf32>
    %558 = arith.mulf %557, %556 : vector<8x32xf32>
    %559 = math.tanh %558 : vector<8x32xf32>
    %cst_219 = arith.constant 5.000000e-01 : f32
    %560 = vector.broadcast %cst_219 : f32 to vector<8x32xf32>
    %561 = arith.mulf %560, %559 : vector<8x32xf32>
    %cst_220 = arith.constant 5.000000e-01 : f32
    %562 = vector.broadcast %cst_220 : f32 to vector<8x32xf32>
    %563 = arith.addf %561, %562 : vector<8x32xf32>
    %564 = vector.extract_strided_slice %547 {offsets = [0, 64], sizes = [8, 32], strides = [1, 1]} : vector<8x128xf32> to vector<8x32xf32>
    %565 = math.tanh %564 : vector<8x32xf32>
    %566 = vector.extract_strided_slice %547 {offsets = [0, 96], sizes = [8, 32], strides = [1, 1]} : vector<8x128xf32> to vector<8x32xf32>
    %cst_221 = arith.constant 5.000000e-01 : f32
    %567 = vector.broadcast %cst_221 : f32 to vector<8x32xf32>
    %568 = arith.mulf %567, %566 : vector<8x32xf32>
    %569 = math.tanh %568 : vector<8x32xf32>
    %cst_222 = arith.constant 5.000000e-01 : f32
    %570 = vector.broadcast %cst_222 : f32 to vector<8x32xf32>
    %571 = arith.mulf %570, %569 : vector<8x32xf32>
    %cst_223 = arith.constant 5.000000e-01 : f32
    %572 = vector.broadcast %cst_223 : f32 to vector<8x32xf32>
    %573 = arith.addf %571, %572 : vector<8x32xf32>
    %574 = arith.mulf %563, %480 : vector<8x32xf32>
    %575 = arith.mulf %555, %565 : vector<8x32xf32>
    %576 = arith.addf %574, %575 : vector<8x32xf32>
    %577 = math.tanh %576 : vector<8x32xf32>
    %578 = arith.mulf %573, %577 : vector<8x32xf32>
    %579 = arith.subf %576, %480 : vector<8x32xf32>
    %580 = arith.mulf %545, %579 : vector<8x32xf32>
    %581 = arith.addf %480, %580 : vector<8x32xf32>
    %582 = arith.subf %578, %483 : vector<8x32xf32>
    %583 = arith.mulf %545, %582 : vector<8x32xf32>
    %584 = arith.addf %483, %583 : vector<8x32xf32>
    %585 = arith.mulf %545, %578 : vector<8x32xf32>
    %586 = arith.index_cast %c5_i32 : i32 to index
    %c0_224 = arith.constant 0 : index
    %c0_225 = arith.constant 0 : index
    %587 = vector.load %arg11[%586, %c0_224, %c0_225] : memref<10x8x32xf32, #tpu.memory_space<vmem>>, vector<1x8x32xf32>
    %588 = vector.shape_cast %587 : vector<1x8x32xf32> to vector<8x32xf32>
    %589 = vector.shape_cast %585 : vector<8x32xf32> to vector<1x8x32xf32>
    tpu.vector_store %arg11[%586, %c0_224, %c0_225], %589 {strides = array<i32>} : memref<10x8x32xf32, #tpu.memory_space<vmem>>, vector<1x8x32xf32>,
    %c9_i32_226 = arith.constant 9 : i32
    %590 = arith.subi %c9_i32_226, %c5_i32 : i32
    %591 = arith.index_cast %590 : i32 to index
    %c0_227 = arith.constant 0 : index
    %c0_228 = arith.constant 0 : index
    %592 = vector.load %arg22[%591, %c0_227, %c0_228] : memref<10x8x128xf32, #tpu.memory_space<vmem>>, vector<1x8x128xf32>
    %593 = vector.shape_cast %592 : vector<1x8x128xf32> to vector<8x128xf32>
    %594 = arith.index_cast %590 : i32 to index
    %c0_229 = arith.constant 0 : index
    %c0_230 = arith.constant 0 : index
    %595 = vector.load %arg24[%594, %c0_229, %c0_230] : memref<10x8x32xf32, #tpu.memory_space<vmem>>, vector<1x8x32xf32>
    %596 = vector.shape_cast %595 : vector<1x8x32xf32> to vector<8x32xf32>
    %cst_231 = arith.constant dense<0.000000e+00> : vector<8x128xf32>
    %597 = tpu.matmul %534, %4, %cst_231 {dimension_numbers = #tpu.dot_dimension_numbers<[1], [0], [0], [1], [0, 0, 1, 1], [], []>} : vector<8x32xf32>, vector<32x128xf32>, vector<8x128xf32> -> vector<8x128xf32>
    %598 = arith.addf %593, %597 : vector<8x128xf32>
    %599 = vector.extract_strided_slice %598 {offsets = [0, 0], sizes = [8, 32], strides = [1, 1]} : vector<8x128xf32> to vector<8x32xf32>
    %cst_232 = arith.constant 5.000000e-01 : f32
    %600 = vector.broadcast %cst_232 : f32 to vector<8x32xf32>
    %601 = arith.mulf %600, %599 : vector<8x32xf32>
    %602 = math.tanh %601 : vector<8x32xf32>
    %cst_233 = arith.constant 5.000000e-01 : f32
    %603 = vector.broadcast %cst_233 : f32 to vector<8x32xf32>
    %604 = arith.mulf %603, %602 : vector<8x32xf32>
    %cst_234 = arith.constant 5.000000e-01 : f32
    %605 = vector.broadcast %cst_234 : f32 to vector<8x32xf32>
    %606 = arith.addf %604, %605 : vector<8x32xf32>
    %607 = vector.extract_strided_slice %598 {offsets = [0, 32], sizes = [8, 32], strides = [1, 1]} : vector<8x128xf32> to vector<8x32xf32>
    %cst_235 = arith.constant 5.000000e-01 : f32
    %608 = vector.broadcast %cst_235 : f32 to vector<8x32xf32>
    %609 = arith.mulf %608, %607 : vector<8x32xf32>
    %610 = math.tanh %609 : vector<8x32xf32>
    %cst_236 = arith.constant 5.000000e-01 : f32
    %611 = vector.broadcast %cst_236 : f32 to vector<8x32xf32>
    %612 = arith.mulf %611, %610 : vector<8x32xf32>
    %cst_237 = arith.constant 5.000000e-01 : f32
    %613 = vector.broadcast %cst_237 : f32 to vector<8x32xf32>
    %614 = arith.addf %612, %613 : vector<8x32xf32>
    %615 = vector.extract_strided_slice %598 {offsets = [0, 64], sizes = [8, 32], strides = [1, 1]} : vector<8x128xf32> to vector<8x32xf32>
    %616 = math.tanh %615 : vector<8x32xf32>
    %617 = vector.extract_strided_slice %598 {offsets = [0, 96], sizes = [8, 32], strides = [1, 1]} : vector<8x128xf32> to vector<8x32xf32>
    %cst_238 = arith.constant 5.000000e-01 : f32
    %618 = vector.broadcast %cst_238 : f32 to vector<8x32xf32>
    %619 = arith.mulf %618, %617 : vector<8x32xf32>
    %620 = math.tanh %619 : vector<8x32xf32>
    %cst_239 = arith.constant 5.000000e-01 : f32
    %621 = vector.broadcast %cst_239 : f32 to vector<8x32xf32>
    %622 = arith.mulf %621, %620 : vector<8x32xf32>
    %cst_240 = arith.constant 5.000000e-01 : f32
    %623 = vector.broadcast %cst_240 : f32 to vector<8x32xf32>
    %624 = arith.addf %622, %623 : vector<8x32xf32>
    %625 = arith.mulf %614, %531 : vector<8x32xf32>
    %626 = arith.mulf %606, %616 : vector<8x32xf32>
    %627 = arith.addf %625, %626 : vector<8x32xf32>
    %628 = math.tanh %627 : vector<8x32xf32>
    %629 = arith.mulf %624, %628 : vector<8x32xf32>
    %630 = arith.subf %627, %531 : vector<8x32xf32>
    %631 = arith.mulf %596, %630 : vector<8x32xf32>
    %632 = arith.addf %531, %631 : vector<8x32xf32>
    %633 = arith.subf %629, %534 : vector<8x32xf32>
    %634 = arith.mulf %596, %633 : vector<8x32xf32>
    %635 = arith.addf %534, %634 : vector<8x32xf32>
    %636 = arith.mulf %596, %629 : vector<8x32xf32>
    %637 = arith.index_cast %590 : i32 to index
    %c0_241 = arith.constant 0 : index
    %c0_242 = arith.constant 0 : index
    %638 = vector.load %arg12[%637, %c0_241, %c0_242] : memref<10x8x32xf32, #tpu.memory_space<vmem>>, vector<1x8x32xf32>
    %639 = vector.shape_cast %638 : vector<1x8x32xf32> to vector<8x32xf32>
    %640 = vector.shape_cast %636 : vector<8x32xf32> to vector<1x8x32xf32>
    tpu.vector_store %arg12[%637, %c0_241, %c0_242], %640 {strides = array<i32>} : memref<10x8x32xf32, #tpu.memory_space<vmem>>, vector<1x8x32xf32>,
    %c6_i32 = arith.constant 6 : i32
    %641 = arith.index_cast %c6_i32 : i32 to index
    %c0_243 = arith.constant 0 : index
    %c0_244 = arith.constant 0 : index
    %642 = vector.load %arg21[%641, %c0_243, %c0_244] : memref<10x8x128xf32, #tpu.memory_space<vmem>>, vector<1x8x128xf32>
    %643 = vector.shape_cast %642 : vector<1x8x128xf32> to vector<8x128xf32>
    %644 = arith.index_cast %c6_i32 : i32 to index
    %c0_245 = arith.constant 0 : index
    %c0_246 = arith.constant 0 : index
    %645 = vector.load %arg23[%644, %c0_245, %c0_246] : memref<10x8x32xf32, #tpu.memory_space<vmem>>, vector<1x8x32xf32>
    %646 = vector.shape_cast %645 : vector<1x8x32xf32> to vector<8x32xf32>
    %cst_247 = arith.constant dense<0.000000e+00> : vector<8x128xf32>
    %647 = tpu.matmul %584, %3, %cst_247 {dimension_numbers = #tpu.dot_dimension_numbers<[1], [0], [0], [1], [0, 0, 1, 1], [], []>} : vector<8x32xf32>, vector<32x128xf32>, vector<8x128xf32> -> vector<8x128xf32>
    %648 = arith.addf %643, %647 : vector<8x128xf32>
    %649 = vector.extract_strided_slice %648 {offsets = [0, 0], sizes = [8, 32], strides = [1, 1]} : vector<8x128xf32> to vector<8x32xf32>
    %cst_248 = arith.constant 5.000000e-01 : f32
    %650 = vector.broadcast %cst_248 : f32 to vector<8x32xf32>
    %651 = arith.mulf %650, %649 : vector<8x32xf32>
    %652 = math.tanh %651 : vector<8x32xf32>
    %cst_249 = arith.constant 5.000000e-01 : f32
    %653 = vector.broadcast %cst_249 : f32 to vector<8x32xf32>
    %654 = arith.mulf %653, %652 : vector<8x32xf32>
    %cst_250 = arith.constant 5.000000e-01 : f32
    %655 = vector.broadcast %cst_250 : f32 to vector<8x32xf32>
    %656 = arith.addf %654, %655 : vector<8x32xf32>
    %657 = vector.extract_strided_slice %648 {offsets = [0, 32], sizes = [8, 32], strides = [1, 1]} : vector<8x128xf32> to vector<8x32xf32>
    %cst_251 = arith.constant 5.000000e-01 : f32
    %658 = vector.broadcast %cst_251 : f32 to vector<8x32xf32>
    %659 = arith.mulf %658, %657 : vector<8x32xf32>
    %660 = math.tanh %659 : vector<8x32xf32>
    %cst_252 = arith.constant 5.000000e-01 : f32
    %661 = vector.broadcast %cst_252 : f32 to vector<8x32xf32>
    %662 = arith.mulf %661, %660 : vector<8x32xf32>
    %cst_253 = arith.constant 5.000000e-01 : f32
    %663 = vector.broadcast %cst_253 : f32 to vector<8x32xf32>
    %664 = arith.addf %662, %663 : vector<8x32xf32>
    %665 = vector.extract_strided_slice %648 {offsets = [0, 64], sizes = [8, 32], strides = [1, 1]} : vector<8x128xf32> to vector<8x32xf32>
    %666 = math.tanh %665 : vector<8x32xf32>
    %667 = vector.extract_strided_slice %648 {offsets = [0, 96], sizes = [8, 32], strides = [1, 1]} : vector<8x128xf32> to vector<8x32xf32>
    %cst_254 = arith.constant 5.000000e-01 : f32
    %668 = vector.broadcast %cst_254 : f32 to vector<8x32xf32>
    %669 = arith.mulf %668, %667 : vector<8x32xf32>
    %670 = math.tanh %669 : vector<8x32xf32>
    %cst_255 = arith.constant 5.000000e-01 : f32
    %671 = vector.broadcast %cst_255 : f32 to vector<8x32xf32>
    %672 = arith.mulf %671, %670 : vector<8x32xf32>
    %cst_256 = arith.constant 5.000000e-01 : f32
    %673 = vector.broadcast %cst_256 : f32 to vector<8x32xf32>
    %674 = arith.addf %672, %673 : vector<8x32xf32>
    %675 = arith.mulf %664, %581 : vector<8x32xf32>
    %676 = arith.mulf %656, %666 : vector<8x32xf32>
    %677 = arith.addf %675, %676 : vector<8x32xf32>
    %678 = math.tanh %677 : vector<8x32xf32>
    %679 = arith.mulf %674, %678 : vector<8x32xf32>
    %680 = arith.subf %677, %581 : vector<8x32xf32>
    %681 = arith.mulf %646, %680 : vector<8x32xf32>
    %682 = arith.addf %581, %681 : vector<8x32xf32>
    %683 = arith.subf %679, %584 : vector<8x32xf32>
    %684 = arith.mulf %646, %683 : vector<8x32xf32>
    %685 = arith.addf %584, %684 : vector<8x32xf32>
    %686 = arith.mulf %646, %679 : vector<8x32xf32>
    %687 = arith.index_cast %c6_i32 : i32 to index
    %c0_257 = arith.constant 0 : index
    %c0_258 = arith.constant 0 : index
    %688 = vector.load %arg11[%687, %c0_257, %c0_258] : memref<10x8x32xf32, #tpu.memory_space<vmem>>, vector<1x8x32xf32>
    %689 = vector.shape_cast %688 : vector<1x8x32xf32> to vector<8x32xf32>
    %690 = vector.shape_cast %686 : vector<8x32xf32> to vector<1x8x32xf32>
    tpu.vector_store %arg11[%687, %c0_257, %c0_258], %690 {strides = array<i32>} : memref<10x8x32xf32, #tpu.memory_space<vmem>>, vector<1x8x32xf32>,
    %c9_i32_259 = arith.constant 9 : i32
    %691 = arith.subi %c9_i32_259, %c6_i32 : i32
    %692 = arith.index_cast %691 : i32 to index
    %c0_260 = arith.constant 0 : index
    %c0_261 = arith.constant 0 : index
    %693 = vector.load %arg22[%692, %c0_260, %c0_261] : memref<10x8x128xf32, #tpu.memory_space<vmem>>, vector<1x8x128xf32>
    %694 = vector.shape_cast %693 : vector<1x8x128xf32> to vector<8x128xf32>
    %695 = arith.index_cast %691 : i32 to index
    %c0_262 = arith.constant 0 : index
    %c0_263 = arith.constant 0 : index
    %696 = vector.load %arg24[%695, %c0_262, %c0_263] : memref<10x8x32xf32, #tpu.memory_space<vmem>>, vector<1x8x32xf32>
    %697 = vector.shape_cast %696 : vector<1x8x32xf32> to vector<8x32xf32>
    %cst_264 = arith.constant dense<0.000000e+00> : vector<8x128xf32>
    %698 = tpu.matmul %635, %4, %cst_264 {dimension_numbers = #tpu.dot_dimension_numbers<[1], [0], [0], [1], [0, 0, 1, 1], [], []>} : vector<8x32xf32>, vector<32x128xf32>, vector<8x128xf32> -> vector<8x128xf32>
    %699 = arith.addf %694, %698 : vector<8x128xf32>
    %700 = vector.extract_strided_slice %699 {offsets = [0, 0], sizes = [8, 32], strides = [1, 1]} : vector<8x128xf32> to vector<8x32xf32>
    %cst_265 = arith.constant 5.000000e-01 : f32
    %701 = vector.broadcast %cst_265 : f32 to vector<8x32xf32>
    %702 = arith.mulf %701, %700 : vector<8x32xf32>
    %703 = math.tanh %702 : vector<8x32xf32>
    %cst_266 = arith.constant 5.000000e-01 : f32
    %704 = vector.broadcast %cst_266 : f32 to vector<8x32xf32>
    %705 = arith.mulf %704, %703 : vector<8x32xf32>
    %cst_267 = arith.constant 5.000000e-01 : f32
    %706 = vector.broadcast %cst_267 : f32 to vector<8x32xf32>
    %707 = arith.addf %705, %706 : vector<8x32xf32>
    %708 = vector.extract_strided_slice %699 {offsets = [0, 32], sizes = [8, 32], strides = [1, 1]} : vector<8x128xf32> to vector<8x32xf32>
    %cst_268 = arith.constant 5.000000e-01 : f32
    %709 = vector.broadcast %cst_268 : f32 to vector<8x32xf32>
    %710 = arith.mulf %709, %708 : vector<8x32xf32>
    %711 = math.tanh %710 : vector<8x32xf32>
    %cst_269 = arith.constant 5.000000e-01 : f32
    %712 = vector.broadcast %cst_269 : f32 to vector<8x32xf32>
    %713 = arith.mulf %712, %711 : vector<8x32xf32>
    %cst_270 = arith.constant 5.000000e-01 : f32
    %714 = vector.broadcast %cst_270 : f32 to vector<8x32xf32>
    %715 = arith.addf %713, %714 : vector<8x32xf32>
    %716 = vector.extract_strided_slice %699 {offsets = [0, 64], sizes = [8, 32], strides = [1, 1]} : vector<8x128xf32> to vector<8x32xf32>
    %717 = math.tanh %716 : vector<8x32xf32>
    %718 = vector.extract_strided_slice %699 {offsets = [0, 96], sizes = [8, 32], strides = [1, 1]} : vector<8x128xf32> to vector<8x32xf32>
    %cst_271 = arith.constant 5.000000e-01 : f32
    %719 = vector.broadcast %cst_271 : f32 to vector<8x32xf32>
    %720 = arith.mulf %719, %718 : vector<8x32xf32>
    %721 = math.tanh %720 : vector<8x32xf32>
    %cst_272 = arith.constant 5.000000e-01 : f32
    %722 = vector.broadcast %cst_272 : f32 to vector<8x32xf32>
    %723 = arith.mulf %722, %721 : vector<8x32xf32>
    %cst_273 = arith.constant 5.000000e-01 : f32
    %724 = vector.broadcast %cst_273 : f32 to vector<8x32xf32>
    %725 = arith.addf %723, %724 : vector<8x32xf32>
    %726 = arith.mulf %715, %632 : vector<8x32xf32>
    %727 = arith.mulf %707, %717 : vector<8x32xf32>
    %728 = arith.addf %726, %727 : vector<8x32xf32>
    %729 = math.tanh %728 : vector<8x32xf32>
    %730 = arith.mulf %725, %729 : vector<8x32xf32>
    %731 = arith.subf %728, %632 : vector<8x32xf32>
    %732 = arith.mulf %697, %731 : vector<8x32xf32>
    %733 = arith.addf %632, %732 : vector<8x32xf32>
    %734 = arith.subf %730, %635 : vector<8x32xf32>
    %735 = arith.mulf %697, %734 : vector<8x32xf32>
    %736 = arith.addf %635, %735 : vector<8x32xf32>
    %737 = arith.mulf %697, %730 : vector<8x32xf32>
    %738 = arith.index_cast %691 : i32 to index
    %c0_274 = arith.constant 0 : index
    %c0_275 = arith.constant 0 : index
    %739 = vector.load %arg12[%738, %c0_274, %c0_275] : memref<10x8x32xf32, #tpu.memory_space<vmem>>, vector<1x8x32xf32>
    %740 = vector.shape_cast %739 : vector<1x8x32xf32> to vector<8x32xf32>
    %741 = vector.shape_cast %737 : vector<8x32xf32> to vector<1x8x32xf32>
    tpu.vector_store %arg12[%738, %c0_274, %c0_275], %741 {strides = array<i32>} : memref<10x8x32xf32, #tpu.memory_space<vmem>>, vector<1x8x32xf32>,
    %c7_i32 = arith.constant 7 : i32
    %742 = arith.index_cast %c7_i32 : i32 to index
    %c0_276 = arith.constant 0 : index
    %c0_277 = arith.constant 0 : index
    %743 = vector.load %arg21[%742, %c0_276, %c0_277] : memref<10x8x128xf32, #tpu.memory_space<vmem>>, vector<1x8x128xf32>
    %744 = vector.shape_cast %743 : vector<1x8x128xf32> to vector<8x128xf32>
    %745 = arith.index_cast %c7_i32 : i32 to index
    %c0_278 = arith.constant 0 : index
    %c0_279 = arith.constant 0 : index
    %746 = vector.load %arg23[%745, %c0_278, %c0_279] : memref<10x8x32xf32, #tpu.memory_space<vmem>>, vector<1x8x32xf32>
    %747 = vector.shape_cast %746 : vector<1x8x32xf32> to vector<8x32xf32>
    %cst_280 = arith.constant dense<0.000000e+00> : vector<8x128xf32>
    %748 = tpu.matmul %685, %3, %cst_280 {dimension_numbers = #tpu.dot_dimension_numbers<[1], [0], [0], [1], [0, 0, 1, 1], [], []>} : vector<8x32xf32>, vector<32x128xf32>, vector<8x128xf32> -> vector<8x128xf32>
    %749 = arith.addf %744, %748 : vector<8x128xf32>
    %750 = vector.extract_strided_slice %749 {offsets = [0, 0], sizes = [8, 32], strides = [1, 1]} : vector<8x128xf32> to vector<8x32xf32>
    %cst_281 = arith.constant 5.000000e-01 : f32
    %751 = vector.broadcast %cst_281 : f32 to vector<8x32xf32>
    %752 = arith.mulf %751, %750 : vector<8x32xf32>
    %753 = math.tanh %752 : vector<8x32xf32>
    %cst_282 = arith.constant 5.000000e-01 : f32
    %754 = vector.broadcast %cst_282 : f32 to vector<8x32xf32>
    %755 = arith.mulf %754, %753 : vector<8x32xf32>
    %cst_283 = arith.constant 5.000000e-01 : f32
    %756 = vector.broadcast %cst_283 : f32 to vector<8x32xf32>
    %757 = arith.addf %755, %756 : vector<8x32xf32>
    %758 = vector.extract_strided_slice %749 {offsets = [0, 32], sizes = [8, 32], strides = [1, 1]} : vector<8x128xf32> to vector<8x32xf32>
    %cst_284 = arith.constant 5.000000e-01 : f32
    %759 = vector.broadcast %cst_284 : f32 to vector<8x32xf32>
    %760 = arith.mulf %759, %758 : vector<8x32xf32>
    %761 = math.tanh %760 : vector<8x32xf32>
    %cst_285 = arith.constant 5.000000e-01 : f32
    %762 = vector.broadcast %cst_285 : f32 to vector<8x32xf32>
    %763 = arith.mulf %762, %761 : vector<8x32xf32>
    %cst_286 = arith.constant 5.000000e-01 : f32
    %764 = vector.broadcast %cst_286 : f32 to vector<8x32xf32>
    %765 = arith.addf %763, %764 : vector<8x32xf32>
    %766 = vector.extract_strided_slice %749 {offsets = [0, 64], sizes = [8, 32], strides = [1, 1]} : vector<8x128xf32> to vector<8x32xf32>
    %767 = math.tanh %766 : vector<8x32xf32>
    %768 = vector.extract_strided_slice %749 {offsets = [0, 96], sizes = [8, 32], strides = [1, 1]} : vector<8x128xf32> to vector<8x32xf32>
    %cst_287 = arith.constant 5.000000e-01 : f32
    %769 = vector.broadcast %cst_287 : f32 to vector<8x32xf32>
    %770 = arith.mulf %769, %768 : vector<8x32xf32>
    %771 = math.tanh %770 : vector<8x32xf32>
    %cst_288 = arith.constant 5.000000e-01 : f32
    %772 = vector.broadcast %cst_288 : f32 to vector<8x32xf32>
    %773 = arith.mulf %772, %771 : vector<8x32xf32>
    %cst_289 = arith.constant 5.000000e-01 : f32
    %774 = vector.broadcast %cst_289 : f32 to vector<8x32xf32>
    %775 = arith.addf %773, %774 : vector<8x32xf32>
    %776 = arith.mulf %765, %682 : vector<8x32xf32>
    %777 = arith.mulf %757, %767 : vector<8x32xf32>
    %778 = arith.addf %776, %777 : vector<8x32xf32>
    %779 = math.tanh %778 : vector<8x32xf32>
    %780 = arith.mulf %775, %779 : vector<8x32xf32>
    %781 = arith.subf %778, %682 : vector<8x32xf32>
    %782 = arith.mulf %747, %781 : vector<8x32xf32>
    %783 = arith.addf %682, %782 : vector<8x32xf32>
    %784 = arith.subf %780, %685 : vector<8x32xf32>
    %785 = arith.mulf %747, %784 : vector<8x32xf32>
    %786 = arith.addf %685, %785 : vector<8x32xf32>
    %787 = arith.mulf %747, %780 : vector<8x32xf32>
    %788 = arith.index_cast %c7_i32 : i32 to index
    %c0_290 = arith.constant 0 : index
    %c0_291 = arith.constant 0 : index
    %789 = vector.load %arg11[%788, %c0_290, %c0_291] : memref<10x8x32xf32, #tpu.memory_space<vmem>>, vector<1x8x32xf32>
    %790 = vector.shape_cast %789 : vector<1x8x32xf32> to vector<8x32xf32>
    %791 = vector.shape_cast %787 : vector<8x32xf32> to vector<1x8x32xf32>
    tpu.vector_store %arg11[%788, %c0_290, %c0_291], %791 {strides = array<i32>} : memref<10x8x32xf32, #tpu.memory_space<vmem>>, vector<1x8x32xf32>,
    %c9_i32_292 = arith.constant 9 : i32
    %792 = arith.subi %c9_i32_292, %c7_i32 : i32
    %793 = arith.index_cast %792 : i32 to index
    %c0_293 = arith.constant 0 : index
    %c0_294 = arith.constant 0 : index
    %794 = vector.load %arg22[%793, %c0_293, %c0_294] : memref<10x8x128xf32, #tpu.memory_space<vmem>>, vector<1x8x128xf32>
    %795 = vector.shape_cast %794 : vector<1x8x128xf32> to vector<8x128xf32>
    %796 = arith.index_cast %792 : i32 to index
    %c0_295 = arith.constant 0 : index
    %c0_296 = arith.constant 0 : index
    %797 = vector.load %arg24[%796, %c0_295, %c0_296] : memref<10x8x32xf32, #tpu.memory_space<vmem>>, vector<1x8x32xf32>
    %798 = vector.shape_cast %797 : vector<1x8x32xf32> to vector<8x32xf32>
    %cst_297 = arith.constant dense<0.000000e+00> : vector<8x128xf32>
    %799 = tpu.matmul %736, %4, %cst_297 {dimension_numbers = #tpu.dot_dimension_numbers<[1], [0], [0], [1], [0, 0, 1, 1], [], []>} : vector<8x32xf32>, vector<32x128xf32>, vector<8x128xf32> -> vector<8x128xf32>
    %800 = arith.addf %795, %799 : vector<8x128xf32>
    %801 = vector.extract_strided_slice %800 {offsets = [0, 0], sizes = [8, 32], strides = [1, 1]} : vector<8x128xf32> to vector<8x32xf32>
    %cst_298 = arith.constant 5.000000e-01 : f32
    %802 = vector.broadcast %cst_298 : f32 to vector<8x32xf32>
    %803 = arith.mulf %802, %801 : vector<8x32xf32>
    %804 = math.tanh %803 : vector<8x32xf32>
    %cst_299 = arith.constant 5.000000e-01 : f32
    %805 = vector.broadcast %cst_299 : f32 to vector<8x32xf32>
    %806 = arith.mulf %805, %804 : vector<8x32xf32>
    %cst_300 = arith.constant 5.000000e-01 : f32
    %807 = vector.broadcast %cst_300 : f32 to vector<8x32xf32>
    %808 = arith.addf %806, %807 : vector<8x32xf32>
    %809 = vector.extract_strided_slice %800 {offsets = [0, 32], sizes = [8, 32], strides = [1, 1]} : vector<8x128xf32> to vector<8x32xf32>
    %cst_301 = arith.constant 5.000000e-01 : f32
    %810 = vector.broadcast %cst_301 : f32 to vector<8x32xf32>
    %811 = arith.mulf %810, %809 : vector<8x32xf32>
    %812 = math.tanh %811 : vector<8x32xf32>
    %cst_302 = arith.constant 5.000000e-01 : f32
    %813 = vector.broadcast %cst_302 : f32 to vector<8x32xf32>
    %814 = arith.mulf %813, %812 : vector<8x32xf32>
    %cst_303 = arith.constant 5.000000e-01 : f32
    %815 = vector.broadcast %cst_303 : f32 to vector<8x32xf32>
    %816 = arith.addf %814, %815 : vector<8x32xf32>
    %817 = vector.extract_strided_slice %800 {offsets = [0, 64], sizes = [8, 32], strides = [1, 1]} : vector<8x128xf32> to vector<8x32xf32>
    %818 = math.tanh %817 : vector<8x32xf32>
    %819 = vector.extract_strided_slice %800 {offsets = [0, 96], sizes = [8, 32], strides = [1, 1]} : vector<8x128xf32> to vector<8x32xf32>
    %cst_304 = arith.constant 5.000000e-01 : f32
    %820 = vector.broadcast %cst_304 : f32 to vector<8x32xf32>
    %821 = arith.mulf %820, %819 : vector<8x32xf32>
    %822 = math.tanh %821 : vector<8x32xf32>
    %cst_305 = arith.constant 5.000000e-01 : f32
    %823 = vector.broadcast %cst_305 : f32 to vector<8x32xf32>
    %824 = arith.mulf %823, %822 : vector<8x32xf32>
    %cst_306 = arith.constant 5.000000e-01 : f32
    %825 = vector.broadcast %cst_306 : f32 to vector<8x32xf32>
    %826 = arith.addf %824, %825 : vector<8x32xf32>
    %827 = arith.mulf %816, %733 : vector<8x32xf32>
    %828 = arith.mulf %808, %818 : vector<8x32xf32>
    %829 = arith.addf %827, %828 : vector<8x32xf32>
    %830 = math.tanh %829 : vector<8x32xf32>
    %831 = arith.mulf %826, %830 : vector<8x32xf32>
    %832 = arith.subf %829, %733 : vector<8x32xf32>
    %833 = arith.mulf %798, %832 : vector<8x32xf32>
    %834 = arith.addf %733, %833 : vector<8x32xf32>
    %835 = arith.subf %831, %736 : vector<8x32xf32>
    %836 = arith.mulf %798, %835 : vector<8x32xf32>
    %837 = arith.addf %736, %836 : vector<8x32xf32>
    %838 = arith.mulf %798, %831 : vector<8x32xf32>
    %839 = arith.index_cast %792 : i32 to index
    %c0_307 = arith.constant 0 : index
    %c0_308 = arith.constant 0 : index
    %840 = vector.load %arg12[%839, %c0_307, %c0_308] : memref<10x8x32xf32, #tpu.memory_space<vmem>>, vector<1x8x32xf32>
    %841 = vector.shape_cast %840 : vector<1x8x32xf32> to vector<8x32xf32>
    %842 = vector.shape_cast %838 : vector<8x32xf32> to vector<1x8x32xf32>
    tpu.vector_store %arg12[%839, %c0_307, %c0_308], %842 {strides = array<i32>} : memref<10x8x32xf32, #tpu.memory_space<vmem>>, vector<1x8x32xf32>,
    %c8_i32 = arith.constant 8 : i32
    %843 = arith.index_cast %c8_i32 : i32 to index
    %c0_309 = arith.constant 0 : index
    %c0_310 = arith.constant 0 : index
    %844 = vector.load %arg21[%843, %c0_309, %c0_310] : memref<10x8x128xf32, #tpu.memory_space<vmem>>, vector<1x8x128xf32>
    %845 = vector.shape_cast %844 : vector<1x8x128xf32> to vector<8x128xf32>
    %846 = arith.index_cast %c8_i32 : i32 to index
    %c0_311 = arith.constant 0 : index
    %c0_312 = arith.constant 0 : index
    %847 = vector.load %arg23[%846, %c0_311, %c0_312] : memref<10x8x32xf32, #tpu.memory_space<vmem>>, vector<1x8x32xf32>
    %848 = vector.shape_cast %847 : vector<1x8x32xf32> to vector<8x32xf32>
    %cst_313 = arith.constant dense<0.000000e+00> : vector<8x128xf32>
    %849 = tpu.matmul %786, %3, %cst_313 {dimension_numbers = #tpu.dot_dimension_numbers<[1], [0], [0], [1], [0, 0, 1, 1], [], []>} : vector<8x32xf32>, vector<32x128xf32>, vector<8x128xf32> -> vector<8x128xf32>
    %850 = arith.addf %845, %849 : vector<8x128xf32>
    %851 = vector.extract_strided_slice %850 {offsets = [0, 0], sizes = [8, 32], strides = [1, 1]} : vector<8x128xf32> to vector<8x32xf32>
    %cst_314 = arith.constant 5.000000e-01 : f32
    %852 = vector.broadcast %cst_314 : f32 to vector<8x32xf32>
    %853 = arith.mulf %852, %851 : vector<8x32xf32>
    %854 = math.tanh %853 : vector<8x32xf32>
    %cst_315 = arith.constant 5.000000e-01 : f32
    %855 = vector.broadcast %cst_315 : f32 to vector<8x32xf32>
    %856 = arith.mulf %855, %854 : vector<8x32xf32>
    %cst_316 = arith.constant 5.000000e-01 : f32
    %857 = vector.broadcast %cst_316 : f32 to vector<8x32xf32>
    %858 = arith.addf %856, %857 : vector<8x32xf32>
    %859 = vector.extract_strided_slice %850 {offsets = [0, 32], sizes = [8, 32], strides = [1, 1]} : vector<8x128xf32> to vector<8x32xf32>
    %cst_317 = arith.constant 5.000000e-01 : f32
    %860 = vector.broadcast %cst_317 : f32 to vector<8x32xf32>
    %861 = arith.mulf %860, %859 : vector<8x32xf32>
    %862 = math.tanh %861 : vector<8x32xf32>
    %cst_318 = arith.constant 5.000000e-01 : f32
    %863 = vector.broadcast %cst_318 : f32 to vector<8x32xf32>
    %864 = arith.mulf %863, %862 : vector<8x32xf32>
    %cst_319 = arith.constant 5.000000e-01 : f32
    %865 = vector.broadcast %cst_319 : f32 to vector<8x32xf32>
    %866 = arith.addf %864, %865 : vector<8x32xf32>
    %867 = vector.extract_strided_slice %850 {offsets = [0, 64], sizes = [8, 32], strides = [1, 1]} : vector<8x128xf32> to vector<8x32xf32>
    %868 = math.tanh %867 : vector<8x32xf32>
    %869 = vector.extract_strided_slice %850 {offsets = [0, 96], sizes = [8, 32], strides = [1, 1]} : vector<8x128xf32> to vector<8x32xf32>
    %cst_320 = arith.constant 5.000000e-01 : f32
    %870 = vector.broadcast %cst_320 : f32 to vector<8x32xf32>
    %871 = arith.mulf %870, %869 : vector<8x32xf32>
    %872 = math.tanh %871 : vector<8x32xf32>
    %cst_321 = arith.constant 5.000000e-01 : f32
    %873 = vector.broadcast %cst_321 : f32 to vector<8x32xf32>
    %874 = arith.mulf %873, %872 : vector<8x32xf32>
    %cst_322 = arith.constant 5.000000e-01 : f32
    %875 = vector.broadcast %cst_322 : f32 to vector<8x32xf32>
    %876 = arith.addf %874, %875 : vector<8x32xf32>
    %877 = arith.mulf %866, %783 : vector<8x32xf32>
    %878 = arith.mulf %858, %868 : vector<8x32xf32>
    %879 = arith.addf %877, %878 : vector<8x32xf32>
    %880 = math.tanh %879 : vector<8x32xf32>
    %881 = arith.mulf %876, %880 : vector<8x32xf32>
    %882 = arith.subf %879, %783 : vector<8x32xf32>
    %883 = arith.mulf %848, %882 : vector<8x32xf32>
    %884 = arith.addf %783, %883 : vector<8x32xf32>
    %885 = arith.subf %881, %786 : vector<8x32xf32>
    %886 = arith.mulf %848, %885 : vector<8x32xf32>
    %887 = arith.addf %786, %886 : vector<8x32xf32>
    %888 = arith.mulf %848, %881 : vector<8x32xf32>
    %889 = arith.index_cast %c8_i32 : i32 to index
    %c0_323 = arith.constant 0 : index
    %c0_324 = arith.constant 0 : index
    %890 = vector.load %arg11[%889, %c0_323, %c0_324] : memref<10x8x32xf32, #tpu.memory_space<vmem>>, vector<1x8x32xf32>
    %891 = vector.shape_cast %890 : vector<1x8x32xf32> to vector<8x32xf32>
    %892 = vector.shape_cast %888 : vector<8x32xf32> to vector<1x8x32xf32>
    tpu.vector_store %arg11[%889, %c0_323, %c0_324], %892 {strides = array<i32>} : memref<10x8x32xf32, #tpu.memory_space<vmem>>, vector<1x8x32xf32>,
    %c9_i32_325 = arith.constant 9 : i32
    %893 = arith.subi %c9_i32_325, %c8_i32 : i32
    %894 = arith.index_cast %893 : i32 to index
    %c0_326 = arith.constant 0 : index
    %c0_327 = arith.constant 0 : index
    %895 = vector.load %arg22[%894, %c0_326, %c0_327] : memref<10x8x128xf32, #tpu.memory_space<vmem>>, vector<1x8x128xf32>
    %896 = vector.shape_cast %895 : vector<1x8x128xf32> to vector<8x128xf32>
    %897 = arith.index_cast %893 : i32 to index
    %c0_328 = arith.constant 0 : index
    %c0_329 = arith.constant 0 : index
    %898 = vector.load %arg24[%897, %c0_328, %c0_329] : memref<10x8x32xf32, #tpu.memory_space<vmem>>, vector<1x8x32xf32>
    %899 = vector.shape_cast %898 : vector<1x8x32xf32> to vector<8x32xf32>
    %cst_330 = arith.constant dense<0.000000e+00> : vector<8x128xf32>
    %900 = tpu.matmul %837, %4, %cst_330 {dimension_numbers = #tpu.dot_dimension_numbers<[1], [0], [0], [1], [0, 0, 1, 1], [], []>} : vector<8x32xf32>, vector<32x128xf32>, vector<8x128xf32> -> vector<8x128xf32>
    %901 = arith.addf %896, %900 : vector<8x128xf32>
    %902 = vector.extract_strided_slice %901 {offsets = [0, 0], sizes = [8, 32], strides = [1, 1]} : vector<8x128xf32> to vector<8x32xf32>
    %cst_331 = arith.constant 5.000000e-01 : f32
    %903 = vector.broadcast %cst_331 : f32 to vector<8x32xf32>
    %904 = arith.mulf %903, %902 : vector<8x32xf32>
    %905 = math.tanh %904 : vector<8x32xf32>
    %cst_332 = arith.constant 5.000000e-01 : f32
    %906 = vector.broadcast %cst_332 : f32 to vector<8x32xf32>
    %907 = arith.mulf %906, %905 : vector<8x32xf32>
    %cst_333 = arith.constant 5.000000e-01 : f32
    %908 = vector.broadcast %cst_333 : f32 to vector<8x32xf32>
    %909 = arith.addf %907, %908 : vector<8x32xf32>
    %910 = vector.extract_strided_slice %901 {offsets = [0, 32], sizes = [8, 32], strides = [1, 1]} : vector<8x128xf32> to vector<8x32xf32>
    %cst_334 = arith.constant 5.000000e-01 : f32
    %911 = vector.broadcast %cst_334 : f32 to vector<8x32xf32>
    %912 = arith.mulf %911, %910 : vector<8x32xf32>
    %913 = math.tanh %912 : vector<8x32xf32>
    %cst_335 = arith.constant 5.000000e-01 : f32
    %914 = vector.broadcast %cst_335 : f32 to vector<8x32xf32>
    %915 = arith.mulf %914, %913 : vector<8x32xf32>
    %cst_336 = arith.constant 5.000000e-01 : f32
    %916 = vector.broadcast %cst_336 : f32 to vector<8x32xf32>
    %917 = arith.addf %915, %916 : vector<8x32xf32>
    %918 = vector.extract_strided_slice %901 {offsets = [0, 64], sizes = [8, 32], strides = [1, 1]} : vector<8x128xf32> to vector<8x32xf32>
    %919 = math.tanh %918 : vector<8x32xf32>
    %920 = vector.extract_strided_slice %901 {offsets = [0, 96], sizes = [8, 32], strides = [1, 1]} : vector<8x128xf32> to vector<8x32xf32>
    %cst_337 = arith.constant 5.000000e-01 : f32
    %921 = vector.broadcast %cst_337 : f32 to vector<8x32xf32>
    %922 = arith.mulf %921, %920 : vector<8x32xf32>
    %923 = math.tanh %922 : vector<8x32xf32>
    %cst_338 = arith.constant 5.000000e-01 : f32
    %924 = vector.broadcast %cst_338 : f32 to vector<8x32xf32>
    %925 = arith.mulf %924, %923 : vector<8x32xf32>
    %cst_339 = arith.constant 5.000000e-01 : f32
    %926 = vector.broadcast %cst_339 : f32 to vector<8x32xf32>
    %927 = arith.addf %925, %926 : vector<8x32xf32>
    %928 = arith.mulf %917, %834 : vector<8x32xf32>
    %929 = arith.mulf %909, %919 : vector<8x32xf32>
    %930 = arith.addf %928, %929 : vector<8x32xf32>
    %931 = math.tanh %930 : vector<8x32xf32>
    %932 = arith.mulf %927, %931 : vector<8x32xf32>
    %933 = arith.subf %930, %834 : vector<8x32xf32>
    %934 = arith.mulf %899, %933 : vector<8x32xf32>
    %935 = arith.addf %834, %934 : vector<8x32xf32>
    %936 = arith.subf %932, %837 : vector<8x32xf32>
    %937 = arith.mulf %899, %936 : vector<8x32xf32>
    %938 = arith.addf %837, %937 : vector<8x32xf32>
    %939 = arith.mulf %899, %932 : vector<8x32xf32>
    %940 = arith.index_cast %893 : i32 to index
    %c0_340 = arith.constant 0 : index
    %c0_341 = arith.constant 0 : index
    %941 = vector.load %arg12[%940, %c0_340, %c0_341] : memref<10x8x32xf32, #tpu.memory_space<vmem>>, vector<1x8x32xf32>
    %942 = vector.shape_cast %941 : vector<1x8x32xf32> to vector<8x32xf32>
    %943 = vector.shape_cast %939 : vector<8x32xf32> to vector<1x8x32xf32>
    tpu.vector_store %arg12[%940, %c0_340, %c0_341], %943 {strides = array<i32>} : memref<10x8x32xf32, #tpu.memory_space<vmem>>, vector<1x8x32xf32>,
    %c9_i32_342 = arith.constant 9 : i32
    %944 = arith.index_cast %c9_i32_342 : i32 to index
    %c0_343 = arith.constant 0 : index
    %c0_344 = arith.constant 0 : index
    %945 = vector.load %arg21[%944, %c0_343, %c0_344] : memref<10x8x128xf32, #tpu.memory_space<vmem>>, vector<1x8x128xf32>
    %946 = vector.shape_cast %945 : vector<1x8x128xf32> to vector<8x128xf32>
    %947 = arith.index_cast %c9_i32_342 : i32 to index
    %c0_345 = arith.constant 0 : index
    %c0_346 = arith.constant 0 : index
    %948 = vector.load %arg23[%947, %c0_345, %c0_346] : memref<10x8x32xf32, #tpu.memory_space<vmem>>, vector<1x8x32xf32>
    %949 = vector.shape_cast %948 : vector<1x8x32xf32> to vector<8x32xf32>
    %cst_347 = arith.constant dense<0.000000e+00> : vector<8x128xf32>
    %950 = tpu.matmul %887, %3, %cst_347 {dimension_numbers = #tpu.dot_dimension_numbers<[1], [0], [0], [1], [0, 0, 1, 1], [], []>} : vector<8x32xf32>, vector<32x128xf32>, vector<8x128xf32> -> vector<8x128xf32>
    %951 = arith.addf %946, %950 : vector<8x128xf32>
    %952 = vector.extract_strided_slice %951 {offsets = [0, 0], sizes = [8, 32], strides = [1, 1]} : vector<8x128xf32> to vector<8x32xf32>
    %cst_348 = arith.constant 5.000000e-01 : f32
    %953 = vector.broadcast %cst_348 : f32 to vector<8x32xf32>
    %954 = arith.mulf %953, %952 : vector<8x32xf32>
    %955 = math.tanh %954 : vector<8x32xf32>
    %cst_349 = arith.constant 5.000000e-01 : f32
    %956 = vector.broadcast %cst_349 : f32 to vector<8x32xf32>
    %957 = arith.mulf %956, %955 : vector<8x32xf32>
    %cst_350 = arith.constant 5.000000e-01 : f32
    %958 = vector.broadcast %cst_350 : f32 to vector<8x32xf32>
    %959 = arith.addf %957, %958 : vector<8x32xf32>
    %960 = vector.extract_strided_slice %951 {offsets = [0, 32], sizes = [8, 32], strides = [1, 1]} : vector<8x128xf32> to vector<8x32xf32>
    %cst_351 = arith.constant 5.000000e-01 : f32
    %961 = vector.broadcast %cst_351 : f32 to vector<8x32xf32>
    %962 = arith.mulf %961, %960 : vector<8x32xf32>
    %963 = math.tanh %962 : vector<8x32xf32>
    %cst_352 = arith.constant 5.000000e-01 : f32
    %964 = vector.broadcast %cst_352 : f32 to vector<8x32xf32>
    %965 = arith.mulf %964, %963 : vector<8x32xf32>
    %cst_353 = arith.constant 5.000000e-01 : f32
    %966 = vector.broadcast %cst_353 : f32 to vector<8x32xf32>
    %967 = arith.addf %965, %966 : vector<8x32xf32>
    %968 = vector.extract_strided_slice %951 {offsets = [0, 64], sizes = [8, 32], strides = [1, 1]} : vector<8x128xf32> to vector<8x32xf32>
    %969 = math.tanh %968 : vector<8x32xf32>
    %970 = vector.extract_strided_slice %951 {offsets = [0, 96], sizes = [8, 32], strides = [1, 1]} : vector<8x128xf32> to vector<8x32xf32>
    %cst_354 = arith.constant 5.000000e-01 : f32
    %971 = vector.broadcast %cst_354 : f32 to vector<8x32xf32>
    %972 = arith.mulf %971, %970 : vector<8x32xf32>
    %973 = math.tanh %972 : vector<8x32xf32>
    %cst_355 = arith.constant 5.000000e-01 : f32
    %974 = vector.broadcast %cst_355 : f32 to vector<8x32xf32>
    %975 = arith.mulf %974, %973 : vector<8x32xf32>
    %cst_356 = arith.constant 5.000000e-01 : f32
    %976 = vector.broadcast %cst_356 : f32 to vector<8x32xf32>
    %977 = arith.addf %975, %976 : vector<8x32xf32>
    %978 = arith.mulf %967, %884 : vector<8x32xf32>
    %979 = arith.mulf %959, %969 : vector<8x32xf32>
    %980 = arith.addf %978, %979 : vector<8x32xf32>
    %981 = math.tanh %980 : vector<8x32xf32>
    %982 = arith.mulf %977, %981 : vector<8x32xf32>
    %983 = arith.subf %980, %884 : vector<8x32xf32>
    %984 = arith.mulf %949, %983 : vector<8x32xf32>
    %985 = arith.addf %884, %984 : vector<8x32xf32>
    %986 = arith.subf %982, %887 : vector<8x32xf32>
    %987 = arith.mulf %949, %986 : vector<8x32xf32>
    %988 = arith.addf %887, %987 : vector<8x32xf32>
    %989 = arith.mulf %949, %982 : vector<8x32xf32>
    %990 = arith.index_cast %c9_i32_342 : i32 to index
    %c0_357 = arith.constant 0 : index
    %c0_358 = arith.constant 0 : index
    %991 = vector.load %arg11[%990, %c0_357, %c0_358] : memref<10x8x32xf32, #tpu.memory_space<vmem>>, vector<1x8x32xf32>
    %992 = vector.shape_cast %991 : vector<1x8x32xf32> to vector<8x32xf32>
    %993 = vector.shape_cast %989 : vector<8x32xf32> to vector<1x8x32xf32>
    tpu.vector_store %arg11[%990, %c0_357, %c0_358], %993 {strides = array<i32>} : memref<10x8x32xf32, #tpu.memory_space<vmem>>, vector<1x8x32xf32>,
    %c9_i32_359 = arith.constant 9 : i32
    %994 = arith.subi %c9_i32_359, %c9_i32_342 : i32
    %995 = arith.index_cast %994 : i32 to index
    %c0_360 = arith.constant 0 : index
    %c0_361 = arith.constant 0 : index
    %996 = vector.load %arg22[%995, %c0_360, %c0_361] : memref<10x8x128xf32, #tpu.memory_space<vmem>>, vector<1x8x128xf32>
    %997 = vector.shape_cast %996 : vector<1x8x128xf32> to vector<8x128xf32>
    %998 = arith.index_cast %994 : i32 to index
    %c0_362 = arith.constant 0 : index
    %c0_363 = arith.constant 0 : index
    %999 = vector.load %arg24[%998, %c0_362, %c0_363] : memref<10x8x32xf32, #tpu.memory_space<vmem>>, vector<1x8x32xf32>
    %1000 = vector.shape_cast %999 : vector<1x8x32xf32> to vector<8x32xf32>
    %cst_364 = arith.constant dense<0.000000e+00> : vector<8x128xf32>
    %1001 = tpu.matmul %938, %4, %cst_364 {dimension_numbers = #tpu.dot_dimension_numbers<[1], [0], [0], [1], [0, 0, 1, 1], [], []>} : vector<8x32xf32>, vector<32x128xf32>, vector<8x128xf32> -> vector<8x128xf32>
    %1002 = arith.addf %997, %1001 : vector<8x128xf32>
    %1003 = vector.extract_strided_slice %1002 {offsets = [0, 0], sizes = [8, 32], strides = [1, 1]} : vector<8x128xf32> to vector<8x32xf32>
    %cst_365 = arith.constant 5.000000e-01 : f32
    %1004 = vector.broadcast %cst_365 : f32 to vector<8x32xf32>
    %1005 = arith.mulf %1004, %1003 : vector<8x32xf32>
    %1006 = math.tanh %1005 : vector<8x32xf32>
    %cst_366 = arith.constant 5.000000e-01 : f32
    %1007 = vector.broadcast %cst_366 : f32 to vector<8x32xf32>
    %1008 = arith.mulf %1007, %1006 : vector<8x32xf32>
    %cst_367 = arith.constant 5.000000e-01 : f32
    %1009 = vector.broadcast %cst_367 : f32 to vector<8x32xf32>
    %1010 = arith.addf %1008, %1009 : vector<8x32xf32>
    %1011 = vector.extract_strided_slice %1002 {offsets = [0, 32], sizes = [8, 32], strides = [1, 1]} : vector<8x128xf32> to vector<8x32xf32>
    %cst_368 = arith.constant 5.000000e-01 : f32
    %1012 = vector.broadcast %cst_368 : f32 to vector<8x32xf32>
    %1013 = arith.mulf %1012, %1011 : vector<8x32xf32>
    %1014 = math.tanh %1013 : vector<8x32xf32>
    %cst_369 = arith.constant 5.000000e-01 : f32
    %1015 = vector.broadcast %cst_369 : f32 to vector<8x32xf32>
    %1016 = arith.mulf %1015, %1014 : vector<8x32xf32>
    %cst_370 = arith.constant 5.000000e-01 : f32
    %1017 = vector.broadcast %cst_370 : f32 to vector<8x32xf32>
    %1018 = arith.addf %1016, %1017 : vector<8x32xf32>
    %1019 = vector.extract_strided_slice %1002 {offsets = [0, 64], sizes = [8, 32], strides = [1, 1]} : vector<8x128xf32> to vector<8x32xf32>
    %1020 = math.tanh %1019 : vector<8x32xf32>
    %1021 = vector.extract_strided_slice %1002 {offsets = [0, 96], sizes = [8, 32], strides = [1, 1]} : vector<8x128xf32> to vector<8x32xf32>
    %cst_371 = arith.constant 5.000000e-01 : f32
    %1022 = vector.broadcast %cst_371 : f32 to vector<8x32xf32>
    %1023 = arith.mulf %1022, %1021 : vector<8x32xf32>
    %1024 = math.tanh %1023 : vector<8x32xf32>
    %cst_372 = arith.constant 5.000000e-01 : f32
    %1025 = vector.broadcast %cst_372 : f32 to vector<8x32xf32>
    %1026 = arith.mulf %1025, %1024 : vector<8x32xf32>
    %cst_373 = arith.constant 5.000000e-01 : f32
    %1027 = vector.broadcast %cst_373 : f32 to vector<8x32xf32>
    %1028 = arith.addf %1026, %1027 : vector<8x32xf32>
    %1029 = arith.mulf %1018, %935 : vector<8x32xf32>
    %1030 = arith.mulf %1010, %1020 : vector<8x32xf32>
    %1031 = arith.addf %1029, %1030 : vector<8x32xf32>
    %1032 = math.tanh %1031 : vector<8x32xf32>
    %1033 = arith.mulf %1028, %1032 : vector<8x32xf32>
    %1034 = arith.subf %1031, %935 : vector<8x32xf32>
    %1035 = arith.mulf %1000, %1034 : vector<8x32xf32>
    %1036 = arith.addf %935, %1035 : vector<8x32xf32>
    %1037 = arith.subf %1033, %938 : vector<8x32xf32>
    %1038 = arith.mulf %1000, %1037 : vector<8x32xf32>
    %1039 = arith.addf %938, %1038 : vector<8x32xf32>
    %1040 = arith.mulf %1000, %1033 : vector<8x32xf32>
    %1041 = arith.index_cast %994 : i32 to index
    %c0_374 = arith.constant 0 : index
    %c0_375 = arith.constant 0 : index
    %1042 = vector.load %arg12[%1041, %c0_374, %c0_375] : memref<10x8x32xf32, #tpu.memory_space<vmem>>, vector<1x8x32xf32>
    %1043 = vector.shape_cast %1042 : vector<1x8x32xf32> to vector<8x32xf32>
    %1044 = vector.shape_cast %1040 : vector<8x32xf32> to vector<1x8x32xf32>
    tpu.vector_store %arg12[%1041, %c0_374, %c0_375], %1044 {strides = array<i32>} : memref<10x8x32xf32, #tpu.memory_space<vmem>>, vector<1x8x32xf32>,
    %c10_i32 = arith.constant 10 : i32
    %c0_376 = arith.constant 0 : index
    %c0_377 = arith.constant 0 : index
    %1045 = vector.load %arg17[%c0_376, %c0_377] : memref<8x32xf32, #tpu.memory_space<vmem>>, vector<8x32xf32>
    tpu.vector_store %arg17[%c0_376, %c0_377], %988 {strides = array<i32>} : memref<8x32xf32, #tpu.memory_space<vmem>>, vector<8x32xf32>,
    %c0_378 = arith.constant 0 : index
    %c0_379 = arith.constant 0 : index
    %1046 = vector.load %arg19[%c0_378, %c0_379] : memref<8x32xf32, #tpu.memory_space<vmem>>, vector<8x32xf32>
    tpu.vector_store %arg19[%c0_378, %c0_379], %985 {strides = array<i32>} : memref<8x32xf32, #tpu.memory_space<vmem>>, vector<8x32xf32>,
    %c0_380 = arith.constant 0 : index
    %c0_381 = arith.constant 0 : index
    %1047 = vector.load %arg18[%c0_380, %c0_381] : memref<8x32xf32, #tpu.memory_space<vmem>>, vector<8x32xf32>
    tpu.vector_store %arg18[%c0_380, %c0_381], %1039 {strides = array<i32>} : memref<8x32xf32, #tpu.memory_space<vmem>>, vector<8x32xf32>,
    %c0_382 = arith.constant 0 : index
    %c0_383 = arith.constant 0 : index
    %1048 = vector.load %arg20[%c0_382, %c0_383] : memref<8x32xf32, #tpu.memory_space<vmem>>, vector<8x32xf32>
    tpu.vector_store %arg20[%c0_382, %c0_383], %1036 {strides = array<i32>} : memref<8x32xf32, #tpu.memory_space<vmem>>, vector<8x32xf32>,
    %c0_i32_384 = arith.constant 0 : i32
    %1049 = arith.cmpi eq, %arg0, %c0_i32_384 : i32
    %1050 = arith.extui %1049 : i1 to i32
    %c0_i32_385 = arith.constant 0 : i32
    %1051 = arith.cmpi ne, %1050, %c0_i32_385 : i32
    scf.if %1051 {
      %c0_386 = arith.constant 0 : index
      %c0_387 = arith.constant 0 : index
      %1052 = vector.load %arg17[%c0_386, %c0_387] : memref<8x32xf32, #tpu.memory_space<vmem>>, vector<8x32xf32>
      %c0_388 = arith.constant 0 : index
      %c0_389 = arith.constant 0 : index
      %1053 = vector.load %arg13[%c0_388, %c0_389] : memref<8x32xf32, #tpu.memory_space<vmem>>, vector<8x32xf32>
      tpu.vector_store %arg13[%c0_388, %c0_389], %1052 {strides = array<i32>} : memref<8x32xf32, #tpu.memory_space<vmem>>, vector<8x32xf32>,
      %c0_390 = arith.constant 0 : index
      %c0_391 = arith.constant 0 : index
      %1054 = vector.load %arg19[%c0_390, %c0_391] : memref<8x32xf32, #tpu.memory_space<vmem>>, vector<8x32xf32>
      %c0_392 = arith.constant 0 : index
      %c0_393 = arith.constant 0 : index
      %1055 = vector.load %arg15[%c0_392, %c0_393] : memref<8x32xf32, #tpu.memory_space<vmem>>, vector<8x32xf32>
      tpu.vector_store %arg15[%c0_392, %c0_393], %1054 {strides = array<i32>} : memref<8x32xf32, #tpu.memory_space<vmem>>, vector<8x32xf32>,
      %c0_394 = arith.constant 0 : index
      %c0_395 = arith.constant 0 : index
      %1056 = vector.load %arg18[%c0_394, %c0_395] : memref<8x32xf32, #tpu.memory_space<vmem>>, vector<8x32xf32>
      %c0_396 = arith.constant 0 : index
      %c0_397 = arith.constant 0 : index
      %1057 = vector.load %arg14[%c0_396, %c0_397] : memref<8x32xf32, #tpu.memory_space<vmem>>, vector<8x32xf32>
      tpu.vector_store %arg14[%c0_396, %c0_397], %1056 {strides = array<i32>} : memref<8x32xf32, #tpu.memory_space<vmem>>, vector<8x32xf32>,
      %c0_398 = arith.constant 0 : index
      %c0_399 = arith.constant 0 : index
      %1058 = vector.load %arg20[%c0_398, %c0_399] : memref<8x32xf32, #tpu.memory_space<vmem>>, vector<8x32xf32>
      %c0_400 = arith.constant 0 : index
      %c0_401 = arith.constant 0 : index
      %1059 = vector.load %arg16[%c0_400, %c0_401] : memref<8x32xf32, #tpu.memory_space<vmem>>, vector<8x32xf32>
      tpu.vector_store %arg16[%c0_400, %c0_401], %1058 {strides = array<i32>} : memref<8x32xf32, #tpu.memory_space<vmem>>, vector<8x32xf32>,
    } else {
    }
    return
  }
  func.func @transform_0(%arg0: i32) -> (i32, i32, i32) {
    %c0_i32 = arith.constant 0 : i32
    %c0_i32_0 = arith.constant 0 : i32
    %c0_i32_1 = arith.constant 0 : i32
    return %arg0, %c0_i32, %c0_i32_0 : i32, i32, i32
  }
  func.func @transform_1(%arg0: i32) -> (i32, i32, i32) {
    %c0_i32 = arith.constant 0 : i32
    %0 = arith.subi %c0_i32, %arg0 : i32
    %c0_i32_0 = arith.constant 0 : i32
    %c0_i32_1 = arith.constant 0 : i32
    %c0_i32_2 = arith.constant 0 : i32
    return %0, %c0_i32_0, %c0_i32_1 : i32, i32, i32
  }
  func.func @transform_2(%arg0: i32) -> (i32, i32, i32) {
    %c0_i32 = arith.constant 0 : i32
    %c0_i32_0 = arith.constant 0 : i32
    %c0_i32_1 = arith.constant 0 : i32
    return %arg0, %c0_i32, %c0_i32_0 : i32, i32, i32
  }
  func.func @transform_3(%arg0: i32) -> (i32, i32, i32) {
    %c0_i32 = arith.constant 0 : i32
    %0 = arith.subi %c0_i32, %arg0 : i32
    %c0_i32_0 = arith.constant 0 : i32
    %c0_i32_1 = arith.constant 0 : i32
    %c0_i32_2 = arith.constant 0 : i32
    return %0, %c0_i32_0, %c0_i32_1 : i32, i32, i32
  }
  func.func @transform_4(%arg0: i32) -> (i32, i32) {
    %c0_i32 = arith.constant 0 : i32
    %c0_i32_0 = arith.constant 0 : i32
    %c0_i32_1 = arith.constant 0 : i32
    return %c0_i32, %c0_i32_0 : i32, i32
  }
  func.func @transform_5(%arg0: i32) -> (i32, i32) {
    %c0_i32 = arith.constant 0 : i32
    %c0_i32_0 = arith.constant 0 : i32
    %c0_i32_1 = arith.constant 0 : i32
    return %c0_i32, %c0_i32_0 : i32, i32
  }
  func.func @transform_6(%arg0: i32) -> (i32, i32) {
    %c0_i32 = arith.constant 0 : i32
    %c0_i32_0 = arith.constant 0 : i32
    %c0_i32_1 = arith.constant 0 : i32
    return %c0_i32, %c0_i32_0 : i32, i32
  }
  func.func @transform_7(%arg0: i32) -> (i32, i32) {
    %c0_i32 = arith.constant 0 : i32
    %c0_i32_0 = arith.constant 0 : i32
    %c0_i32_1 = arith.constant 0 : i32
    return %c0_i32, %c0_i32_0 : i32, i32
  }
  func.func @transform_8(%arg0: i32) -> (i32, i32) {
    %c0_i32 = arith.constant 0 : i32
    %c0_i32_0 = arith.constant 0 : i32
    %c0_i32_1 = arith.constant 0 : i32
    return %c0_i32, %c0_i32_0 : i32, i32
  }
  func.func @transform_9(%arg0: i32) -> (i32, i32) {
    %c0_i32 = arith.constant 0 : i32
    %c0_i32_0 = arith.constant 0 : i32
    %c0_i32_1 = arith.constant 0 : i32
    return %c0_i32, %c0_i32_0 : i32, i32
  }
  func.func @transform_10(%arg0: i32) -> (i32, i32, i32) {
    %c0_i32 = arith.constant 0 : i32
    %c0_i32_0 = arith.constant 0 : i32
    %c0_i32_1 = arith.constant 0 : i32
    return %arg0, %c0_i32, %c0_i32_0 : i32, i32, i32
  }
  func.func @transform_11(%arg0: i32) -> (i32, i32, i32) {
    %c0_i32 = arith.constant 0 : i32
    %0 = arith.subi %c0_i32, %arg0 : i32
    %c0_i32_0 = arith.constant 0 : i32
    %c0_i32_1 = arith.constant 0 : i32
    %c0_i32_2 = arith.constant 0 : i32
    return %0, %c0_i32_0, %c0_i32_1 : i32, i32, i32
  }
  func.func @transform_12(%arg0: i32) -> (i32, i32) {
    %c0_i32 = arith.constant 0 : i32
    %c0_i32_0 = arith.constant 0 : i32
    %c0_i32_1 = arith.constant 0 : i32
    return %c0_i32, %c0_i32_0 : i32, i32
  }
  func.func @transform_13(%arg0: i32) -> (i32, i32) {
    %c0_i32 = arith.constant 0 : i32
    %c0_i32_0 = arith.constant 0 : i32
    %c0_i32_1 = arith.constant 0 : i32
    return %c0_i32, %c0_i32_0 : i32, i32
  }
  func.func @transform_14(%arg0: i32) -> (i32, i32) {
    %c0_i32 = arith.constant 0 : i32
    %c0_i32_0 = arith.constant 0 : i32
    %c0_i32_1 = arith.constant 0 : i32
    return %c0_i32, %c0_i32_0 : i32, i32
  }
  func.func @transform_15(%arg0: i32) -> (i32, i32) {
    %c0_i32 = arith.constant 0 : i32
    %c0_i32_0 = arith.constant 0 : i32
    %c0_i32_1 = arith.constant 0 : i32
    return %c0_i32, %c0_i32_0 : i32, i32
  }
}

</mosaic_0001>

<llo_original>
// kernel: tpu_custom_call.1
$region0: #{tpu_custom_call.1}
  #allocation0 [shape = 'u32[]', space=smem, size = 0x4, offset = 0x4, fixed_abs, tag = 'smem constant byte address 0x4 - core index']
  #allocation1 [shape = 'u32[72,128]{1,0:T(1,128)}', space=vmem, size = 0x9000, scoped, tag = 'internal scratch']
  #allocation2 [shape = 'f32[8,32]{1,0:T(8,128)}', space=vmem, size = 0x1000, scoped, tag = 'scratch operand']
  #allocation3 [shape = 'f32[8,32]{1,0:T(8,128)}', space=vmem, size = 0x1000, scoped, tag = 'scratch operand']
  #allocation4 [shape = 'f32[8,32]{1,0:T(8,128)}', space=vmem, size = 0x1000, scoped, tag = 'scratch operand']
  #allocation5 [shape = 'f32[8,32]{1,0:T(8,128)}', space=vmem, size = 0x1000, scoped, tag = 'scratch operand']
  #allocation6 [shape = 'f32[10,8,128]{2,1,0:T(8,128)}', space=vmem, size = 0xa000, scoped, tag = 'scratch operand']
  #allocation7 [shape = 'f32[10,8,128]{2,1,0:T(8,128)}', space=vmem, size = 0xa000, scoped, tag = 'scratch operand']
  #allocation8 [shape = 'f32[10,8,32]{2,1,0:T(8,128)}', space=vmem, size = 0xa000, scoped, tag = 'scratch operand']
  #allocation9 [shape = 'f32[10,8,32]{2,1,0:T(8,128)}', space=vmem, size = 0xa000, scoped, tag = 'scratch operand']
  %s0 = inlined_call_operand.vmem [shape: f32[10,8,16], index: 0, kind: input, shape index: {}]
  %s1 = inlined_call_operand.vmem [shape: f32[10,8,16], index: 1, kind: input, shape index: {}]
  %s2 = inlined_call_operand.vmem [shape: f32[10,8,1], index: 2, kind: input, shape index: {}]
  %s3 = inlined_call_operand.vmem [shape: f32[10,8,1], index: 3, kind: input, shape index: {}]
  %s4 = inlined_call_operand.hbm [shape: f32[16,128], index: 4, kind: input, shape index: {}]
  %s5 = inlined_call_operand.hbm [shape: f32[16,128], index: 5, kind: input, shape index: {}]
  %s6 = inlined_call_operand.hbm [shape: f32[32,128], index: 6, kind: input, shape index: {}]
  %s7 = inlined_call_operand.hbm [shape: f32[32,128], index: 7, kind: input, shape index: {}]
  %s8 = inlined_call_operand.vmem [shape: f32[1,128], index: 8, kind: input, shape index: {}]
  %s9 = inlined_call_operand.vmem [shape: f32[1,128], index: 9, kind: input, shape index: {}]
  %s10 = inlined_call_operand.hbm [shape: f32[10,8,32], index: 10, kind: output, shape index: {0}]
  %s11 = inlined_call_operand.hbm [shape: f32[10,8,32], index: 11, kind: output, shape index: {1}]
  %s12 = inlined_call_operand.hbm [shape: f32[8,32], index: 12, kind: output, shape index: {2}]
  %s13 = inlined_call_operand.hbm [shape: f32[8,32], index: 13, kind: output, shape index: {3}]
  %s14 = inlined_call_operand.hbm [shape: f32[8,32], index: 14, kind: output, shape index: {4}]
  %s15 = inlined_call_operand.hbm [shape: f32[8,32], index: 15, kind: output, shape index: {5}]
  %16 = xla_tuple %s10, %s11, %s12, %s13, %s14, %s15
  %s17 = sld [smem:[#allocation0]]
  $region114: #{tpu_custom_call.1} parent=0
    _
  %s19 = ssub.s32 1, %s17
  %s20 = scalar_select 0, %s19, %s17
  $region1: #{tpu_custom_call.1} parent=0
    #allocation10 [shape = 'u8[8192]{0}', space=vmem, size = 0x2000, scoped, tag = 'input window, operand 4, single buffered']
    #allocation11 [shape = 's32[1]{0}', space=sflag, size = 0x4, scoped, tag = 'scoped memory for tpu_custom_call.1']
    #allocation12 [shape = 's32[1]{0}', space=sflag, size = 0x4, scoped, tag = 'scoped memory for tpu_custom_call.1']
    #allocation13 [shape = 'u8[8192]{0}', space=vmem, size = 0x2000, scoped, tag = 'input window, operand 5, single buffered']
    #allocation14 [shape = 's32[1]{0}', space=sflag, size = 0x4, scoped, tag = 'scoped memory for tpu_custom_call.1']
    #allocation15 [shape = 'u8[16384]{0}', space=vmem, size = 0x4000, scoped, tag = 'input window, operand 6, single buffered']
    #allocation16 [shape = 'u8[16384]{0}', space=vmem, size = 0x4000, scoped, tag = 'input window, operand 7, single buffered']
    #allocation17 [shape = 's32[1]{0}', space=sflag, size = 0x4, scoped, tag = 'scoped memory for tpu_custom_call.1']
    #allocation18 [shape = 'u8[40960]{0}', space=vmem, size = 0xa000, scoped, tag = 'output window, operand 0, single buffered']
    #allocation19 [shape = 'u8[40960]{0}', space=vmem, size = 0xa000, scoped, tag = 'output window, operand 1, single buffered']
    #allocation20 [shape = 's32[1]{0}', space=sflag, size = 0x4, scoped, tag = 'scoped memory for tpu_custom_call.1']
    #allocation21 [shape = 'u8[4096]{0}', space=vmem, size = 0x1000, scoped, tag = 'output window, operand 2, single buffered']
    #allocation22 [shape = 'u8[4096]{0}', space=vmem, size = 0x1000, scoped, tag = 'output window, operand 3, single buffered']
    #allocation23 [shape = 's32[1]{0}', space=sflag, size = 0x4, scoped, tag = 'scoped memory for tpu_custom_call.1']
    #allocation24 [shape = 'u8[4096]{0}', space=vmem, size = 0x1000, scoped, tag = 'output window, operand 4, single buffered']
    #allocation25 [shape = 'u8[4096]{0}', space=vmem, size = 0x1000, scoped, tag = 'output window, operand 5, single buffered']
    #allocation26 [shape = 's32[1]{0}', space=sflag, size = 0x4, scoped, tag = 'scoped memory for tpu_custom_call.1']
    %21 = vsyncpa [#allocation11], 0
    %22 = vsyncpa [#allocation14], 0
    %23 = vsyncpa [#allocation17], 0
    %24 = vsyncpa [#allocation12], 0
    %25 = vsyncpa [#allocation20], 0
    %26 = vsyncpa [#allocation23], 0
    %27 = vsyncpa [#allocation26], 0
    // Predicated region
    $region2: #{tpu_custom_call.1} parent=1 // pred_check
      _
    $region3: #{tpu_custom_call.1} parent=1 // pred_check_branch
      %29 = sbr.rel (0) target = $region5
    $region4: #{tpu_custom_call.1} parent=1 // pred_region
      _
    $region5: #{tpu_custom_call.1} parent=1 // pred_fallthru
      _
    // Predicated region
    $region6: #{tpu_custom_call.1} parent=1 // pred_check
      _
    $region7: #{tpu_custom_call.1} parent=1 // pred_check_branch
      %31 = sbr.rel (0) target = $region9
    $region8: #{tpu_custom_call.1} parent=1 // pred_region
      %s32 = ssub.s32 0, 0
      %s33 = smul.u32 10, %s32
      %p34 = scmp.lt.s32.totalorder %s33, 9
      %s35 = scalar_select %p34, %s33, 9
      %s36 = smul.addr %s35, 8
      %s37 = scalar_lea.vmem %s1, %s36
      %s38 = ssub.s32 0, 0
      %s39 = smul.u32 10, %s38
    $region9: #{tpu_custom_call.1} parent=1 // pred_fallthru
      _
    // Predicated region
    $region10: #{tpu_custom_call.1} parent=1 // pred_check
      _
    $region11: #{tpu_custom_call.1} parent=1 // pred_check_branch
      %41 = sbr.rel (0) target = $region13
    $region12: #{tpu_custom_call.1} parent=1 // pred_region
      _
    $region13: #{tpu_custom_call.1} parent=1 // pred_fallthru
      _
    // Predicated region
    $region14: #{tpu_custom_call.1} parent=1 // pred_check
      _
    $region15: #{tpu_custom_call.1} parent=1 // pred_check_branch
      %43 = sbr.rel (0) target = $region17
    $region16: #{tpu_custom_call.1} parent=1 // pred_region
      %s44 = ssub.s32 0, 0
      %s45 = smul.u32 10, %s44
      %p46 = scmp.lt.s32.totalorder %s45, 9
      %s47 = scalar_select %p46, %s45, 9
      %s48 = smul.addr %s47, 8
      %s49 = scalar_lea.vmem %s3, %s48
      %s50 = ssub.s32 0, 0
      %s51 = smul.u32 10, %s50
    $region17: #{tpu_custom_call.1} parent=1 // pred_fallthru
      _
    // Predicated region
    $region18: #{tpu_custom_call.1} parent=1 // pred_check
      _
    $region19: #{tpu_custom_call.1} parent=1 // pred_check_branch
      %53 = sbr.rel (0) target = $region21
    $region20: #{tpu_custom_call.1} parent=1 // pred_region
      %55 = vsyncadd [#allocation11], 0
      %s56 = sshll.u32 %s4, 4
      %s57 = int_to_ptr.hbm [resolvable:$true] %s56
      %s58 = sshll.u32 [#allocation10], 4
      %s59 = int_to_ptr.vmem [resolvable:$true] %s58
      %64 = dma.hbm_to_vmem [thread:$0]  %s57, 256, %s59, [#allocation11], 128, 128, 8
    $region21: #{tpu_custom_call.1} parent=1 // pred_fallthru
      _
    // Predicated region
    $region22: #{tpu_custom_call.1} parent=1 // pred_check
      _
    $region23: #{tpu_custom_call.1} parent=1 // pred_check_branch
      %66 = sbr.rel (0) target = $region25
    $region24: #{tpu_custom_call.1} parent=1 // pred_region
      %68 = vsyncadd [#allocation14], 0
      %s69 = sshll.u32 %s5, 4
      %s70 = int_to_ptr.hbm [resolvable:$true] %s69
      %s71 = sshll.u32 [#allocation13], 4
      %s72 = int_to_ptr.vmem [resolvable:$true] %s71
      %77 = dma.hbm_to_vmem [thread:$0]  %s70, 256, %s72, [#allocation14], 128, 128, 8
    $region25: #{tpu_custom_call.1} parent=1 // pred_fallthru
      _
    // Predicated region
    $region26: #{tpu_custom_call.1} parent=1 // pred_check
      _
    $region27: #{tpu_custom_call.1} parent=1 // pred_check_branch
      %79 = sbr.rel (0) target = $region29
    $region28: #{tpu_custom_call.1} parent=1 // pred_region
      %81 = vsyncadd [#allocation14], 0
      %s82 = sshll.u32 %s6, 4
      %s83 = int_to_ptr.hbm [resolvable:$true] %s82
      %s84 = sshll.u32 [#allocation15], 4
      %s85 = int_to_ptr.vmem [resolvable:$true] %s84
      %90 = dma.hbm_to_vmem [thread:$0]  %s83, 512, %s85, [#allocation14], 128, 128, 8
    $region29: #{tpu_custom_call.1} parent=1 // pred_fallthru
      _
    // Predicated region
    $region30: #{tpu_custom_call.1} parent=1 // pred_check
      _
    $region31: #{tpu_custom_call.1} parent=1 // pred_check_branch
      %92 = sbr.rel (0) target = $region33
    $region32: #{tpu_custom_call.1} parent=1 // pred_region
      %94 = vsyncadd [#allocation17], 0
      %s95 = sshll.u32 %s7, 4
      %s96 = int_to_ptr.hbm [resolvable:$true] %s95
      %s97 = sshll.u32 [#allocation16], 4
      %s98 = int_to_ptr.vmem [resolvable:$true] %s97
      %103 = dma.hbm_to_vmem [thread:$0]  %s96, 512, %s98, [#allocation17], 128, 128, 8
    $region33: #{tpu_custom_call.1} parent=1 // pred_fallthru
      _
    // Predicated region
    $region34: #{tpu_custom_call.1} parent=1 // pred_check
      _
    $region35: #{tpu_custom_call.1} parent=1 // pred_check_branch
      %105 = sbr.rel (0) target = $region37
    $region36: #{tpu_custom_call.1} parent=1 // pred_region
      _
    $region37: #{tpu_custom_call.1} parent=1 // pred_fallthru
      _
    // Predicated region
    $region38: #{tpu_custom_call.1} parent=1 // pred_check
      _
    $region39: #{tpu_custom_call.1} parent=1 // pred_check_branch
      %107 = sbr.rel (0) target = $region41
    $region40: #{tpu_custom_call.1} parent=1 // pred_region
      _
    $region41: #{tpu_custom_call.1} parent=1 // pred_fallthru
      _
    // Predicated region
    $region42: #{tpu_custom_call.1} parent=1 // pred_check
      _
    $region43: #{tpu_custom_call.1} parent=1 // pred_check_branch
      %109 = sbr.rel (0) target = $region45
    $region44: #{tpu_custom_call.1} parent=1 // pred_region
      %111 = dma.done [#allocation11], 256
    $region45: #{tpu_custom_call.1} parent=1 // pred_fallthru
      _
    // Predicated region
    $region46: #{tpu_custom_call.1} parent=1 // pred_check
      _
    $region47: #{tpu_custom_call.1} parent=1 // pred_check_branch
      %113 = sbr.rel (0) target = $region49
    $region48: #{tpu_custom_call.1} parent=1 // pred_region
      %115 = dma.done [#allocation14], 256
    $region49: #{tpu_custom_call.1} parent=1 // pred_fallthru
      _
    // Predicated region
    $region50: #{tpu_custom_call.1} parent=1 // pred_check
      _
    $region51: #{tpu_custom_call.1} parent=1 // pred_check_branch
      %117 = sbr.rel (0) target = $region53
    $region52: #{tpu_custom_call.1} parent=1 // pred_region
      %119 = dma.done [#allocation14], 512
    $region53: #{tpu_custom_call.1} parent=1 // pred_fallthru
      _
    // Predicated region
    $region54: #{tpu_custom_call.1} parent=1 // pred_check
      _
    $region55: #{tpu_custom_call.1} parent=1 // pred_check_branch
      %121 = sbr.rel (0) target = $region57
    $region56: #{tpu_custom_call.1} parent=1 // pred_region
      %123 = dma.done [#allocation17], 512
    $region57: #{tpu_custom_call.1} parent=1 // pred_fallthru
      _
    %s124 = ssub.s32 0, 0
    %s125 = smul.u32 10, %s124
    %p126 = scmp.lt.s32.totalorder %s125, 9
    %s127 = scalar_select %p126, %s125, 9
    %s128 = smul.addr %s127, 8
    %s129 = scalar_lea.vmem %s1, %s128
    %s130 = ssub.s32 0, 0
    %s131 = smul.u32 10, %s130
    %p132 = scmp.lt.s32.totalorder %s131, 9
    %s133 = scalar_select %p132, %s131, 9
    %s134 = smul.addr %s133, 8
    %s135 = scalar_lea.vmem %s3, %s134
    %s136 = ssub.s32 0, 0
    %s137 = smul.u32 10, %s136
    %p138 = scmp.lt.s32.totalorder %s137, 9
    %s139 = scalar_select %p138, %s137, 9
    %s140 = smul.addr %s139, 8
    %s141 = scalar_lea.vmem %s1, %s140
    %s142 = ssub.s32 0, 0
    %s143 = smul.u32 10, %s142
    %s144 = ssub.s32 0, 0
    %s145 = smul.u32 10, %s144
    %p146 = scmp.lt.s32.totalorder %s145, 9
    %s147 = scalar_select %p146, %s145, 9
    %s148 = smul.addr %s147, 8
    %s149 = scalar_lea.vmem %s3, %s148
    %s150 = ssub.s32 0, 0
    %s151 = smul.u32 10, %s150
    %s152 = ssub.s32 0, 0
    %s153 = smul.u32 10, %s152
    %p154 = scmp.eq.s32.totalorder 0, 0
    // Predicated region
    $region58: #{tpu_custom_call.1} parent=1 // pred_check
      %p155 = pneg %p154
    $region59: #{tpu_custom_call.1} parent=1 // pred_check_branch
      %157 = sbr.rel (%p155) target = $region61
    $region60: #{tpu_custom_call.1} parent=1 // pred_region
      %vm158 = vcmask 261120
      %159 = vst.msk [vmem:[#allocation2] sm:$0xff] %vm158, 0.0
      %160 = vst.msk [vmem:[#allocation4] sm:$0xff] %vm158, 0.0
      %161 = vst.msk [vmem:[#allocation3] sm:$0xff] %vm158, 0.0
      %162 = vst.msk [vmem:[#allocation5] sm:$0xff] %vm158, 0.0
    $region61: #{tpu_custom_call.1} parent=1 // pred_fallthru
      _
    %v163 = vld [vmem:[#allocation15] sm:$0xff]
    %v164 = vld [vmem:[#allocation15 + $0x8] sm:$0xff]
    %v165 = vld [vmem:[#allocation15 + $0x10] sm:$0xff]
    %v166 = vld [vmem:[#allocation15 + $0x18] sm:$0xff]
    %v167 = vld [vmem:[#allocation16] sm:$0xff]
    %v168 = vld [vmem:[#allocation16 + $0x8] sm:$0xff]
    %v169 = vld [vmem:[#allocation16 + $0x10] sm:$0xff]
    %v170 = vld [vmem:[#allocation16 + $0x18] sm:$0xff]
    %v171 = vld [vmem:[%s0] sm:$0xff]
    %v172 = vld [vmem:[%s0 + $0x8] sm:$0xff]
    %v173 = vld [vmem:[%s0 + $0x10] sm:$0xff]
    %v174 = vld [vmem:[%s0 + $0x18] sm:$0xff]
    %v175 = vld [vmem:[%s0 + $0x20] sm:$0xff]
    %v176 = vld [vmem:[%s0 + $0x28] sm:$0xff]
    %v177 = vld [vmem:[%s0 + $0x30] sm:$0xff]
    %v178 = vld [vmem:[%s0 + $0x38] sm:$0xff]
    %v179 = vld [vmem:[%s0 + $0x40] sm:$0xff]
    %v180 = vld [vmem:[%s0 + $0x48] sm:$0xff]
    %v181 = vld [vmem:[#allocation10] sm:$0xff]
    %v182 = vld [vmem:[#allocation10 + $0x8] sm:$0xff]
    %v183 = vld [vmem:[%s8] sm:$0x1]
    %v185 = vperm.slane %v183, 0
    %vm187 = vcmask 130048
    %v189 = vsel %vm187, %v171, 0
    %v192 = vsel %vm187, %v172, 0
    %v195 = vsel %vm187, %v173, 0
    %v198 = vsel %vm187, %v174, 0
    %v201 = vsel %vm187, %v175, 0
    %v204 = vsel %vm187, %v176, 0
    %v207 = vsel %vm187, %v177, 0
    %v210 = vsel %vm187, %v178, 0
    %v213 = vsel %vm187, %v179, 0
    %v216 = vsel %vm187, %v180, 0
    %218 = vmatpush.msra.mxu0 0.0
    %219 = vmatpush.msra.mxu0 0.0
    %220 = vmatpush.msra.mxu0 0.0
    %221 = vmatpush.msra.mxu0 0.0
    %222 = vmatpush.msra.mxu0 0.0
    %223 = vmatpush.msra.mxu0 0.0
    %224 = vmatpush.msra.mxu0 0.0
    %225 = vmatpush.msra.mxu0 0.0
    %226 = vmatpush.msra.mxu0 0.0
    %227 = vmatpush.msra.mxu0 0.0
    %228 = vmatpush.msra.mxu0 0.0
    %229 = vmatpush.msra.mxu0 0.0
    %230 = vmatpush.msra.mxu0 0.0
    %231 = vmatpush.msra.mxu0 0.0
    %232 = vmatpush.msra.mxu0 %v182
    %233 = vmatpush.msra.mxu0 %v181
    %234 = vmatmul.f32.gmra.mxu0 %v189
    %v235 = vpop.f32.mrf.mxu0
    %v236 = vadd.f32 %v185, %v235
    %237 = vmatmul.f32.gmra.mxu0 %v192
    %v238 = vpop.f32.mrf.mxu0
    %v239 = vadd.f32 %v185, %v238
    %240 = vmatmul.f32.gmra.mxu0 %v195
    %v241 = vpop.f32.mrf.mxu0
    %v242 = vadd.f32 %v185, %v241
    %243 = vmatmul.f32.gmra.mxu0 %v198
    %v244 = vpop.f32.mrf.mxu0
    %v245 = vadd.f32 %v185, %v244
    %246 = vmatmul.f32.gmra.mxu0 %v201
    %v247 = vpop.f32.mrf.mxu0
    %v248 = vadd.f32 %v185, %v247
    %249 = vmatmul.f32.gmra.mxu0 %v204
    %v250 = vpop.f32.mrf.mxu0
    %v251 = vadd.f32 %v185, %v250
    %252 = vmatmul.f32.gmra.mxu0 %v207
    %v253 = vpop.f32.mrf.mxu0
    %v254 = vadd.f32 %v185, %v253
    %255 = vmatmul.f32.gmra.mxu0 %v210
    %v256 = vpop.f32.mrf.mxu0
    %v257 = vadd.f32 %v185, %v256
    %258 = vmatmul.f32.gmra.mxu0 %v213
    %v259 = vpop.f32.mrf.mxu0
    %v260 = vadd.f32 %v185, %v259
    %261 = vmatmul.f32.gmra.mxu0 %v216
    %v262 = vpop.f32.mrf.mxu0
    %v263 = vadd.f32 %v185, %v262
    %264 = vdwg.mxu0
    %265 = vst [vmem:[#allocation6] sm:$0xff] %v236
    %266 = vst [vmem:[#allocation6 + $0x8] sm:$0xff] %v239
    %267 = vst [vmem:[#allocation6 + $0x10] sm:$0xff] %v242
    %268 = vst [vmem:[#allocation6 + $0x18] sm:$0xff] %v245
    %269 = vst [vmem:[#allocation6 + $0x20] sm:$0xff] %v248
    %270 = vst [vmem:[#allocation6 + $0x28] sm:$0xff] %v251
    %271 = vst [vmem:[#allocation6 + $0x30] sm:$0xff] %v254
    %272 = vst [vmem:[#allocation6 + $0x38] sm:$0xff] %v257
    %273 = vst [vmem:[#allocation6 + $0x40] sm:$0xff] %v260
    %274 = vst [vmem:[#allocation6 + $0x48] sm:$0xff] %v263
    %v275 = vld [vmem:[%s2] sm:$0xff]
    %v276 = vld [vmem:[%s2 + $0x8] sm:$0xff]
    %v277 = vld [vmem:[%s2 + $0x10] sm:$0xff]
    %v278 = vld [vmem:[%s2 + $0x18] sm:$0xff]
    %v279 = vld [vmem:[%s2 + $0x20] sm:$0xff]
    %v280 = vld [vmem:[%s2 + $0x28] sm:$0xff]
    %v281 = vld [vmem:[%s2 + $0x30] sm:$0xff]
    %v282 = vld [vmem:[%s2 + $0x38] sm:$0xff]
    %v283 = vld [vmem:[%s2 + $0x40] sm:$0xff]
    %v284 = vld [vmem:[%s2 + $0x48] sm:$0xff]
    %286 = vset.pattern.permute.xlu0 0
    %287 = vperm.xlu0 %286, %v275
    %v288 = vpop.permute.xlu0 %287
    %291 = vset.pattern.permute.xlu0 0
    %292 = vperm.xlu0 %291, %v276
    %v293 = vpop.permute.xlu0 %292
    %296 = vset.pattern.permute.xlu0 0
    %297 = vperm.xlu0 %296, %v277
    %v298 = vpop.permute.xlu0 %297
    %301 = vset.pattern.permute.xlu0 0
    %302 = vperm.xlu0 %301, %v278
    %v303 = vpop.permute.xlu0 %302
    %306 = vset.pattern.permute.xlu0 0
    %307 = vperm.xlu0 %306, %v279
    %v308 = vpop.permute.xlu0 %307
    %311 = vset.pattern.permute.xlu0 0
    %312 = vperm.xlu0 %311, %v280
    %v313 = vpop.permute.xlu0 %312
    %316 = vset.pattern.permute.xlu0 0
    %317 = vperm.xlu0 %316, %v281
    %v318 = vpop.permute.xlu0 %317
    %321 = vset.pattern.permute.xlu0 0
    %322 = vperm.xlu0 %321, %v282
    %v323 = vpop.permute.xlu0 %322
    %326 = vset.pattern.permute.xlu0 0
    %327 = vperm.xlu0 %326, %v283
    %v328 = vpop.permute.xlu0 %327
    %331 = vset.pattern.permute.xlu0 0
    %332 = vperm.xlu0 %331, %v284
    %v333 = vpop.permute.xlu0 %332
    %vm335 = vcmask 261120
    %336 = vst.msk [vmem:[#allocation8] sm:$0xff] %vm335, %v288
    %337 = vst.msk [vmem:[#allocation8 + $0x8] sm:$0xff] %vm335, %v293
    %338 = vst.msk [vmem:[#allocation8 + $0x10] sm:$0xff] %vm335, %v298
    %339 = vst.msk [vmem:[#allocation8 + $0x18] sm:$0xff] %vm335, %v303
    %340 = vst.msk [vmem:[#allocation8 + $0x20] sm:$0xff] %vm335, %v308
    %341 = vst.msk [vmem:[#allocation8 + $0x28] sm:$0xff] %vm335, %v313
    %342 = vst.msk [vmem:[#allocation8 + $0x30] sm:$0xff] %vm335, %v318
    %343 = vst.msk [vmem:[#allocation8 + $0x38] sm:$0xff] %vm335, %v323
    %344 = vst.msk [vmem:[#allocation8 + $0x40] sm:$0xff] %vm335, %v328
    %345 = vst.msk [vmem:[#allocation8 + $0x48] sm:$0xff] %vm335, %v333
    %v346 = vld [vmem:[%s141] sm:$0xff]
    %v347 = vld [vmem:[%s141 + $0x8] sm:$0xff]
    %v348 = vld [vmem:[%s141 + $0x10] sm:$0xff]
    %v349 = vld [vmem:[%s141 + $0x18] sm:$0xff]
    %v350 = vld [vmem:[%s141 + $0x20] sm:$0xff]
    %v351 = vld [vmem:[%s141 + $0x28] sm:$0xff]
    %v352 = vld [vmem:[%s141 + $0x30] sm:$0xff]
    %v353 = vld [vmem:[%s141 + $0x38] sm:$0xff]
    %v354 = vld [vmem:[%s141 + $0x40] sm:$0xff]
    %v355 = vld [vmem:[%s141 + $0x48] sm:$0xff]
    %v356 = vld [vmem:[#allocation13] sm:$0xff]
    %v357 = vld [vmem:[#allocation13 + $0x8] sm:$0xff]
    %v358 = vld [vmem:[%s9] sm:$0x1]
    %v360 = vperm.slane %v358, 0
    %v363 = vsel %vm187, %v346, 0
    %v366 = vsel %vm187, %v347, 0
    %v369 = vsel %vm187, %v348, 0
    %v372 = vsel %vm187, %v349, 0
    %v375 = vsel %vm187, %v350, 0
    %v378 = vsel %vm187, %v351, 0
    %v381 = vsel %vm187, %v352, 0
    %v384 = vsel %vm187, %v353, 0
    %v387 = vsel %vm187, %v354, 0
    %v390 = vsel %vm187, %v355, 0
    %392 = vmatpush.msra.mxu0 0.0
    %393 = vmatpush.msra.mxu0 0.0
    %394 = vmatpush.msra.mxu0 0.0
    %395 = vmatpush.msra.mxu0 0.0
    %396 = vmatpush.msra.mxu0 0.0
    %397 = vmatpush.msra.mxu0 0.0
    %398 = vmatpush.msra.mxu0 0.0
    %399 = vmatpush.msra.mxu0 0.0
    %400 = vmatpush.msra.mxu0 0.0
    %401 = vmatpush.msra.mxu0 0.0
    %402 = vmatpush.msra.mxu0 0.0
    %403 = vmatpush.msra.mxu0 0.0
    %404 = vmatpush.msra.mxu0 0.0
    %405 = vmatpush.msra.mxu0 0.0
    %406 = vmatpush.msra.mxu0 %v357
    %407 = vmatpush.msra.mxu0 %v356
    %408 = vmatmul.f32.gmra.mxu0 %v363
    %v409 = vpop.f32.mrf.mxu0
    %v410 = vadd.f32 %v360, %v409
    %411 = vmatmul.f32.gmra.mxu0 %v366
    %v412 = vpop.f32.mrf.mxu0
    %v413 = vadd.f32 %v360, %v412
    %414 = vmatmul.f32.gmra.mxu0 %v369
    %v415 = vpop.f32.mrf.mxu0
    %v416 = vadd.f32 %v360, %v415
    %417 = vmatmul.f32.gmra.mxu0 %v372
    %v418 = vpop.f32.mrf.mxu0
    %v419 = vadd.f32 %v360, %v418
    %420 = vmatmul.f32.gmra.mxu0 %v375
    %v421 = vpop.f32.mrf.mxu0
    %v422 = vadd.f32 %v360, %v421
    %423 = vmatmul.f32.gmra.mxu0 %v378
    %v424 = vpop.f32.mrf.mxu0
    %v425 = vadd.f32 %v360, %v424
    %426 = vmatmul.f32.gmra.mxu0 %v381
    %v427 = vpop.f32.mrf.mxu0
    %v428 = vadd.f32 %v360, %v427
    %429 = vmatmul.f32.gmra.mxu0 %v384
    %v430 = vpop.f32.mrf.mxu0
    %v431 = vadd.f32 %v360, %v430
    %432 = vmatmul.f32.gmra.mxu0 %v387
    %v433 = vpop.f32.mrf.mxu0
    %v434 = vadd.f32 %v360, %v433
    %435 = vmatmul.f32.gmra.mxu0 %v390
    %v436 = vpop.f32.mrf.mxu0
    %v437 = vadd.f32 %v360, %v436
    %438 = vdwg.mxu0
    %439 = vst [vmem:[#allocation7] sm:$0xff] %v410
    %440 = vst [vmem:[#allocation7 + $0x8] sm:$0xff] %v413
    %441 = vst [vmem:[#allocation7 + $0x10] sm:$0xff] %v416
    %442 = vst [vmem:[#allocation7 + $0x18] sm:$0xff] %v419
    %443 = vst [vmem:[#allocation7 + $0x20] sm:$0xff] %v422
    %444 = vst [vmem:[#allocation7 + $0x28] sm:$0xff] %v425
    %445 = vst [vmem:[#allocation7 + $0x30] sm:$0xff] %v428
    %446 = vst [vmem:[#allocation7 + $0x38] sm:$0xff] %v431
    %447 = vst [vmem:[#allocation7 + $0x40] sm:$0xff] %v434
    %448 = vst [vmem:[#allocation7 + $0x48] sm:$0xff] %v437
    %v449 = vld [vmem:[%s149] sm:$0xff]
    %v450 = vld [vmem:[%s149 + $0x8] sm:$0xff]
    %v451 = vld [vmem:[%s149 + $0x10] sm:$0xff]
    %v452 = vld [vmem:[%s149 + $0x18] sm:$0xff]
    %v453 = vld [vmem:[%s149 + $0x20] sm:$0xff]
    %v454 = vld [vmem:[%s149 + $0x28] sm:$0xff]
    %v455 = vld [vmem:[%s149 + $0x30] sm:$0xff]
    %v456 = vld [vmem:[%s149 + $0x38] sm:$0xff]
    %v457 = vld [vmem:[%s149 + $0x40] sm:$0xff]
    %v458 = vld [vmem:[%s149 + $0x48] sm:$0xff]
    %460 = vset.pattern.permute.xlu0 0
    %461 = vperm.xlu0 %460, %v449
    %v462 = vpop.permute.xlu0 %461
    %465 = vset.pattern.permute.xlu0 0
    %466 = vperm.xlu0 %465, %v450
    %v467 = vpop.permute.xlu0 %466
    %470 = vset.pattern.permute.xlu0 0
    %471 = vperm.xlu0 %470, %v451
    %v472 = vpop.permute.xlu0 %471
    %475 = vset.pattern.permute.xlu0 0
    %476 = vperm.xlu0 %475, %v452
    %v477 = vpop.permute.xlu0 %476
    %480 = vset.pattern.permute.xlu0 0
    %481 = vperm.xlu0 %480, %v453
    %v482 = vpop.permute.xlu0 %481
    %485 = vset.pattern.permute.xlu0 0
    %486 = vperm.xlu0 %485, %v454
    %v487 = vpop.permute.xlu0 %486
    %490 = vset.pattern.permute.xlu0 0
    %491 = vperm.xlu0 %490, %v455
    %v492 = vpop.permute.xlu0 %491
    %495 = vset.pattern.permute.xlu0 0
    %496 = vperm.xlu0 %495, %v456
    %v497 = vpop.permute.xlu0 %496
    %500 = vset.pattern.permute.xlu0 0
    %501 = vperm.xlu0 %500, %v457
    %v502 = vpop.permute.xlu0 %501
    %505 = vset.pattern.permute.xlu0 0
    %506 = vperm.xlu0 %505, %v458
    %v507 = vpop.permute.xlu0 %506
    %509 = vst.msk [vmem:[#allocation9] sm:$0xff] %vm335, %v462
    %510 = vst.msk [vmem:[#allocation9 + $0x8] sm:$0xff] %vm335, %v467
    %511 = vst.msk [vmem:[#allocation9 + $0x10] sm:$0xff] %vm335, %v472
    %512 = vst.msk [vmem:[#allocation9 + $0x18] sm:$0xff] %vm335, %v477
    %513 = vst.msk [vmem:[#allocation9 + $0x20] sm:$0xff] %vm335, %v482
    %514 = vst.msk [vmem:[#allocation9 + $0x28] sm:$0xff] %vm335, %v487
    %515 = vst.msk [vmem:[#allocation9 + $0x30] sm:$0xff] %vm335, %v492
    %516 = vst.msk [vmem:[#allocation9 + $0x38] sm:$0xff] %vm335, %v497
    %517 = vst.msk [vmem:[#allocation9 + $0x40] sm:$0xff] %vm335, %v502
    %518 = vst.msk [vmem:[#allocation9 + $0x48] sm:$0xff] %vm335, %v507
    %v519 = vld [vmem:[#allocation2] sm:$0xff]
    %v520 = vld [vmem:[#allocation4] sm:$0xff]
    %v521 = vld [vmem:[#allocation3] sm:$0xff]
    %v522 = vld [vmem:[#allocation5] sm:$0xff]
    %v523 = vld [vmem:[#allocation6] sm:$0xff]
    %v524 = vld [vmem:[#allocation8] sm:$0xff]
    %v526 = vsel %vm335, %v519, 0
    %528 = vmatpush.msra.mxu0 0.0
    %529 = vmatpush.msra.mxu0 0.0
    %530 = vmatpush.msra.mxu0 0.0
    %531 = vmatpush.msra.mxu0 0.0
    %532 = vmatpush.msra.mxu0 0.0
    %533 = vmatpush.msra.mxu0 0.0
    %534 = vmatpush.msra.mxu0 0.0
    %535 = vmatpush.msra.mxu0 0.0
    %536 = vmatpush.msra.mxu0 0.0
    %537 = vmatpush.msra.mxu0 0.0
    %538 = vmatpush.msra.mxu0 0.0
    %539 = vmatpush.msra.mxu0 0.0
    %540 = vmatpush.msra.mxu0 %v166
    %541 = vmatpush.msra.mxu0 %v165
    %542 = vmatpush.msra.mxu0 %v164
    %543 = vmatpush.msra.mxu0 %v163
    %544 = vmatmul.f32.gmra.mxu0 %v526
    %v545 = vpop.f32.mrf.mxu0
    %v546 = vadd.f32 0.0, %v545
    %547 = vdwg.mxu0
    %v548 = vadd.f32 %v523, %v546
    %v549 = vmul.f32 %v548, 0.5
    %v550 = vtanh.pop %v549
    %v551 = vmul.f32 %v550, 0.5
    %v552 = vadd.f32 %v551, 0.5
    %v553 = vtanh.pop %v548
    %555 = vrot.lane.b32.xlu0 %v520, 32
    %v556 = vpop.permute.xlu0 %555
    %v558 = vmul.f32 %v552, %v556
    %560 = vrot.lane.b32.xlu0 %v553, 64
    %v561 = vpop.permute.xlu0 %560
    %v563 = vmul.f32 %v552, %v561
    %565 = vrot.lane.b32.xlu0 %v563, 32
    %v566 = vpop.permute.xlu0 %565
    %v568 = vadd.f32 %v558, %v566
    %v569 = vtanh.pop %v568
    %571 = vrot.lane.b32.xlu0 %v569, 64
    %v572 = vpop.permute.xlu0 %571
    %v574 = vmul.f32 %v552, %v572
    %v575 = vsub.f32 %v568, %v556
    %577 = vrot.lane.b32.xlu0 %v575, 96
    %v578 = vpop.permute.xlu0 %577
    %v580 = vmul.f32 %v524, %v578
    %v581 = vadd.f32 %v520, %v580
    %582 = vrot.lane.b32.xlu0 %v519, 96
    %v583 = vpop.permute.xlu0 %582
    %v585 = vsub.f32 %v574, %v583
    %587 = vrot.lane.b32.xlu0 %v585, 32
    %v588 = vpop.permute.xlu0 %587
    %v590 = vmul.f32 %v524, %v588
    %v591 = vadd.f32 %v519, %v590
    %593 = vrot.lane.b32.xlu0 %v574, 32
    %v594 = vpop.permute.xlu0 %593
    %v596 = vmul.f32 %v524, %v594
    %597 = vst.msk [vmem:[#allocation18] sm:$0xff] %vm335, %v596
    %s598 = scalar_lea.vmem [#allocation7], 72
    %v599 = vld [vmem:[%s598] sm:$0xff]
    %s600 = scalar_lea.vmem [#allocation9], 72
    %v601 = vld [vmem:[%s600] sm:$0xff]
    %v603 = vsel %vm335, %v521, 0
    %605 = vmatpush.msra.mxu0 0.0
    %606 = vmatpush.msra.mxu0 0.0
    %607 = vmatpush.msra.mxu0 0.0
    %608 = vmatpush.msra.mxu0 0.0
    %609 = vmatpush.msra.mxu0 0.0
    %610 = vmatpush.msra.mxu0 0.0
    %611 = vmatpush.msra.mxu0 0.0
    %612 = vmatpush.msra.mxu0 0.0
    %613 = vmatpush.msra.mxu0 0.0
    %614 = vmatpush.msra.mxu0 0.0
    %615 = vmatpush.msra.mxu0 0.0
    %616 = vmatpush.msra.mxu0 0.0
    %617 = vmatpush.msra.mxu0 %v170
    %618 = vmatpush.msra.mxu0 %v169
    %619 = vmatpush.msra.mxu0 %v168
    %620 = vmatpush.msra.mxu0 %v167
    %621 = vmatmul.f32.gmra.mxu0 %v603
    %v622 = vpop.f32.mrf.mxu0
    %v623 = vadd.f32 0.0, %v622
    %624 = vdwg.mxu0
    %v625 = vadd.f32 %v599, %v623
    %v626 = vmul.f32 %v625, 0.5
    %v627 = vtanh.pop %v626
    %v628 = vmul.f32 %v627, 0.5
    %v629 = vadd.f32 %v628, 0.5
    %v630 = vtanh.pop %v625
    %632 = vrot.lane.b32.xlu0 %v522, 32
    %v633 = vpop.permute.xlu0 %632
    %v635 = vmul.f32 %v629, %v633
    %637 = vrot.lane.b32.xlu0 %v630, 64
    %v638 = vpop.permute.xlu0 %637
    %v640 = vmul.f32 %v629, %v638
    %642 = vrot.lane.b32.xlu0 %v640, 32
    %v643 = vpop.permute.xlu0 %642
    %v645 = vadd.f32 %v635, %v643
    %v646 = vtanh.pop %v645
    %648 = vrot.lane.b32.xlu0 %v646, 64
    %v649 = vpop.permute.xlu0 %648
    %v651 = vmul.f32 %v629, %v649
    %v652 = vsub.f32 %v645, %v633
    %654 = vrot.lane.b32.xlu0 %v652, 96
    %v655 = vpop.permute.xlu0 %654
    %v657 = vmul.f32 %v601, %v655
    %v658 = vadd.f32 %v522, %v657
    %659 = vrot.lane.b32.xlu0 %v521, 96
    %v660 = vpop.permute.xlu0 %659
    %v662 = vsub.f32 %v651, %v660
    %664 = vrot.lane.b32.xlu0 %v662, 32
    %v665 = vpop.permute.xlu0 %664
    %v667 = vmul.f32 %v601, %v665
    %v668 = vadd.f32 %v521, %v667
    %670 = vrot.lane.b32.xlu0 %v651, 32
    %v671 = vpop.permute.xlu0 %670
    %v673 = vmul.f32 %v601, %v671
    %s674 = scalar_lea.vmem [#allocation19], 72
    %675 = vst.msk [vmem:[%s674] sm:$0xff] %vm335, %v673
    %s676 = scalar_lea.vmem [#allocation6], 8
    %v677 = vld [vmem:[%s676] sm:$0xff]
    %s678 = scalar_lea.vmem [#allocation8], 8
    %v679 = vld [vmem:[%s678] sm:$0xff]
    %v681 = vsel %vm335, %v591, 0
    %683 = vmatpush.msra.mxu0 0.0
    %684 = vmatpush.msra.mxu0 0.0
    %685 = vmatpush.msra.mxu0 0.0
    %686 = vmatpush.msra.mxu0 0.0
    %687 = vmatpush.msra.mxu0 0.0
    %688 = vmatpush.msra.mxu0 0.0
    %689 = vmatpush.msra.mxu0 0.0
    %690 = vmatpush.msra.mxu0 0.0
    %691 = vmatpush.msra.mxu0 0.0
    %692 = vmatpush.msra.mxu0 0.0
    %693 = vmatpush.msra.mxu0 0.0
    %694 = vmatpush.msra.mxu0 0.0
    %695 = vmatpush.msra.mxu0 %v166
    %696 = vmatpush.msra.mxu0 %v165
    %697 = vmatpush.msra.mxu0 %v164
    %698 = vmatpush.msra.mxu0 %v163
    %699 = vmatmul.f32.gmra.mxu0 %v681
    %v700 = vpop.f32.mrf.mxu0
    %v701 = vadd.f32 0.0, %v700
    %702 = vdwg.mxu0
    %v703 = vadd.f32 %v677, %v701
    %v704 = vmul.f32 %v703, 0.5
    %v705 = vtanh.pop %v704
    %v706 = vmul.f32 %v705, 0.5
    %v707 = vadd.f32 %v706, 0.5
    %v708 = vtanh.pop %v703
    %710 = vrot.lane.b32.xlu0 %v581, 32
    %v711 = vpop.permute.xlu0 %710
    %v713 = vmul.f32 %v707, %v711
    %715 = vrot.lane.b32.xlu0 %v708, 64
    %v716 = vpop.permute.xlu0 %715
    %v718 = vmul.f32 %v707, %v716
    %720 = vrot.lane.b32.xlu0 %v718, 32
    %v721 = vpop.permute.xlu0 %720
    %v723 = vadd.f32 %v713, %v721
    %v724 = vtanh.pop %v723
    %726 = vrot.lane.b32.xlu0 %v724, 64
    %v727 = vpop.permute.xlu0 %726
    %v729 = vmul.f32 %v707, %v727
    %v730 = vsub.f32 %v723, %v711
    %732 = vrot.lane.b32.xlu0 %v730, 96
    %v733 = vpop.permute.xlu0 %732
    %v735 = vmul.f32 %v679, %v733
    %v736 = vadd.f32 %v581, %v735
    %737 = vrot.lane.b32.xlu0 %v591, 96
    %v738 = vpop.permute.xlu0 %737
    %v740 = vsub.f32 %v729, %v738
    %742 = vrot.lane.b32.xlu0 %v740, 32
    %v743 = vpop.permute.xlu0 %742
    %v745 = vmul.f32 %v679, %v743
    %v746 = vadd.f32 %v591, %v745
    %748 = vrot.lane.b32.xlu0 %v729, 32
    %v749 = vpop.permute.xlu0 %748
    %v751 = vmul.f32 %v679, %v749
    %s752 = scalar_lea.vmem [#allocation18], 8
    %753 = vst.msk [vmem:[%s752] sm:$0xff] %vm335, %v751
    %s754 = scalar_lea.vmem [#allocation7], 64
    %v755 = vld [vmem:[%s754] sm:$0xff]
    %s756 = scalar_lea.vmem [#allocation9], 64
    %v757 = vld [vmem:[%s756] sm:$0xff]
    %v759 = vsel %vm335, %v668, 0
    %761 = vmatpush.msra.mxu0 0.0
    %762 = vmatpush.msra.mxu0 0.0
    %763 = vmatpush.msra.mxu0 0.0
    %764 = vmatpush.msra.mxu0 0.0
    %765 = vmatpush.msra.mxu0 0.0
    %766 = vmatpush.msra.mxu0 0.0
    %767 = vmatpush.msra.mxu0 0.0
    %768 = vmatpush.msra.mxu0 0.0
    %769 = vmatpush.msra.mxu0 0.0
    %770 = vmatpush.msra.mxu0 0.0
    %771 = vmatpush.msra.mxu0 0.0
    %772 = vmatpush.msra.mxu0 0.0
    %773 = vmatpush.msra.mxu0 %v170
    %774 = vmatpush.msra.mxu0 %v169
    %775 = vmatpush.msra.mxu0 %v168
    %776 = vmatpush.msra.mxu0 %v167
    %777 = vmatmul.f32.gmra.mxu0 %v759
    %v778 = vpop.f32.mrf.mxu0
    %v779 = vadd.f32 0.0, %v778
    %780 = vdwg.mxu0
    %v781 = vadd.f32 %v755, %v779
    %v782 = vmul.f32 %v781, 0.5
    %v783 = vtanh.pop %v782
    %v784 = vmul.f32 %v783, 0.5
    %v785 = vadd.f32 %v784, 0.5
    %v786 = vtanh.pop %v781
    %788 = vrot.lane.b32.xlu0 %v658, 32
    %v789 = vpop.permute.xlu0 %788
    %v791 = vmul.f32 %v785, %v789
    %793 = vrot.lane.b32.xlu0 %v786, 64
    %v794 = vpop.permute.xlu0 %793
    %v796 = vmul.f32 %v785, %v794
    %798 = vrot.lane.b32.xlu0 %v796, 32
    %v799 = vpop.permute.xlu0 %798
    %v801 = vadd.f32 %v791, %v799
    %v802 = vtanh.pop %v801
    %804 = vrot.lane.b32.xlu0 %v802, 64
    %v805 = vpop.permute.xlu0 %804
    %v807 = vmul.f32 %v785, %v805
    %v808 = vsub.f32 %v801, %v789
    %810 = vrot.lane.b32.xlu0 %v808, 96
    %v811 = vpop.permute.xlu0 %810
    %v813 = vmul.f32 %v757, %v811
    %v814 = vadd.f32 %v658, %v813
    %815 = vrot.lane.b32.xlu0 %v668, 96
    %v816 = vpop.permute.xlu0 %815
    %v818 = vsub.f32 %v807, %v816
    %820 = vrot.lane.b32.xlu0 %v818, 32
    %v821 = vpop.permute.xlu0 %820
    %v823 = vmul.f32 %v757, %v821
    %v824 = vadd.f32 %v668, %v823
    %826 = vrot.lane.b32.xlu0 %v807, 32
    %v827 = vpop.permute.xlu0 %826
    %v829 = vmul.f32 %v757, %v827
    %s830 = scalar_lea.vmem [#allocation19], 64
    %831 = vst.msk [vmem:[%s830] sm:$0xff] %vm335, %v829
    %s832 = scalar_lea.vmem [#allocation6], 16
    %v833 = vld [vmem:[%s832] sm:$0xff]
    %s834 = scalar_lea.vmem [#allocation8], 16
    %v835 = vld [vmem:[%s834] sm:$0xff]
    %v837 = vsel %vm335, %v746, 0
    %839 = vmatpush.msra.mxu0 0.0
    %840 = vmatpush.msra.mxu0 0.0
    %841 = vmatpush.msra.mxu0 0.0
    %842 = vmatpush.msra.mxu0 0.0
    %843 = vmatpush.msra.mxu0 0.0
    %844 = vmatpush.msra.mxu0 0.0
    %845 = vmatpush.msra.mxu0 0.0
    %846 = vmatpush.msra.mxu0 0.0
    %847 = vmatpush.msra.mxu0 0.0
    %848 = vmatpush.msra.mxu0 0.0
    %849 = vmatpush.msra.mxu0 0.0
    %850 = vmatpush.msra.mxu0 0.0
    %851 = vmatpush.msra.mxu0 %v166
    %852 = vmatpush.msra.mxu0 %v165
    %853 = vmatpush.msra.mxu0 %v164
    %854 = vmatpush.msra.mxu0 %v163
    %855 = vmatmul.f32.gmra.mxu0 %v837
    %v856 = vpop.f32.mrf.mxu0
    %v857 = vadd.f32 0.0, %v856
    %858 = vdwg.mxu0
    %v859 = vadd.f32 %v833, %v857
    %v860 = vmul.f32 %v859, 0.5
    %v861 = vtanh.pop %v860
    %v862 = vmul.f32 %v861, 0.5
    %v863 = vadd.f32 %v862, 0.5
    %v864 = vtanh.pop %v859
    %866 = vrot.lane.b32.xlu0 %v736, 32
    %v867 = vpop.permute.xlu0 %866
    %v869 = vmul.f32 %v863, %v867
    %871 = vrot.lane.b32.xlu0 %v864, 64
    %v872 = vpop.permute.xlu0 %871
    %v874 = vmul.f32 %v863, %v872
    %876 = vrot.lane.b32.xlu0 %v874, 32
    %v877 = vpop.permute.xlu0 %876
    %v879 = vadd.f32 %v869, %v877
    %v880 = vtanh.pop %v879
    %882 = vrot.lane.b32.xlu0 %v880, 64
    %v883 = vpop.permute.xlu0 %882
    %v885 = vmul.f32 %v863, %v883
    %v886 = vsub.f32 %v879, %v867
    %888 = vrot.lane.b32.xlu0 %v886, 96
    %v889 = vpop.permute.xlu0 %888
    %v891 = vmul.f32 %v835, %v889
    %v892 = vadd.f32 %v736, %v891
    %893 = vrot.lane.b32.xlu0 %v746, 96
    %v894 = vpop.permute.xlu0 %893
    %v896 = vsub.f32 %v885, %v894
    %898 = vrot.lane.b32.xlu0 %v896, 32
    %v899 = vpop.permute.xlu0 %898
    %v901 = vmul.f32 %v835, %v899
    %v902 = vadd.f32 %v746, %v901
    %904 = vrot.lane.b32.xlu0 %v885, 32
    %v905 = vpop.permute.xlu0 %904
    %v907 = vmul.f32 %v835, %v905
    %s908 = scalar_lea.vmem [#allocation18], 16
    %909 = vst.msk [vmem:[%s908] sm:$0xff] %vm335, %v907
    %s910 = scalar_lea.vmem [#allocation7], 56
    %v911 = vld [vmem:[%s910] sm:$0xff]
    %s912 = scalar_lea.vmem [#allocation9], 56
    %v913 = vld [vmem:[%s912] sm:$0xff]
    %v915 = vsel %vm335, %v824, 0
    %917 = vmatpush.msra.mxu0 0.0
    %918 = vmatpush.msra.mxu0 0.0
    %919 = vmatpush.msra.mxu0 0.0
    %920 = vmatpush.msra.mxu0 0.0
    %921 = vmatpush.msra.mxu0 0.0
    %922 = vmatpush.msra.mxu0 0.0
    %923 = vmatpush.msra.mxu0 0.0
    %924 = vmatpush.msra.mxu0 0.0
    %925 = vmatpush.msra.mxu0 0.0
    %926 = vmatpush.msra.mxu0 0.0
    %927 = vmatpush.msra.mxu0 0.0
    %928 = vmatpush.msra.mxu0 0.0
    %929 = vmatpush.msra.mxu0 %v170
    %930 = vmatpush.msra.mxu0 %v169
    %931 = vmatpush.msra.mxu0 %v168
    %932 = vmatpush.msra.mxu0 %v167
    %933 = vmatmul.f32.gmra.mxu0 %v915
    %v934 = vpop.f32.mrf.mxu0
    %v935 = vadd.f32 0.0, %v934
    %936 = vdwg.mxu0
    %v937 = vadd.f32 %v911, %v935
    %v938 = vmul.f32 %v937, 0.5
    %v939 = vtanh.pop %v938
    %v940 = vmul.f32 %v939, 0.5
    %v941 = vadd.f32 %v940, 0.5
    %v942 = vtanh.pop %v937
    %944 = vrot.lane.b32.xlu0 %v814, 32
    %v945 = vpop.permute.xlu0 %944
    %v947 = vmul.f32 %v941, %v945
    %949 = vrot.lane.b32.xlu0 %v942, 64
    %v950 = vpop.permute.xlu0 %949
    %v952 = vmul.f32 %v941, %v950
    %954 = vrot.lane.b32.xlu0 %v952, 32
    %v955 = vpop.permute.xlu0 %954
    %v957 = vadd.f32 %v947, %v955
    %v958 = vtanh.pop %v957
    %960 = vrot.lane.b32.xlu0 %v958, 64
    %v961 = vpop.permute.xlu0 %960
    %v963 = vmul.f32 %v941, %v961
    %v964 = vsub.f32 %v957, %v945
    %966 = vrot.lane.b32.xlu0 %v964, 96
    %v967 = vpop.permute.xlu0 %966
    %v969 = vmul.f32 %v913, %v967
    %v970 = vadd.f32 %v814, %v969
    %971 = vrot.lane.b32.xlu0 %v824, 96
    %v972 = vpop.permute.xlu0 %971
    %v974 = vsub.f32 %v963, %v972
    %976 = vrot.lane.b32.xlu0 %v974, 32
    %v977 = vpop.permute.xlu0 %976
    %v979 = vmul.f32 %v913, %v977
    %v980 = vadd.f32 %v824, %v979
    %982 = vrot.lane.b32.xlu0 %v963, 32
    %v983 = vpop.permute.xlu0 %982
    %v985 = vmul.f32 %v913, %v983
    %s986 = scalar_lea.vmem [#allocation19], 56
    %987 = vst.msk [vmem:[%s986] sm:$0xff] %vm335, %v985
    %s988 = scalar_lea.vmem [#allocation6], 24
    %v989 = vld [vmem:[%s988] sm:$0xff]
    %s990 = scalar_lea.vmem [#allocation8], 24
    %v991 = vld [vmem:[%s990] sm:$0xff]
    %v993 = vsel %vm335, %v902, 0
    %995 = vmatpush.msra.mxu0 0.0
    %996 = vmatpush.msra.mxu0 0.0
    %997 = vmatpush.msra.mxu0 0.0
    %998 = vmatpush.msra.mxu0 0.0
    %999 = vmatpush.msra.mxu0 0.0
    %1000 = vmatpush.msra.mxu0 0.0
    %1001 = vmatpush.msra.mxu0 0.0
    %1002 = vmatpush.msra.mxu0 0.0
    %1003 = vmatpush.msra.mxu0 0.0
    %1004 = vmatpush.msra.mxu0 0.0
    %1005 = vmatpush.msra.mxu0 0.0
    %1006 = vmatpush.msra.mxu0 0.0
    %1007 = vmatpush.msra.mxu0 %v166
    %1008 = vmatpush.msra.mxu0 %v165
    %1009 = vmatpush.msra.mxu0 %v164
    %1010 = vmatpush.msra.mxu0 %v163
    %1011 = vmatmul.f32.gmra.mxu0 %v993
    %v1012 = vpop.f32.mrf.mxu0
    %v1013 = vadd.f32 0.0, %v1012
    %1014 = vdwg.mxu0
    %v1015 = vadd.f32 %v989, %v1013
    %v1016 = vmul.f32 %v1015, 0.5
    %v1017 = vtanh.pop %v1016
    %v1018 = vmul.f32 %v1017, 0.5
    %v1019 = vadd.f32 %v1018, 0.5
    %v1020 = vtanh.pop %v1015
    %1022 = vrot.lane.b32.xlu0 %v892, 32
    %v1023 = vpop.permute.xlu0 %1022
    %v1025 = vmul.f32 %v1019, %v1023
    %1027 = vrot.lane.b32.xlu0 %v1020, 64
    %v1028 = vpop.permute.xlu0 %1027
    %v1030 = vmul.f32 %v1019, %v1028
    %1032 = vrot.lane.b32.xlu0 %v1030, 32
    %v1033 = vpop.permute.xlu0 %1032
    %v1035 = vadd.f32 %v1025, %v1033
    %v1036 = vtanh.pop %v1035
    %1038 = vrot.lane.b32.xlu0 %v1036, 64
    %v1039 = vpop.permute.xlu0 %1038
    %v1041 = vmul.f32 %v1019, %v1039
    %v1042 = vsub.f32 %v1035, %v1023
    %1044 = vrot.lane.b32.xlu0 %v1042, 96
    %v1045 = vpop.permute.xlu0 %1044
    %v1047 = vmul.f32 %v991, %v1045
    %v1048 = vadd.f32 %v892, %v1047
    %1049 = vrot.lane.b32.xlu0 %v902, 96
    %v1050 = vpop.permute.xlu0 %1049
    %v1052 = vsub.f32 %v1041, %v1050
    %1054 = vrot.lane.b32.xlu0 %v1052, 32
    %v1055 = vpop.permute.xlu0 %1054
    %v1057 = vmul.f32 %v991, %v1055
    %v1058 = vadd.f32 %v902, %v1057
    %1060 = vrot.lane.b32.xlu0 %v1041, 32
    %v1061 = vpop.permute.xlu0 %1060
    %v1063 = vmul.f32 %v991, %v1061
    %s1064 = scalar_lea.vmem [#allocation18], 24
    %1065 = vst.msk [vmem:[%s1064] sm:$0xff] %vm335, %v1063
    %s1066 = scalar_lea.vmem [#allocation7], 48
    %v1067 = vld [vmem:[%s1066] sm:$0xff]
    %s1068 = scalar_lea.vmem [#allocation9], 48
    %v1069 = vld [vmem:[%s1068] sm:$0xff]
    %v1071 = vsel %vm335, %v980, 0
    %1073 = vmatpush.msra.mxu0 0.0
    %1074 = vmatpush.msra.mxu0 0.0
    %1075 = vmatpush.msra.mxu0 0.0
    %1076 = vmatpush.msra.mxu0 0.0
    %1077 = vmatpush.msra.mxu0 0.0
    %1078 = vmatpush.msra.mxu0 0.0
    %1079 = vmatpush.msra.mxu0 0.0
    %1080 = vmatpush.msra.mxu0 0.0
    %1081 = vmatpush.msra.mxu0 0.0
    %1082 = vmatpush.msra.mxu0 0.0
    %1083 = vmatpush.msra.mxu0 0.0
    %1084 = vmatpush.msra.mxu0 0.0
    %1085 = vmatpush.msra.mxu0 %v170
    %1086 = vmatpush.msra.mxu0 %v169
    %1087 = vmatpush.msra.mxu0 %v168
    %1088 = vmatpush.msra.mxu0 %v167
    %1089 = vmatmul.f32.gmra.mxu0 %v1071
    %v1090 = vpop.f32.mrf.mxu0
    %v1091 = vadd.f32 0.0, %v1090
    %1092 = vdwg.mxu0
    %v1093 = vadd.f32 %v1067, %v1091
    %v1094 = vmul.f32 %v1093, 0.5
    %v1095 = vtanh.pop %v1094
    %v1096 = vmul.f32 %v1095, 0.5
    %v1097 = vadd.f32 %v1096, 0.5
    %v1098 = vtanh.pop %v1093
    %1100 = vrot.lane.b32.xlu0 %v970, 32
    %v1101 = vpop.permute.xlu0 %1100
    %v1103 = vmul.f32 %v1097, %v1101
    %1105 = vrot.lane.b32.xlu0 %v1098, 64
    %v1106 = vpop.permute.xlu0 %1105
    %v1108 = vmul.f32 %v1097, %v1106
    %1110 = vrot.lane.b32.xlu0 %v1108, 32
    %v1111 = vpop.permute.xlu0 %1110
    %v1113 = vadd.f32 %v1103, %v1111
    %v1114 = vtanh.pop %v1113
    %1116 = vrot.lane.b32.xlu0 %v1114, 64
    %v1117 = vpop.permute.xlu0 %1116
    %v1119 = vmul.f32 %v1097, %v1117
    %v1120 = vsub.f32 %v1113, %v1101
    %1122 = vrot.lane.b32.xlu0 %v1120, 96
    %v1123 = vpop.permute.xlu0 %1122
    %v1125 = vmul.f32 %v1069, %v1123
    %v1126 = vadd.f32 %v970, %v1125
    %1127 = vrot.lane.b32.xlu0 %v980, 96
    %v1128 = vpop.permute.xlu0 %1127
    %v1130 = vsub.f32 %v1119, %v1128
    %1132 = vrot.lane.b32.xlu0 %v1130, 32
    %v1133 = vpop.permute.xlu0 %1132
    %v1135 = vmul.f32 %v1069, %v1133
    %v1136 = vadd.f32 %v980, %v1135
    %1138 = vrot.lane.b32.xlu0 %v1119, 32
    %v1139 = vpop.permute.xlu0 %1138
    %v1141 = vmul.f32 %v1069, %v1139
    %s1142 = scalar_lea.vmem [#allocation19], 48
    %1143 = vst.msk [vmem:[%s1142] sm:$0xff] %vm335, %v1141
    %s1144 = scalar_lea.vmem [#allocation6], 32
    %v1145 = vld [vmem:[%s1144] sm:$0xff]
    %s1146 = scalar_lea.vmem [#allocation8], 32
    %v1147 = vld [vmem:[%s1146] sm:$0xff]
    %v1149 = vsel %vm335, %v1058, 0
    %1151 = vmatpush.msra.mxu0 0.0
    %1152 = vmatpush.msra.mxu0 0.0
    %1153 = vmatpush.msra.mxu0 0.0
    %1154 = vmatpush.msra.mxu0 0.0
    %1155 = vmatpush.msra.mxu0 0.0
    %1156 = vmatpush.msra.mxu0 0.0
    %1157 = vmatpush.msra.mxu0 0.0
    %1158 = vmatpush.msra.mxu0 0.0
    %1159 = vmatpush.msra.mxu0 0.0
    %1160 = vmatpush.msra.mxu0 0.0
    %1161 = vmatpush.msra.mxu0 0.0
    %1162 = vmatpush.msra.mxu0 0.0
    %1163 = vmatpush.msra.mxu0 %v166
    %1164 = vmatpush.msra.mxu0 %v165
    %1165 = vmatpush.msra.mxu0 %v164
    %1166 = vmatpush.msra.mxu0 %v163
    %1167 = vmatmul.f32.gmra.mxu0 %v1149
    %v1168 = vpop.f32.mrf.mxu0
    %v1169 = vadd.f32 0.0, %v1168
    %1170 = vdwg.mxu0
    %v1171 = vadd.f32 %v1145, %v1169
    %v1172 = vmul.f32 %v1171, 0.5
    %v1173 = vtanh.pop %v1172
    %v1174 = vmul.f32 %v1173, 0.5
    %v1175 = vadd.f32 %v1174, 0.5
    %v1176 = vtanh.pop %v1171
    %1178 = vrot.lane.b32.xlu0 %v1048, 32
    %v1179 = vpop.permute.xlu0 %1178
    %v1181 = vmul.f32 %v1175, %v1179
    %1183 = vrot.lane.b32.xlu0 %v1176, 64
    %v1184 = vpop.permute.xlu0 %1183
    %v1186 = vmul.f32 %v1175, %v1184
    %1188 = vrot.lane.b32.xlu0 %v1186, 32
    %v1189 = vpop.permute.xlu0 %1188
    %v1191 = vadd.f32 %v1181, %v1189
    %v1192 = vtanh.pop %v1191
    %1194 = vrot.lane.b32.xlu0 %v1192, 64
    %v1195 = vpop.permute.xlu0 %1194
    %v1197 = vmul.f32 %v1175, %v1195
    %v1198 = vsub.f32 %v1191, %v1179
    %1200 = vrot.lane.b32.xlu0 %v1198, 96
    %v1201 = vpop.permute.xlu0 %1200
    %v1203 = vmul.f32 %v1147, %v1201
    %v1204 = vadd.f32 %v1048, %v1203
    %1205 = vrot.lane.b32.xlu0 %v1058, 96
    %v1206 = vpop.permute.xlu0 %1205
    %v1208 = vsub.f32 %v1197, %v1206
    %1210 = vrot.lane.b32.xlu0 %v1208, 32
    %v1211 = vpop.permute.xlu0 %1210
    %v1213 = vmul.f32 %v1147, %v1211
    %v1214 = vadd.f32 %v1058, %v1213
    %1216 = vrot.lane.b32.xlu0 %v1197, 32
    %v1217 = vpop.permute.xlu0 %1216
    %v1219 = vmul.f32 %v1147, %v1217
    %s1220 = scalar_lea.vmem [#allocation18], 32
    %1221 = vst.msk [vmem:[%s1220] sm:$0xff] %vm335, %v1219
    %s1222 = scalar_lea.vmem [#allocation7], 40
    %v1223 = vld [vmem:[%s1222] sm:$0xff]
    %s1224 = scalar_lea.vmem [#allocation9], 40
    %v1225 = vld [vmem:[%s1224] sm:$0xff]
    %v1227 = vsel %vm335, %v1136, 0
    %1229 = vmatpush.msra.mxu0 0.0
    %1230 = vmatpush.msra.mxu0 0.0
    %1231 = vmatpush.msra.mxu0 0.0
    %1232 = vmatpush.msra.mxu0 0.0
    %1233 = vmatpush.msra.mxu0 0.0
    %1234 = vmatpush.msra.mxu0 0.0
    %1235 = vmatpush.msra.mxu0 0.0
    %1236 = vmatpush.msra.mxu0 0.0
    %1237 = vmatpush.msra.mxu0 0.0
    %1238 = vmatpush.msra.mxu0 0.0
    %1239 = vmatpush.msra.mxu0 0.0
    %1240 = vmatpush.msra.mxu0 0.0
    %1241 = vmatpush.msra.mxu0 %v170
    %1242 = vmatpush.msra.mxu0 %v169
    %1243 = vmatpush.msra.mxu0 %v168
    %1244 = vmatpush.msra.mxu0 %v167
    %1245 = vmatmul.f32.gmra.mxu0 %v1227
    %v1246 = vpop.f32.mrf.mxu0
    %v1247 = vadd.f32 0.0, %v1246
    %1248 = vdwg.mxu0
    %v1249 = vadd.f32 %v1223, %v1247
    %v1250 = vmul.f32 %v1249, 0.5
    %v1251 = vtanh.pop %v1250
    %v1252 = vmul.f32 %v1251, 0.5
    %v1253 = vadd.f32 %v1252, 0.5
    %v1254 = vtanh.pop %v1249
    %1256 = vrot.lane.b32.xlu0 %v1126, 32
    %v1257 = vpop.permute.xlu0 %1256
    %v1259 = vmul.f32 %v1253, %v1257
    %1261 = vrot.lane.b32.xlu0 %v1254, 64
    %v1262 = vpop.permute.xlu0 %1261
    %v1264 = vmul.f32 %v1253, %v1262
    %1266 = vrot.lane.b32.xlu0 %v1264, 32
    %v1267 = vpop.permute.xlu0 %1266
    %v1269 = vadd.f32 %v1259, %v1267
    %v1270 = vtanh.pop %v1269
    %1272 = vrot.lane.b32.xlu0 %v1270, 64
    %v1273 = vpop.permute.xlu0 %1272
    %v1275 = vmul.f32 %v1253, %v1273
    %v1276 = vsub.f32 %v1269, %v1257
    %1278 = vrot.lane.b32.xlu0 %v1276, 96
    %v1279 = vpop.permute.xlu0 %1278
    %v1281 = vmul.f32 %v1225, %v1279
    %v1282 = vadd.f32 %v1126, %v1281
    %1283 = vrot.lane.b32.xlu0 %v1136, 96
    %v1284 = vpop.permute.xlu0 %1283
    %v1286 = vsub.f32 %v1275, %v1284
    %1288 = vrot.lane.b32.xlu0 %v1286, 32
    %v1289 = vpop.permute.xlu0 %1288
    %v1291 = vmul.f32 %v1225, %v1289
    %v1292 = vadd.f32 %v1136, %v1291
    %1294 = vrot.lane.b32.xlu0 %v1275, 32
    %v1295 = vpop.permute.xlu0 %1294
    %v1297 = vmul.f32 %v1225, %v1295
    %s1298 = scalar_lea.vmem [#allocation19], 40
    %1299 = vst.msk [vmem:[%s1298] sm:$0xff] %vm335, %v1297
    %s1300 = scalar_lea.vmem [#allocation6], 40
    %v1301 = vld [vmem:[%s1300] sm:$0xff]
    %s1302 = scalar_lea.vmem [#allocation8], 40
    %v1303 = vld [vmem:[%s1302] sm:$0xff]
    %v1305 = vsel %vm335, %v1214, 0
    %1307 = vmatpush.msra.mxu0 0.0
    %1308 = vmatpush.msra.mxu0 0.0
    %1309 = vmatpush.msra.mxu0 0.0
    %1310 = vmatpush.msra.mxu0 0.0
    %1311 = vmatpush.msra.mxu0 0.0
    %1312 = vmatpush.msra.mxu0 0.0
    %1313 = vmatpush.msra.mxu0 0.0
    %1314 = vmatpush.msra.mxu0 0.0
    %1315 = vmatpush.msra.mxu0 0.0
    %1316 = vmatpush.msra.mxu0 0.0
    %1317 = vmatpush.msra.mxu0 0.0
    %1318 = vmatpush.msra.mxu0 0.0
    %1319 = vmatpush.msra.mxu0 %v166
    %1320 = vmatpush.msra.mxu0 %v165
    %1321 = vmatpush.msra.mxu0 %v164
    %1322 = vmatpush.msra.mxu0 %v163
    %1323 = vmatmul.f32.gmra.mxu0 %v1305
    %v1324 = vpop.f32.mrf.mxu0
    %v1325 = vadd.f32 0.0, %v1324
    %1326 = vdwg.mxu0
    %v1327 = vadd.f32 %v1301, %v1325
    %v1328 = vmul.f32 %v1327, 0.5
    %v1329 = vtanh.pop %v1328
    %v1330 = vmul.f32 %v1329, 0.5
    %v1331 = vadd.f32 %v1330, 0.5
    %v1332 = vtanh.pop %v1327
    %1334 = vrot.lane.b32.xlu0 %v1204, 32
    %v1335 = vpop.permute.xlu0 %1334
    %v1337 = vmul.f32 %v1331, %v1335
    %1339 = vrot.lane.b32.xlu0 %v1332, 64
    %v1340 = vpop.permute.xlu0 %1339
    %v1342 = vmul.f32 %v1331, %v1340
    %1344 = vrot.lane.b32.xlu0 %v1342, 32
    %v1345 = vpop.permute.xlu0 %1344
    %v1347 = vadd.f32 %v1337, %v1345
    %v1348 = vtanh.pop %v1347
    %1350 = vrot.lane.b32.xlu0 %v1348, 64
    %v1351 = vpop.permute.xlu0 %1350
    %v1353 = vmul.f32 %v1331, %v1351
    %v1354 = vsub.f32 %v1347, %v1335
    %1356 = vrot.lane.b32.xlu0 %v1354, 96
    %v1357 = vpop.permute.xlu0 %1356
    %v1359 = vmul.f32 %v1303, %v1357
    %v1360 = vadd.f32 %v1204, %v1359
    %1361 = vrot.lane.b32.xlu0 %v1214, 96
    %v1362 = vpop.permute.xlu0 %1361
    %v1364 = vsub.f32 %v1353, %v1362
    %1366 = vrot.lane.b32.xlu0 %v1364, 32
    %v1367 = vpop.permute.xlu0 %1366
    %v1369 = vmul.f32 %v1303, %v1367
    %v1370 = vadd.f32 %v1214, %v1369
    %1372 = vrot.lane.b32.xlu0 %v1353, 32
    %v1373 = vpop.permute.xlu0 %1372
    %v1375 = vmul.f32 %v1303, %v1373
    %s1376 = scalar_lea.vmem [#allocation18], 40
    %1377 = vst.msk [vmem:[%s1376] sm:$0xff] %vm335, %v1375
    %s1378 = scalar_lea.vmem [#allocation7], 32
    %v1379 = vld [vmem:[%s1378] sm:$0xff]
    %s1380 = scalar_lea.vmem [#allocation9], 32
    %v1381 = vld [vmem:[%s1380] sm:$0xff]
    %v1383 = vsel %vm335, %v1292, 0
    %1385 = vmatpush.msra.mxu0 0.0
    %1386 = vmatpush.msra.mxu0 0.0
    %1387 = vmatpush.msra.mxu0 0.0
    %1388 = vmatpush.msra.mxu0 0.0
    %1389 = vmatpush.msra.mxu0 0.0
    %1390 = vmatpush.msra.mxu0 0.0
    %1391 = vmatpush.msra.mxu0 0.0
    %1392 = vmatpush.msra.mxu0 0.0
    %1393 = vmatpush.msra.mxu0 0.0
    %1394 = vmatpush.msra.mxu0 0.0
    %1395 = vmatpush.msra.mxu0 0.0
    %1396 = vmatpush.msra.mxu0 0.0
    %1397 = vmatpush.msra.mxu0 %v170
    %1398 = vmatpush.msra.mxu0 %v169
    %1399 = vmatpush.msra.mxu0 %v168
    %1400 = vmatpush.msra.mxu0 %v167
    %1401 = vmatmul.f32.gmra.mxu0 %v1383
    %v1402 = vpop.f32.mrf.mxu0
    %v1403 = vadd.f32 0.0, %v1402
    %1404 = vdwg.mxu0
    %v1405 = vadd.f32 %v1379, %v1403
    %v1406 = vmul.f32 %v1405, 0.5
    %v1407 = vtanh.pop %v1406
    %v1408 = vmul.f32 %v1407, 0.5
    %v1409 = vadd.f32 %v1408, 0.5
    %v1410 = vtanh.pop %v1405
    %1412 = vrot.lane.b32.xlu0 %v1282, 32
    %v1413 = vpop.permute.xlu0 %1412
    %v1415 = vmul.f32 %v1409, %v1413
    %1417 = vrot.lane.b32.xlu0 %v1410, 64
    %v1418 = vpop.permute.xlu0 %1417
    %v1420 = vmul.f32 %v1409, %v1418
    %1422 = vrot.lane.b32.xlu0 %v1420, 32
    %v1423 = vpop.permute.xlu0 %1422
    %v1425 = vadd.f32 %v1415, %v1423
    %v1426 = vtanh.pop %v1425
    %1428 = vrot.lane.b32.xlu0 %v1426, 64
    %v1429 = vpop.permute.xlu0 %1428
    %v1431 = vmul.f32 %v1409, %v1429
    %v1432 = vsub.f32 %v1425, %v1413
    %1434 = vrot.lane.b32.xlu0 %v1432, 96
    %v1435 = vpop.permute.xlu0 %1434
    %v1437 = vmul.f32 %v1381, %v1435
    %v1438 = vadd.f32 %v1282, %v1437
    %1439 = vrot.lane.b32.xlu0 %v1292, 96
    %v1440 = vpop.permute.xlu0 %1439
    %v1442 = vsub.f32 %v1431, %v1440
    %1444 = vrot.lane.b32.xlu0 %v1442, 32
    %v1445 = vpop.permute.xlu0 %1444
    %v1447 = vmul.f32 %v1381, %v1445
    %v1448 = vadd.f32 %v1292, %v1447
    %1450 = vrot.lane.b32.xlu0 %v1431, 32
    %v1451 = vpop.permute.xlu0 %1450
    %v1453 = vmul.f32 %v1381, %v1451
    %s1454 = scalar_lea.vmem [#allocation19], 32
    %1455 = vst.msk [vmem:[%s1454] sm:$0xff] %vm335, %v1453
    %s1456 = scalar_lea.vmem [#allocation6], 48
    %v1457 = vld [vmem:[%s1456] sm:$0xff]
    %s1458 = scalar_lea.vmem [#allocation8], 48
    %v1459 = vld [vmem:[%s1458] sm:$0xff]
    %v1461 = vsel %vm335, %v1370, 0
    %1463 = vmatpush.msra.mxu0 0.0
    %1464 = vmatpush.msra.mxu0 0.0
    %1465 = vmatpush.msra.mxu0 0.0
    %1466 = vmatpush.msra.mxu0 0.0
    %1467 = vmatpush.msra.mxu0 0.0
    %1468 = vmatpush.msra.mxu0 0.0
    %1469 = vmatpush.msra.mxu0 0.0
    %1470 = vmatpush.msra.mxu0 0.0
    %1471 = vmatpush.msra.mxu0 0.0
    %1472 = vmatpush.msra.mxu0 0.0
    %1473 = vmatpush.msra.mxu0 0.0
    %1474 = vmatpush.msra.mxu0 0.0
    %1475 = vmatpush.msra.mxu0 %v166
    %1476 = vmatpush.msra.mxu0 %v165
    %1477 = vmatpush.msra.mxu0 %v164
    %1478 = vmatpush.msra.mxu0 %v163
    %1479 = vmatmul.f32.gmra.mxu0 %v1461
    %v1480 = vpop.f32.mrf.mxu0
    %v1481 = vadd.f32 0.0, %v1480
    %1482 = vdwg.mxu0
    %v1483 = vadd.f32 %v1457, %v1481
    %v1484 = vmul.f32 %v1483, 0.5
    %v1485 = vtanh.pop %v1484
    %v1486 = vmul.f32 %v1485, 0.5
    %v1487 = vadd.f32 %v1486, 0.5
    %v1488 = vtanh.pop %v1483
    %1490 = vrot.lane.b32.xlu0 %v1360, 32
    %v1491 = vpop.permute.xlu0 %1490
    %v1493 = vmul.f32 %v1487, %v1491
    %1495 = vrot.lane.b32.xlu0 %v1488, 64
    %v1496 = vpop.permute.xlu0 %1495
    %v1498 = vmul.f32 %v1487, %v1496
    %1500 = vrot.lane.b32.xlu0 %v1498, 32
    %v1501 = vpop.permute.xlu0 %1500
    %v1503 = vadd.f32 %v1493, %v1501
    %v1504 = vtanh.pop %v1503
    %1506 = vrot.lane.b32.xlu0 %v1504, 64
    %v1507 = vpop.permute.xlu0 %1506
    %v1509 = vmul.f32 %v1487, %v1507
    %v1510 = vsub.f32 %v1503, %v1491
    %1512 = vrot.lane.b32.xlu0 %v1510, 96
    %v1513 = vpop.permute.xlu0 %1512
    %v1515 = vmul.f32 %v1459, %v1513
    %v1516 = vadd.f32 %v1360, %v1515
    %1517 = vrot.lane.b32.xlu0 %v1370, 96
    %v1518 = vpop.permute.xlu0 %1517
    %v1520 = vsub.f32 %v1509, %v1518
    %1522 = vrot.lane.b32.xlu0 %v1520, 32
    %v1523 = vpop.permute.xlu0 %1522
    %v1525 = vmul.f32 %v1459, %v1523
    %v1526 = vadd.f32 %v1370, %v1525
    %1528 = vrot.lane.b32.xlu0 %v1509, 32
    %v1529 = vpop.permute.xlu0 %1528
    %v1531 = vmul.f32 %v1459, %v1529
    %s1532 = scalar_lea.vmem [#allocation18], 48
    %1533 = vst.msk [vmem:[%s1532] sm:$0xff] %vm335, %v1531
    %s1534 = scalar_lea.vmem [#allocation7], 24
    %v1535 = vld [vmem:[%s1534] sm:$0xff]
    %s1536 = scalar_lea.vmem [#allocation9], 24
    %v1537 = vld [vmem:[%s1536] sm:$0xff]
    %v1539 = vsel %vm335, %v1448, 0
    %1541 = vmatpush.msra.mxu0 0.0
    %1542 = vmatpush.msra.mxu0 0.0
    %1543 = vmatpush.msra.mxu0 0.0
    %1544 = vmatpush.msra.mxu0 0.0
    %1545 = vmatpush.msra.mxu0 0.0
    %1546 = vmatpush.msra.mxu0 0.0
    %1547 = vmatpush.msra.mxu0 0.0
    %1548 = vmatpush.msra.mxu0 0.0
    %1549 = vmatpush.msra.mxu0 0.0
    %1550 = vmatpush.msra.mxu0 0.0
    %1551 = vmatpush.msra.mxu0 0.0
    %1552 = vmatpush.msra.mxu0 0.0
    %1553 = vmatpush.msra.mxu0 %v170
    %1554 = vmatpush.msra.mxu0 %v169
    %1555 = vmatpush.msra.mxu0 %v168
    %1556 = vmatpush.msra.mxu0 %v167
    %1557 = vmatmul.f32.gmra.mxu0 %v1539
    %v1558 = vpop.f32.mrf.mxu0
    %v1559 = vadd.f32 0.0, %v1558
    %1560 = vdwg.mxu0
    %v1561 = vadd.f32 %v1535, %v1559
    %v1562 = vmul.f32 %v1561, 0.5
    %v1563 = vtanh.pop %v1562
    %v1564 = vmul.f32 %v1563, 0.5
    %v1565 = vadd.f32 %v1564, 0.5
    %v1566 = vtanh.pop %v1561
    %1568 = vrot.lane.b32.xlu0 %v1438, 32
    %v1569 = vpop.permute.xlu0 %1568
    %v1571 = vmul.f32 %v1565, %v1569
    %1573 = vrot.lane.b32.xlu0 %v1566, 64
    %v1574 = vpop.permute.xlu0 %1573
    %v1576 = vmul.f32 %v1565, %v1574
    %1578 = vrot.lane.b32.xlu0 %v1576, 32
    %v1579 = vpop.permute.xlu0 %1578
    %v1581 = vadd.f32 %v1571, %v1579
    %v1582 = vtanh.pop %v1581
    %1584 = vrot.lane.b32.xlu0 %v1582, 64
    %v1585 = vpop.permute.xlu0 %1584
    %v1587 = vmul.f32 %v1565, %v1585
    %v1588 = vsub.f32 %v1581, %v1569
    %1590 = vrot.lane.b32.xlu0 %v1588, 96
    %v1591 = vpop.permute.xlu0 %1590
    %v1593 = vmul.f32 %v1537, %v1591
    %v1594 = vadd.f32 %v1438, %v1593
    %1595 = vrot.lane.b32.xlu0 %v1448, 96
    %v1596 = vpop.permute.xlu0 %1595
    %v1598 = vsub.f32 %v1587, %v1596
    %1600 = vrot.lane.b32.xlu0 %v1598, 32
    %v1601 = vpop.permute.xlu0 %1600
    %v1603 = vmul.f32 %v1537, %v1601
    %v1604 = vadd.f32 %v1448, %v1603
    %1606 = vrot.lane.b32.xlu0 %v1587, 32
    %v1607 = vpop.permute.xlu0 %1606
    %v1609 = vmul.f32 %v1537, %v1607
    %s1610 = scalar_lea.vmem [#allocation19], 24
    %1611 = vst.msk [vmem:[%s1610] sm:$0xff] %vm335, %v1609
    %s1612 = scalar_lea.vmem [#allocation6], 56
    %v1613 = vld [vmem:[%s1612] sm:$0xff]
    %s1614 = scalar_lea.vmem [#allocation8], 56
    %v1615 = vld [vmem:[%s1614] sm:$0xff]
    %v1617 = vsel %vm335, %v1526, 0
    %1619 = vmatpush.msra.mxu0 0.0
    %1620 = vmatpush.msra.mxu0 0.0
    %1621 = vmatpush.msra.mxu0 0.0
    %1622 = vmatpush.msra.mxu0 0.0
    %1623 = vmatpush.msra.mxu0 0.0
    %1624 = vmatpush.msra.mxu0 0.0
    %1625 = vmatpush.msra.mxu0 0.0
    %1626 = vmatpush.msra.mxu0 0.0
    %1627 = vmatpush.msra.mxu0 0.0
    %1628 = vmatpush.msra.mxu0 0.0
    %1629 = vmatpush.msra.mxu0 0.0
    %1630 = vmatpush.msra.mxu0 0.0
    %1631 = vmatpush.msra.mxu0 %v166
    %1632 = vmatpush.msra.mxu0 %v165
    %1633 = vmatpush.msra.mxu0 %v164
    %1634 = vmatpush.msra.mxu0 %v163
    %1635 = vmatmul.f32.gmra.mxu0 %v1617
    %v1636 = vpop.f32.mrf.mxu0
    %v1637 = vadd.f32 0.0, %v1636
    %1638 = vdwg.mxu0
    %v1639 = vadd.f32 %v1613, %v1637
    %v1640 = vmul.f32 %v1639, 0.5
    %v1641 = vtanh.pop %v1640
    %v1642 = vmul.f32 %v1641, 0.5
    %v1643 = vadd.f32 %v1642, 0.5
    %v1644 = vtanh.pop %v1639
    %1646 = vrot.lane.b32.xlu0 %v1516, 32
    %v1647 = vpop.permute.xlu0 %1646
    %v1649 = vmul.f32 %v1643, %v1647
    %1651 = vrot.lane.b32.xlu0 %v1644, 64
    %v1652 = vpop.permute.xlu0 %1651
    %v1654 = vmul.f32 %v1643, %v1652
    %1656 = vrot.lane.b32.xlu0 %v1654, 32
    %v1657 = vpop.permute.xlu0 %1656
    %v1659 = vadd.f32 %v1649, %v1657
    %v1660 = vtanh.pop %v1659
    %1662 = vrot.lane.b32.xlu0 %v1660, 64
    %v1663 = vpop.permute.xlu0 %1662
    %v1665 = vmul.f32 %v1643, %v1663
    %v1666 = vsub.f32 %v1659, %v1647
    %1668 = vrot.lane.b32.xlu0 %v1666, 96
    %v1669 = vpop.permute.xlu0 %1668
    %v1671 = vmul.f32 %v1615, %v1669
    %v1672 = vadd.f32 %v1516, %v1671
    %1673 = vrot.lane.b32.xlu0 %v1526, 96
    %v1674 = vpop.permute.xlu0 %1673
    %v1676 = vsub.f32 %v1665, %v1674
    %1678 = vrot.lane.b32.xlu0 %v1676, 32
    %v1679 = vpop.permute.xlu0 %1678
    %v1681 = vmul.f32 %v1615, %v1679
    %v1682 = vadd.f32 %v1526, %v1681
    %1684 = vrot.lane.b32.xlu0 %v1665, 32
    %v1685 = vpop.permute.xlu0 %1684
    %v1687 = vmul.f32 %v1615, %v1685
    %s1688 = scalar_lea.vmem [#allocation18], 56
    %1689 = vst.msk [vmem:[%s1688] sm:$0xff] %vm335, %v1687
    %s1690 = scalar_lea.vmem [#allocation7], 16
    %v1691 = vld [vmem:[%s1690] sm:$0xff]
    %s1692 = scalar_lea.vmem [#allocation9], 16
    %v1693 = vld [vmem:[%s1692] sm:$0xff]
    %v1695 = vsel %vm335, %v1604, 0
    %1697 = vmatpush.msra.mxu0 0.0
    %1698 = vmatpush.msra.mxu0 0.0
    %1699 = vmatpush.msra.mxu0 0.0
    %1700 = vmatpush.msra.mxu0 0.0
    %1701 = vmatpush.msra.mxu0 0.0
    %1702 = vmatpush.msra.mxu0 0.0
    %1703 = vmatpush.msra.mxu0 0.0
    %1704 = vmatpush.msra.mxu0 0.0
    %1705 = vmatpush.msra.mxu0 0.0
    %1706 = vmatpush.msra.mxu0 0.0
    %1707 = vmatpush.msra.mxu0 0.0
    %1708 = vmatpush.msra.mxu0 0.0
    %1709 = vmatpush.msra.mxu0 %v170
    %1710 = vmatpush.msra.mxu0 %v169
    %1711 = vmatpush.msra.mxu0 %v168
    %1712 = vmatpush.msra.mxu0 %v167
    %1713 = vmatmul.f32.gmra.mxu0 %v1695
    %v1714 = vpop.f32.mrf.mxu0
    %v1715 = vadd.f32 0.0, %v1714
    %1716 = vdwg.mxu0
    %v1717 = vadd.f32 %v1691, %v1715
    %v1718 = vmul.f32 %v1717, 0.5
    %v1719 = vtanh.pop %v1718
    %v1720 = vmul.f32 %v1719, 0.5
    %v1721 = vadd.f32 %v1720, 0.5
    %v1722 = vtanh.pop %v1717
    %1724 = vrot.lane.b32.xlu0 %v1594, 32
    %v1725 = vpop.permute.xlu0 %1724
    %v1727 = vmul.f32 %v1721, %v1725
    %1729 = vrot.lane.b32.xlu0 %v1722, 64
    %v1730 = vpop.permute.xlu0 %1729
    %v1732 = vmul.f32 %v1721, %v1730
    %1734 = vrot.lane.b32.xlu0 %v1732, 32
    %v1735 = vpop.permute.xlu0 %1734
    %v1737 = vadd.f32 %v1727, %v1735
    %v1738 = vtanh.pop %v1737
    %1740 = vrot.lane.b32.xlu0 %v1738, 64
    %v1741 = vpop.permute.xlu0 %1740
    %v1743 = vmul.f32 %v1721, %v1741
    %v1744 = vsub.f32 %v1737, %v1725
    %1746 = vrot.lane.b32.xlu0 %v1744, 96
    %v1747 = vpop.permute.xlu0 %1746
    %v1749 = vmul.f32 %v1693, %v1747
    %v1750 = vadd.f32 %v1594, %v1749
    %1751 = vrot.lane.b32.xlu0 %v1604, 96
    %v1752 = vpop.permute.xlu0 %1751
    %v1754 = vsub.f32 %v1743, %v1752
    %1756 = vrot.lane.b32.xlu0 %v1754, 32
    %v1757 = vpop.permute.xlu0 %1756
    %v1759 = vmul.f32 %v1693, %v1757
    %v1760 = vadd.f32 %v1604, %v1759
    %1762 = vrot.lane.b32.xlu0 %v1743, 32
    %v1763 = vpop.permute.xlu0 %1762
    %v1765 = vmul.f32 %v1693, %v1763
    %s1766 = scalar_lea.vmem [#allocation19], 16
    %1767 = vst.msk [vmem:[%s1766] sm:$0xff] %vm335, %v1765
    %s1768 = scalar_lea.vmem [#allocation6], 64
    %v1769 = vld [vmem:[%s1768] sm:$0xff]
    %s1770 = scalar_lea.vmem [#allocation8], 64
    %v1771 = vld [vmem:[%s1770] sm:$0xff]
    %v1773 = vsel %vm335, %v1682, 0
    %1775 = vmatpush.msra.mxu0 0.0
    %1776 = vmatpush.msra.mxu0 0.0
    %1777 = vmatpush.msra.mxu0 0.0
    %1778 = vmatpush.msra.mxu0 0.0
    %1779 = vmatpush.msra.mxu0 0.0
    %1780 = vmatpush.msra.mxu0 0.0
    %1781 = vmatpush.msra.mxu0 0.0
    %1782 = vmatpush.msra.mxu0 0.0
    %1783 = vmatpush.msra.mxu0 0.0
    %1784 = vmatpush.msra.mxu0 0.0
    %1785 = vmatpush.msra.mxu0 0.0
    %1786 = vmatpush.msra.mxu0 0.0
    %1787 = vmatpush.msra.mxu0 %v166
    %1788 = vmatpush.msra.mxu0 %v165
    %1789 = vmatpush.msra.mxu0 %v164
    %1790 = vmatpush.msra.mxu0 %v163
    %1791 = vmatmul.f32.gmra.mxu0 %v1773
    %v1792 = vpop.f32.mrf.mxu0
    %v1793 = vadd.f32 0.0, %v1792
    %1794 = vdwg.mxu0
    %v1795 = vadd.f32 %v1769, %v1793
    %v1796 = vmul.f32 %v1795, 0.5
    %v1797 = vtanh.pop %v1796
    %v1798 = vmul.f32 %v1797, 0.5
    %v1799 = vadd.f32 %v1798, 0.5
    %v1800 = vtanh.pop %v1795
    %1802 = vrot.lane.b32.xlu0 %v1672, 32
    %v1803 = vpop.permute.xlu0 %1802
    %v1805 = vmul.f32 %v1799, %v1803
    %1807 = vrot.lane.b32.xlu0 %v1800, 64
    %v1808 = vpop.permute.xlu0 %1807
    %v1810 = vmul.f32 %v1799, %v1808
    %1812 = vrot.lane.b32.xlu0 %v1810, 32
    %v1813 = vpop.permute.xlu0 %1812
    %v1815 = vadd.f32 %v1805, %v1813
    %v1816 = vtanh.pop %v1815
    %1818 = vrot.lane.b32.xlu0 %v1816, 64
    %v1819 = vpop.permute.xlu0 %1818
    %v1821 = vmul.f32 %v1799, %v1819
    %v1822 = vsub.f32 %v1815, %v1803
    %1824 = vrot.lane.b32.xlu0 %v1822, 96
    %v1825 = vpop.permute.xlu0 %1824
    %v1827 = vmul.f32 %v1771, %v1825
    %v1828 = vadd.f32 %v1672, %v1827
    %1829 = vrot.lane.b32.xlu0 %v1682, 96
    %v1830 = vpop.permute.xlu0 %1829
    %v1832 = vsub.f32 %v1821, %v1830
    %1834 = vrot.lane.b32.xlu0 %v1832, 32
    %v1835 = vpop.permute.xlu0 %1834
    %v1837 = vmul.f32 %v1771, %v1835
    %v1838 = vadd.f32 %v1682, %v1837
    %1840 = vrot.lane.b32.xlu0 %v1821, 32
    %v1841 = vpop.permute.xlu0 %1840
    %v1843 = vmul.f32 %v1771, %v1841
    %s1844 = scalar_lea.vmem [#allocation18], 64
    %1845 = vst.msk [vmem:[%s1844] sm:$0xff] %vm335, %v1843
    %s1846 = scalar_lea.vmem [#allocation7], 8
    %v1847 = vld [vmem:[%s1846] sm:$0xff]
    %s1848 = scalar_lea.vmem [#allocation9], 8
    %v1849 = vld [vmem:[%s1848] sm:$0xff]
    %v1851 = vsel %vm335, %v1760, 0
    %1853 = vmatpush.msra.mxu0 0.0
    %1854 = vmatpush.msra.mxu0 0.0
    %1855 = vmatpush.msra.mxu0 0.0
    %1856 = vmatpush.msra.mxu0 0.0
    %1857 = vmatpush.msra.mxu0 0.0
    %1858 = vmatpush.msra.mxu0 0.0
    %1859 = vmatpush.msra.mxu0 0.0
    %1860 = vmatpush.msra.mxu0 0.0
    %1861 = vmatpush.msra.mxu0 0.0
    %1862 = vmatpush.msra.mxu0 0.0
    %1863 = vmatpush.msra.mxu0 0.0
    %1864 = vmatpush.msra.mxu0 0.0
    %1865 = vmatpush.msra.mxu0 %v170
    %1866 = vmatpush.msra.mxu0 %v169
    %1867 = vmatpush.msra.mxu0 %v168
    %1868 = vmatpush.msra.mxu0 %v167
    %1869 = vmatmul.f32.gmra.mxu0 %v1851
    %v1870 = vpop.f32.mrf.mxu0
    %v1871 = vadd.f32 0.0, %v1870
    %1872 = vdwg.mxu0
    %v1873 = vadd.f32 %v1847, %v1871
    %v1874 = vmul.f32 %v1873, 0.5
    %v1875 = vtanh.pop %v1874
    %v1876 = vmul.f32 %v1875, 0.5
    %v1877 = vadd.f32 %v1876, 0.5
    %v1878 = vtanh.pop %v1873
    %1880 = vrot.lane.b32.xlu0 %v1750, 32
    %v1881 = vpop.permute.xlu0 %1880
    %v1883 = vmul.f32 %v1877, %v1881
    %1885 = vrot.lane.b32.xlu0 %v1878, 64
    %v1886 = vpop.permute.xlu0 %1885
    %v1888 = vmul.f32 %v1877, %v1886
    %1890 = vrot.lane.b32.xlu0 %v1888, 32
    %v1891 = vpop.permute.xlu0 %1890
    %v1893 = vadd.f32 %v1883, %v1891
    %v1894 = vtanh.pop %v1893
    %1896 = vrot.lane.b32.xlu0 %v1894, 64
    %v1897 = vpop.permute.xlu0 %1896
    %v1899 = vmul.f32 %v1877, %v1897
    %v1900 = vsub.f32 %v1893, %v1881
    %1902 = vrot.lane.b32.xlu0 %v1900, 96
    %v1903 = vpop.permute.xlu0 %1902
    %v1905 = vmul.f32 %v1849, %v1903
    %v1906 = vadd.f32 %v1750, %v1905
    %1907 = vrot.lane.b32.xlu0 %v1760, 96
    %v1908 = vpop.permute.xlu0 %1907
    %v1910 = vsub.f32 %v1899, %v1908
    %1912 = vrot.lane.b32.xlu0 %v1910, 32
    %v1913 = vpop.permute.xlu0 %1912
    %v1915 = vmul.f32 %v1849, %v1913
    %v1916 = vadd.f32 %v1760, %v1915
    %1918 = vrot.lane.b32.xlu0 %v1899, 32
    %v1919 = vpop.permute.xlu0 %1918
    %v1921 = vmul.f32 %v1849, %v1919
    %s1922 = scalar_lea.vmem [#allocation19], 8
    %1923 = vst.msk [vmem:[%s1922] sm:$0xff] %vm335, %v1921
    %s1924 = scalar_lea.vmem [#allocation6], 72
    %v1925 = vld [vmem:[%s1924] sm:$0xff]
    %s1926 = scalar_lea.vmem [#allocation8], 72
    %v1927 = vld [vmem:[%s1926] sm:$0xff]
    %v1929 = vsel %vm335, %v1838, 0
    %1931 = vmatpush.msra.mxu0 0.0
    %1932 = vmatpush.msra.mxu0 0.0
    %1933 = vmatpush.msra.mxu0 0.0
    %1934 = vmatpush.msra.mxu0 0.0
    %1935 = vmatpush.msra.mxu0 0.0
    %1936 = vmatpush.msra.mxu0 0.0
    %1937 = vmatpush.msra.mxu0 0.0
    %1938 = vmatpush.msra.mxu0 0.0
    %1939 = vmatpush.msra.mxu0 0.0
    %1940 = vmatpush.msra.mxu0 0.0
    %1941 = vmatpush.msra.mxu0 0.0
    %1942 = vmatpush.msra.mxu0 0.0
    %1943 = vmatpush.msra.mxu0 %v166
    %1944 = vmatpush.msra.mxu0 %v165
    %1945 = vmatpush.msra.mxu0 %v164
    %1946 = vmatpush.msra.mxu0 %v163
    %1947 = vmatmul.f32.gmra.mxu0 %v1929
    %v1948 = vpop.f32.mrf.mxu0
    %v1949 = vadd.f32 0.0, %v1948
    %1950 = vdwg.mxu0
    %v1951 = vadd.f32 %v1925, %v1949
    %v1952 = vmul.f32 %v1951, 0.5
    %v1953 = vtanh.pop %v1952
    %v1954 = vmul.f32 %v1953, 0.5
    %v1955 = vadd.f32 %v1954, 0.5
    %v1956 = vtanh.pop %v1951
    %1958 = vrot.lane.b32.xlu0 %v1828, 32
    %v1959 = vpop.permute.xlu0 %1958
    %v1961 = vmul.f32 %v1955, %v1959
    %1963 = vrot.lane.b32.xlu0 %v1956, 64
    %v1964 = vpop.permute.xlu0 %1963
    %v1966 = vmul.f32 %v1955, %v1964
    %1968 = vrot.lane.b32.xlu0 %v1966, 32
    %v1969 = vpop.permute.xlu0 %1968
    %v1971 = vadd.f32 %v1961, %v1969
    %v1972 = vtanh.pop %v1971
    %1974 = vrot.lane.b32.xlu0 %v1972, 64
    %v1975 = vpop.permute.xlu0 %1974
    %v1977 = vmul.f32 %v1955, %v1975
    %v1978 = vsub.f32 %v1971, %v1959
    %1980 = vrot.lane.b32.xlu0 %v1978, 96
    %v1981 = vpop.permute.xlu0 %1980
    %v1983 = vmul.f32 %v1927, %v1981
    %v1984 = vadd.f32 %v1828, %v1983
    %1985 = vrot.lane.b32.xlu0 %v1838, 96
    %v1986 = vpop.permute.xlu0 %1985
    %v1988 = vsub.f32 %v1977, %v1986
    %1990 = vrot.lane.b32.xlu0 %v1988, 32
    %v1991 = vpop.permute.xlu0 %1990
    %v1993 = vmul.f32 %v1927, %v1991
    %v1994 = vadd.f32 %v1838, %v1993
    %1996 = vrot.lane.b32.xlu0 %v1977, 32
    %v1997 = vpop.permute.xlu0 %1996
    %v1999 = vmul.f32 %v1927, %v1997
    %s2000 = scalar_lea.vmem [#allocation18], 72
    %2001 = vst.msk [vmem:[%s2000] sm:$0xff] %vm335, %v1999
    %v2002 = vld [vmem:[#allocation7] sm:$0xff]
    %v2003 = vld [vmem:[#allocation9] sm:$0xff]
    %v2005 = vsel %vm335, %v1916, 0
    %2007 = vmatpush.msra.mxu0 0.0
    %2008 = vmatpush.msra.mxu0 0.0
    %2009 = vmatpush.msra.mxu0 0.0
    %2010 = vmatpush.msra.mxu0 0.0
    %2011 = vmatpush.msra.mxu0 0.0
    %2012 = vmatpush.msra.mxu0 0.0
    %2013 = vmatpush.msra.mxu0 0.0
    %2014 = vmatpush.msra.mxu0 0.0
    %2015 = vmatpush.msra.mxu0 0.0
    %2016 = vmatpush.msra.mxu0 0.0
    %2017 = vmatpush.msra.mxu0 0.0
    %2018 = vmatpush.msra.mxu0 0.0
    %2019 = vmatpush.msra.mxu0 %v170
    %2020 = vmatpush.msra.mxu0 %v169
    %2021 = vmatpush.msra.mxu0 %v168
    %2022 = vmatpush.msra.mxu0 %v167
    %2023 = vmatmul.f32.gmra.mxu0 %v2005
    %v2024 = vpop.f32.mrf.mxu0
    %v2025 = vadd.f32 0.0, %v2024
    %2026 = vdwg.mxu0
    %v2027 = vadd.f32 %v2002, %v2025
    %v2028 = vmul.f32 %v2027, 0.5
    %v2029 = vtanh.pop %v2028
    %v2030 = vmul.f32 %v2029, 0.5
    %v2031 = vadd.f32 %v2030, 0.5
    %v2032 = vtanh.pop %v2027
    %2034 = vrot.lane.b32.xlu0 %v1906, 32
    %v2035 = vpop.permute.xlu0 %2034
    %v2037 = vmul.f32 %v2031, %v2035
    %2039 = vrot.lane.b32.xlu0 %v2032, 64
    %v2040 = vpop.permute.xlu0 %2039
    %v2042 = vmul.f32 %v2031, %v2040
    %2044 = vrot.lane.b32.xlu0 %v2042, 32
    %v2045 = vpop.permute.xlu0 %2044
    %v2047 = vadd.f32 %v2037, %v2045
    %v2048 = vtanh.pop %v2047
    %2050 = vrot.lane.b32.xlu0 %v2048, 64
    %v2051 = vpop.permute.xlu0 %2050
    %v2053 = vmul.f32 %v2031, %v2051
    %v2054 = vsub.f32 %v2047, %v2035
    %2056 = vrot.lane.b32.xlu0 %v2054, 96
    %v2057 = vpop.permute.xlu0 %2056
    %v2059 = vmul.f32 %v2003, %v2057
    %v2060 = vadd.f32 %v1906, %v2059
    %2061 = vrot.lane.b32.xlu0 %v1916, 96
    %v2062 = vpop.permute.xlu0 %2061
    %v2064 = vsub.f32 %v2053, %v2062
    %2066 = vrot.lane.b32.xlu0 %v2064, 32
    %v2067 = vpop.permute.xlu0 %2066
    %v2069 = vmul.f32 %v2003, %v2067
    %v2070 = vadd.f32 %v1916, %v2069
    %2072 = vrot.lane.b32.xlu0 %v2053, 32
    %v2073 = vpop.permute.xlu0 %2072
    %v2075 = vmul.f32 %v2003, %v2073
    %2076 = vst.msk [vmem:[#allocation19] sm:$0xff] %vm335, %v2075
    %2077 = vst.msk [vmem:[#allocation2] sm:$0xff] %vm335, %v1994
    %2078 = vst.msk [vmem:[#allocation4] sm:$0xff] %vm335, %v1984
    %2079 = vst.msk [vmem:[#allocation3] sm:$0xff] %vm335, %v2070
    %2080 = vst.msk [vmem:[#allocation5] sm:$0xff] %vm335, %v2060
    // Predicated region
    $region62: #{tpu_custom_call.1} parent=1 // pred_check
      %p2081 = pneg %p154
    $region63: #{tpu_custom_call.1} parent=1 // pred_check_branch
      %2083 = sbr.rel (%p2081) target = $region65
    $region64: #{tpu_custom_call.1} parent=1 // pred_region
      %v2084 = vld [vmem:[#allocation2] sm:$0xff]
      %2085 = vst.msk [vmem:[#allocation21] sm:$0xff] %vm335, %v2084
      %v2086 = vld [vmem:[#allocation4] sm:$0xff]
      %2087 = vst.msk [vmem:[#allocation24] sm:$0xff] %vm335, %v2086
      %v2088 = vld [vmem:[#allocation3] sm:$0xff]
      %2089 = vst.msk [vmem:[#allocation22] sm:$0xff] %vm335, %v2088
      %v2090 = vld [vmem:[#allocation5] sm:$0xff]
      %2091 = vst.msk [vmem:[#allocation25] sm:$0xff] %vm335, %v2090
    $region65: #{tpu_custom_call.1} parent=1 // pred_fallthru
      _
    // Predicated region
    $region66: #{tpu_custom_call.1} parent=1 // pred_check
      _
    $region67: #{tpu_custom_call.1} parent=1 // pred_check_branch
      %2093 = sbr.rel (0) target = $region69
    $region68: #{tpu_custom_call.1} parent=1 // pred_region
      %2095 = vsyncadd [#allocation12], 0
      %s2096 = sshll.u32 [#allocation18], 4
      %s2097 = int_to_ptr.vmem [resolvable:$true] %s2096
      %s2098 = sshll.u32 %s10, 4
      %s2099 = int_to_ptr.hbm [resolvable:$true] %s2098
      %2104 = dma.vmem_to_hbm [thread:$0]  %s2097, 1280, %s2099, [#allocation12], 128, 128, 8
    $region69: #{tpu_custom_call.1} parent=1 // pred_fallthru
      _
    // Predicated region
    $region70: #{tpu_custom_call.1} parent=1 // pred_check
      _
    $region71: #{tpu_custom_call.1} parent=1 // pred_check_branch
      %2106 = sbr.rel (0) target = $region73
    $region72: #{tpu_custom_call.1} parent=1 // pred_region
      %s2107 = ssub.s32 0, 0
      %s2108 = smul.u32 10, %s2107
      %2110 = vsyncadd [#allocation20], 0
      %s2111 = smul.addr %s2108, 8
      %s2112 = scalar_lea.hbm %s11, %s2111
      %s2113 = sshll.u32 [#allocation19], 4
      %s2114 = int_to_ptr.vmem [resolvable:$true] %s2113
      %s2115 = sshll.u32 %s2112, 4
      %s2116 = int_to_ptr.hbm [resolvable:$true] %s2115
      %2121 = dma.vmem_to_hbm [thread:$0]  %s2114, 1280, %s2116, [#allocation20], 128, 128, 8
    $region73: #{tpu_custom_call.1} parent=1 // pred_fallthru
      _
    // Predicated region
    $region74: #{tpu_custom_call.1} parent=1 // pred_check
      _
    $region75: #{tpu_custom_call.1} parent=1 // pred_check_branch
      %2123 = sbr.rel (0) target = $region77
    $region76: #{tpu_custom_call.1} parent=1 // pred_region
      %2125 = vsyncadd [#allocation20], 0
      %s2127 = sshll.u32 [#allocation21], 4
      %s2128 = int_to_ptr.vmem [resolvable:$true] %s2127
      %s2129 = sshll.u32 %s12, 4
      %s2130 = int_to_ptr.hbm [resolvable:$true] %s2129
      %2132 = dma.vmem_to_hbm [thread:$0]  %s2128, 128, %s2130, [#allocation20]
    $region77: #{tpu_custom_call.1} parent=1 // pred_fallthru
      _
    // Predicated region
    $region78: #{tpu_custom_call.1} parent=1 // pred_check
      _
    $region79: #{tpu_custom_call.1} parent=1 // pred_check_branch
      %2134 = sbr.rel (0) target = $region81
    $region80: #{tpu_custom_call.1} parent=1 // pred_region
      %2136 = vsyncadd [#allocation23], 0
      %s2138 = sshll.u32 [#allocation22], 4
      %s2139 = int_to_ptr.vmem [resolvable:$true] %s2138
      %s2140 = sshll.u32 %s13, 4
      %s2141 = int_to_ptr.hbm [resolvable:$true] %s2140
      %2143 = dma.vmem_to_hbm [thread:$0]  %s2139, 128, %s2141, [#allocation23]
    $region81: #{tpu_custom_call.1} parent=1 // pred_fallthru
      _
    // Predicated region
    $region82: #{tpu_custom_call.1} parent=1 // pred_check
      _
    $region83: #{tpu_custom_call.1} parent=1 // pred_check_branch
      %2145 = sbr.rel (0) target = $region85
    $region84: #{tpu_custom_call.1} parent=1 // pred_region
      %2147 = vsyncadd [#allocation23], 0
      %s2149 = sshll.u32 [#allocation24], 4
      %s2150 = int_to_ptr.vmem [resolvable:$true] %s2149
      %s2151 = sshll.u32 %s14, 4
      %s2152 = int_to_ptr.hbm [resolvable:$true] %s2151
      %2154 = dma.vmem_to_hbm [thread:$0]  %s2150, 128, %s2152, [#allocation23]
    $region85: #{tpu_custom_call.1} parent=1 // pred_fallthru
      _
    // Predicated region
    $region86: #{tpu_custom_call.1} parent=1 // pred_check
      _
    $region87: #{tpu_custom_call.1} parent=1 // pred_check_branch
      %2156 = sbr.rel (0) target = $region89
    $region88: #{tpu_custom_call.1} parent=1 // pred_region
      %2158 = vsyncadd [#allocation26], 0
      %s2160 = sshll.u32 [#allocation25], 4
      %s2161 = int_to_ptr.vmem [resolvable:$true] %s2160
      %s2162 = sshll.u32 %s15, 4
      %s2163 = int_to_ptr.hbm [resolvable:$true] %s2162
      %2165 = dma.vmem_to_hbm [thread:$0]  %s2161, 128, %s2163, [#allocation26]
    $region89: #{tpu_custom_call.1} parent=1 // pred_fallthru
      _
    // Predicated region
    $region90: #{tpu_custom_call.1} parent=1 // pred_check
      _
    $region91: #{tpu_custom_call.1} parent=1 // pred_check_branch
      %2167 = sbr.rel (0) target = $region93
    $region92: #{tpu_custom_call.1} parent=1 // pred_region
      %2169 = dma.done [#allocation12], 1280
    $region93: #{tpu_custom_call.1} parent=1 // pred_fallthru
      _
    // Predicated region
    $region94: #{tpu_custom_call.1} parent=1 // pred_check
      _
    $region95: #{tpu_custom_call.1} parent=1 // pred_check_branch
      %2171 = sbr.rel (0) target = $region97
    $region96: #{tpu_custom_call.1} parent=1 // pred_region
      %2173 = dma.done [#allocation20], 1280
    $region97: #{tpu_custom_call.1} parent=1 // pred_fallthru
      _
    // Predicated region
    $region98: #{tpu_custom_call.1} parent=1 // pred_check
      _
    $region99: #{tpu_custom_call.1} parent=1 // pred_check_branch
      %2175 = sbr.rel (0) target = $region101
    $region100: #{tpu_custom_call.1} parent=1 // pred_region
      %2177 = dma.done [#allocation20], 128
    $region101: #{tpu_custom_call.1} parent=1 // pred_fallthru
      _
    // Predicated region
    $region102: #{tpu_custom_call.1} parent=1 // pred_check
      _
    $region103: #{tpu_custom_call.1} parent=1 // pred_check_branch
      %2179 = sbr.rel (0) target = $region105
    $region104: #{tpu_custom_call.1} parent=1 // pred_region
      %2181 = dma.done [#allocation23], 128
    $region105: #{tpu_custom_call.1} parent=1 // pred_fallthru
      _
    // Predicated region
    $region106: #{tpu_custom_call.1} parent=1 // pred_check
      _
    $region107: #{tpu_custom_call.1} parent=1 // pred_check_branch
      %2183 = sbr.rel (0) target = $region109
    $region108: #{tpu_custom_call.1} parent=1 // pred_region
      %2185 = dma.done [#allocation23], 128
    $region109: #{tpu_custom_call.1} parent=1 // pred_fallthru
      _
    // Predicated region
    $region110: #{tpu_custom_call.1} parent=1 // pred_check
      _
    $region111: #{tpu_custom_call.1} parent=1 // pred_check_branch
      %2187 = sbr.rel (0) target = $region113
    $region112: #{tpu_custom_call.1} parent=1 // pred_region
      %2189 = dma.done [#allocation26], 128
    $region113: #{tpu_custom_call.1} parent=1 // pred_fallthru
      _
    %2190 = vsyncpa [#allocation11], 1
    %2191 = vsyncpa [#allocation14], 1
    %2192 = vsyncpa [#allocation17], 1
    %2193 = vsyncpa [#allocation12], 1
    %2194 = vsyncpa [#allocation20], 1
    %2195 = vsyncpa [#allocation23], 1
    %2196 = vsyncpa [#allocation26], 1

</llo_original>
